<compile_context>
chip_gen: v6e
topology: v6e:2x2x1
jax: 0.10.0
libtpu: 0.0.40
codegen_flags: <defaults>
</compile_context>

<pallas_src>
import jax
import jax.numpy as jnp
from jax.experimental import pallas as pl
from jax.experimental.pallas import tpu as pltpu

KSIZE = 7
PAD = 3


def _pick_tc(C, HW):
    """Channel-chunk size: largest divisor of C whose (TC, HW) f32 chunk stays
    within a ~64 KiB register budget (short live ranges, no spills)."""
    budget_rows = max(8, (64 * 1024) // (4 * HW))
    tc = 1
    for cand in range(1, C + 1):
        if C % cand == 0 and cand <= budget_rows:
            tc = cand
    return tc


def _make_sam_kernel(C, H, W, TC):
    HW = H * W
    n_chunks = C // TC

    def kernel(w_ref, coord_ref, x_ref, o_ref):
        # w_ref     : (2*7*7,) f32 conv weights in SMEM (scalar reads)
        # coord_ref : (2, HW) i32 [row; col] coordinate of each flattened pixel
        # x_ref     : (C, HW) input slab (lane-dense) in VMEM
        # o_ref     : (C, HW) output slab (lane-dense) in VMEM

        # ---- Phase 1: fused single-pass channel max + sum (chunked reads) ----
        xc = x_ref[0:TC, :].astype(jnp.float32)                 # (TC, HW)
        rmax = jnp.max(xc, axis=0, keepdims=True)               # (1, HW)
        rsum = jnp.sum(xc, axis=0, keepdims=True)
        for k in range(1, n_chunks):
            c0 = k * TC
            xc = x_ref[c0:c0 + TC, :].astype(jnp.float32)
            rmax = jnp.maximum(rmax, jnp.max(xc, axis=0, keepdims=True))
            rsum = rsum + jnp.sum(xc, axis=0, keepdims=True)
        ravg = rsum * (1.0 / C)

        # ---- Phase 2: 7x7 conv (2 -> 1 channel) + sigmoid, fully flattened ----
        # term(ci, ky, kx)[p=(y,x)] = m_ci[y + ky - 3, x + kx - 3] (0 outside),
        # realized as lane rotations by -(ky-3)*W and -(kx-3) plus validity
        # masks built from each pixel's (row, col) coordinates.
        row = coord_ref[0:1, :]                                 # (1, HW) i32
        col = coord_ref[1:2, :]
        ymasks = [(row + (ky - PAD) >= 0) & (row + (ky - PAD) < H)
                  for ky in range(KSIZE)]
        xmasks = [(col + (kx - PAD) >= 0) & (col + (kx - PAD) < W)
                  for kx in range(KSIZE)]

        acc = jnp.zeros((1, HW), jnp.float32)
        for ci, m in ((0, rmax), (1, ravg)):
            for ky in range(KSIZE):
                dy = ky - PAD
                sy = (-dy * W) % HW
                my = pltpu.roll(m, sy, 1) if sy else m          # shift rows by dy
                my = jnp.where(ymasks[ky], my, 0.0)
                for kx in range(KSIZE):
                    dx = kx - PAD
                    sx = (-dx) % HW
                    mxy = pltpu.roll(my, sx, 1) if sx else my   # shift cols by dx
                    wv = w_ref[ci * KSIZE * KSIZE + ky * KSIZE + kx]
                    acc = acc + wv * jnp.where(xmasks[kx], mxy, 0.0)
        att = jax.nn.sigmoid(acc)                               # (1, HW) f32

        # ---- Phase 3: out = att * x (chunk-wise re-read, lane-dense store) ----
        for k in range(n_chunks):
            c0 = k * TC
            xc = x_ref[c0:c0 + TC, :].astype(jnp.float32)
            o_ref[c0:c0 + TC, :] = (att * xc).astype(o_ref.dtype)

    return kernel


def sam_forward(x, conv_weight):
    """x: (N, C, H, W), conv_weight: (1, 2, 7, 7) f32 (PyTorch OIHW)."""
    N, C, H, W = x.shape
    HW = H * W
    x_flat = x.reshape(N, C, HW)                                # lane-dense last dim
    w_flat = conv_weight.reshape(-1).astype(jnp.float32)        # (98,)
    p = jnp.arange(HW, dtype=jnp.int32)
    coords = jnp.stack([p // W, p % W], axis=0)                 # (2, HW) [row; col]

    TC = _pick_tc(C, HW)
    kernel = _make_sam_kernel(C, H, W, TC)

    out_flat = pl.pallas_call(
        kernel,
        out_shape=jax.ShapeDtypeStruct((N, C, HW), x.dtype),
        grid_spec=pltpu.PrefetchScalarGridSpec(
            num_scalar_prefetch=0,
            grid=(N,),
            in_specs=[
                pl.BlockSpec(memory_space=pltpu.MemorySpace.SMEM),   # conv weights
                pl.BlockSpec((2, HW), lambda b: (0, 0)),             # pixel coords
                pl.BlockSpec((None, C, HW), lambda b: (b, 0, 0)),    # x slab
            ],
            out_specs=pl.BlockSpec((None, C, HW), lambda b: (b, 0, 0)),
        ),
        compiler_params=pltpu.CompilerParams(
            # Batch elements are independent -> let v7x megacore shard them.
            dimension_semantics=("parallel",),
            # Whole-(C, H*W) slabs are double-buffered; give the pipeline room
            # above the 16/32 MiB default while staying under v7x's 64 MiB.
            vmem_limit_bytes=48 * 1024 * 1024,
        ),
    )(w_flat, coords, x_flat)
    return out_flat.reshape(N, C, H, W)


def sam_reference(x, conv_weight):
    """Pure-JAX reference matching the PyTorch module."""
    mx = jnp.max(x, axis=1, keepdims=True)
    av = jnp.mean(x, axis=1, keepdims=True)
    concat = jnp.concatenate([mx, av], axis=1)
    conv = jax.lax.conv_general_dilated(
        concat, conv_weight,
        window_strides=(1, 1),
        padding=((PAD, PAD), (PAD, PAD)),
        dimension_numbers=("NCHW", "OIHW", "NCHW"))
    return jax.nn.sigmoid(conv) * x


if __name__ == "__main__":
    key = jax.random.PRNGKey(0)
    kx, kw = jax.random.split(key)

    N, C, H, W = 2, 4, 16, 16
    x = jax.random.normal(kx, (N, C, H, W), dtype=jnp.float32)
    # Deterministic synthetic conv weight (shape from nn.Conv2d(2, 1, 7)).
    conv_weight = 0.1 * jax.random.normal(kw, (1, 2, KSIZE, KSIZE), dtype=jnp.float32)

    out = jax.block_until_ready(sam_forward(x, conv_weight))

    ref = sam_reference(x, conv_weight)
    assert out.shape == (N, C, H, W)
    assert jnp.allclose(out, ref, atol=1e-4, rtol=1e-4), "mismatch vs reference"

    print("KERNEL_OK")
</pallas_src>

<mosaic_0001>
module attributes {stable_mosaic.version = 11 : i64} {
  func.func @kernel(%arg0: i32, %arg1: memref<98xf32, #tpu.memory_space<smem>>, %arg2: memref<2x256xi32, #tpu.memory_space<vmem>>, %arg3: memref<1x4x256xf32, #tpu.memory_space<vmem>>, %arg4: memref<1x4x256xf32, #tpu.memory_space<vmem>>) attributes {dimension_semantics = [#tpu.dimension_semantics<parallel>], iteration_bounds = array<i64: 2>, scalar_prefetch = 0 : i64, scratch_operands = 0 : i64, tpu.core_type = #tpu.core_type<tc>, window_params = [{transform_indices = @transform_0, window_bounds = array<i64: 98>}, {pipeline_mode = #tpu.pipeline_mode<synchronous>, transform_indices = @transform_1, window_bounds = array<i64: 2, 256>}, {transform_indices = @transform_2, window_bounds = array<i64: 1, 4, 256>}, {transform_indices = @transform_3, window_bounds = array<i64: 1, 4, 256>}]} {
    %c0 = arith.constant 0 : index
    %c0_0 = arith.constant 0 : index
    %c0_1 = arith.constant 0 : index
    %0 = vector.load %arg3[%c0, %c0_0, %c0_1] : memref<1x4x256xf32, #tpu.memory_space<vmem>>, vector<1x4x256xf32>
    %1 = vector.shape_cast %0 : vector<1x4x256xf32> to vector<4x256xf32>
    %cst = arith.constant dense<0xFF800000> : vector<256xf32>
    %2 = vector.multi_reduction <maximumf>, %1, %cst [0] : vector<4x256xf32> to vector<256xf32>
    %3 = vector.shape_cast %2 : vector<256xf32> to vector<1x256xf32>
    %cst_2 = arith.constant dense<0.000000e+00> : vector<256xf32>
    %4 = vector.multi_reduction <add>, %1, %cst_2 [0] : vector<4x256xf32> to vector<256xf32>
    %5 = vector.shape_cast %4 : vector<256xf32> to vector<1x256xf32>
    %cst_3 = arith.constant 2.500000e-01 : f32
    %6 = vector.broadcast %cst_3 : f32 to vector<1x256xf32>
    %7 = arith.mulf %5, %6 : vector<1x256xf32>
    %c0_4 = arith.constant 0 : index
    %c0_5 = arith.constant 0 : index
    %8 = vector.load %arg2[%c0_4, %c0_5] : memref<2x256xi32, #tpu.memory_space<vmem>>, vector<1x256xi32>
    %c1 = arith.constant 1 : index
    %c0_6 = arith.constant 0 : index
    %9 = vector.load %arg2[%c1, %c0_6] : memref<2x256xi32, #tpu.memory_space<vmem>>, vector<1x256xi32>
    %c-3_i32 = arith.constant -3 : i32
    %10 = vector.broadcast %c-3_i32 : i32 to vector<1x256xi32>
    %11 = arith.addi %8, %10 : vector<1x256xi32>
    %c0_i32 = arith.constant 0 : i32
    %12 = vector.broadcast %c0_i32 : i32 to vector<1x256xi32>
    %13 = arith.cmpi sge, %11, %12 : vector<1x256xi32>
    %c-3_i32_7 = arith.constant -3 : i32
    %14 = vector.broadcast %c-3_i32_7 : i32 to vector<1x256xi32>
    %15 = arith.addi %8, %14 : vector<1x256xi32>
    %c16_i32 = arith.constant 16 : i32
    %16 = vector.broadcast %c16_i32 : i32 to vector<1x256xi32>
    %17 = arith.cmpi slt, %15, %16 : vector<1x256xi32>
    %18 = arith.andi %13, %17 : vector<1x256xi1>
    %c-2_i32 = arith.constant -2 : i32
    %19 = vector.broadcast %c-2_i32 : i32 to vector<1x256xi32>
    %20 = arith.addi %8, %19 : vector<1x256xi32>
    %c0_i32_8 = arith.constant 0 : i32
    %21 = vector.broadcast %c0_i32_8 : i32 to vector<1x256xi32>
    %22 = arith.cmpi sge, %20, %21 : vector<1x256xi32>
    %c-2_i32_9 = arith.constant -2 : i32
    %23 = vector.broadcast %c-2_i32_9 : i32 to vector<1x256xi32>
    %24 = arith.addi %8, %23 : vector<1x256xi32>
    %c16_i32_10 = arith.constant 16 : i32
    %25 = vector.broadcast %c16_i32_10 : i32 to vector<1x256xi32>
    %26 = arith.cmpi slt, %24, %25 : vector<1x256xi32>
    %27 = arith.andi %22, %26 : vector<1x256xi1>
    %c-1_i32 = arith.constant -1 : i32
    %28 = vector.broadcast %c-1_i32 : i32 to vector<1x256xi32>
    %29 = arith.addi %8, %28 : vector<1x256xi32>
    %c0_i32_11 = arith.constant 0 : i32
    %30 = vector.broadcast %c0_i32_11 : i32 to vector<1x256xi32>
    %31 = arith.cmpi sge, %29, %30 : vector<1x256xi32>
    %c-1_i32_12 = arith.constant -1 : i32
    %32 = vector.broadcast %c-1_i32_12 : i32 to vector<1x256xi32>
    %33 = arith.addi %8, %32 : vector<1x256xi32>
    %c16_i32_13 = arith.constant 16 : i32
    %34 = vector.broadcast %c16_i32_13 : i32 to vector<1x256xi32>
    %35 = arith.cmpi slt, %33, %34 : vector<1x256xi32>
    %36 = arith.andi %31, %35 : vector<1x256xi1>
    %c0_i32_14 = arith.constant 0 : i32
    %37 = vector.broadcast %c0_i32_14 : i32 to vector<1x256xi32>
    %38 = arith.addi %8, %37 : vector<1x256xi32>
    %c0_i32_15 = arith.constant 0 : i32
    %39 = vector.broadcast %c0_i32_15 : i32 to vector<1x256xi32>
    %40 = arith.cmpi sge, %38, %39 : vector<1x256xi32>
    %c0_i32_16 = arith.constant 0 : i32
    %41 = vector.broadcast %c0_i32_16 : i32 to vector<1x256xi32>
    %42 = arith.addi %8, %41 : vector<1x256xi32>
    %c16_i32_17 = arith.constant 16 : i32
    %43 = vector.broadcast %c16_i32_17 : i32 to vector<1x256xi32>
    %44 = arith.cmpi slt, %42, %43 : vector<1x256xi32>
    %45 = arith.andi %40, %44 : vector<1x256xi1>
    %c1_i32 = arith.constant 1 : i32
    %46 = vector.broadcast %c1_i32 : i32 to vector<1x256xi32>
    %47 = arith.addi %8, %46 : vector<1x256xi32>
    %c0_i32_18 = arith.constant 0 : i32
    %48 = vector.broadcast %c0_i32_18 : i32 to vector<1x256xi32>
    %49 = arith.cmpi sge, %47, %48 : vector<1x256xi32>
    %c1_i32_19 = arith.constant 1 : i32
    %50 = vector.broadcast %c1_i32_19 : i32 to vector<1x256xi32>
    %51 = arith.addi %8, %50 : vector<1x256xi32>
    %c16_i32_20 = arith.constant 16 : i32
    %52 = vector.broadcast %c16_i32_20 : i32 to vector<1x256xi32>
    %53 = arith.cmpi slt, %51, %52 : vector<1x256xi32>
    %54 = arith.andi %49, %53 : vector<1x256xi1>
    %c2_i32 = arith.constant 2 : i32
    %55 = vector.broadcast %c2_i32 : i32 to vector<1x256xi32>
    %56 = arith.addi %8, %55 : vector<1x256xi32>
    %c0_i32_21 = arith.constant 0 : i32
    %57 = vector.broadcast %c0_i32_21 : i32 to vector<1x256xi32>
    %58 = arith.cmpi sge, %56, %57 : vector<1x256xi32>
    %c2_i32_22 = arith.constant 2 : i32
    %59 = vector.broadcast %c2_i32_22 : i32 to vector<1x256xi32>
    %60 = arith.addi %8, %59 : vector<1x256xi32>
    %c16_i32_23 = arith.constant 16 : i32
    %61 = vector.broadcast %c16_i32_23 : i32 to vector<1x256xi32>
    %62 = arith.cmpi slt, %60, %61 : vector<1x256xi32>
    %63 = arith.andi %58, %62 : vector<1x256xi1>
    %c3_i32 = arith.constant 3 : i32
    %64 = vector.broadcast %c3_i32 : i32 to vector<1x256xi32>
    %65 = arith.addi %8, %64 : vector<1x256xi32>
    %c0_i32_24 = arith.constant 0 : i32
    %66 = vector.broadcast %c0_i32_24 : i32 to vector<1x256xi32>
    %67 = arith.cmpi sge, %65, %66 : vector<1x256xi32>
    %c3_i32_25 = arith.constant 3 : i32
    %68 = vector.broadcast %c3_i32_25 : i32 to vector<1x256xi32>
    %69 = arith.addi %8, %68 : vector<1x256xi32>
    %c16_i32_26 = arith.constant 16 : i32
    %70 = vector.broadcast %c16_i32_26 : i32 to vector<1x256xi32>
    %71 = arith.cmpi slt, %69, %70 : vector<1x256xi32>
    %72 = arith.andi %67, %71 : vector<1x256xi1>
    %c-3_i32_27 = arith.constant -3 : i32
    %73 = vector.broadcast %c-3_i32_27 : i32 to vector<1x256xi32>
    %74 = arith.addi %9, %73 : vector<1x256xi32>
    %c0_i32_28 = arith.constant 0 : i32
    %75 = vector.broadcast %c0_i32_28 : i32 to vector<1x256xi32>
    %76 = arith.cmpi sge, %74, %75 : vector<1x256xi32>
    %c-3_i32_29 = arith.constant -3 : i32
    %77 = vector.broadcast %c-3_i32_29 : i32 to vector<1x256xi32>
    %78 = arith.addi %9, %77 : vector<1x256xi32>
    %c16_i32_30 = arith.constant 16 : i32
    %79 = vector.broadcast %c16_i32_30 : i32 to vector<1x256xi32>
    %80 = arith.cmpi slt, %78, %79 : vector<1x256xi32>
    %81 = arith.andi %76, %80 : vector<1x256xi1>
    %c-2_i32_31 = arith.constant -2 : i32
    %82 = vector.broadcast %c-2_i32_31 : i32 to vector<1x256xi32>
    %83 = arith.addi %9, %82 : vector<1x256xi32>
    %c0_i32_32 = arith.constant 0 : i32
    %84 = vector.broadcast %c0_i32_32 : i32 to vector<1x256xi32>
    %85 = arith.cmpi sge, %83, %84 : vector<1x256xi32>
    %c-2_i32_33 = arith.constant -2 : i32
    %86 = vector.broadcast %c-2_i32_33 : i32 to vector<1x256xi32>
    %87 = arith.addi %9, %86 : vector<1x256xi32>
    %c16_i32_34 = arith.constant 16 : i32
    %88 = vector.broadcast %c16_i32_34 : i32 to vector<1x256xi32>
    %89 = arith.cmpi slt, %87, %88 : vector<1x256xi32>
    %90 = arith.andi %85, %89 : vector<1x256xi1>
    %c-1_i32_35 = arith.constant -1 : i32
    %91 = vector.broadcast %c-1_i32_35 : i32 to vector<1x256xi32>
    %92 = arith.addi %9, %91 : vector<1x256xi32>
    %c0_i32_36 = arith.constant 0 : i32
    %93 = vector.broadcast %c0_i32_36 : i32 to vector<1x256xi32>
    %94 = arith.cmpi sge, %92, %93 : vector<1x256xi32>
    %c-1_i32_37 = arith.constant -1 : i32
    %95 = vector.broadcast %c-1_i32_37 : i32 to vector<1x256xi32>
    %96 = arith.addi %9, %95 : vector<1x256xi32>
    %c16_i32_38 = arith.constant 16 : i32
    %97 = vector.broadcast %c16_i32_38 : i32 to vector<1x256xi32>
    %98 = arith.cmpi slt, %96, %97 : vector<1x256xi32>
    %99 = arith.andi %94, %98 : vector<1x256xi1>
    %c0_i32_39 = arith.constant 0 : i32
    %100 = vector.broadcast %c0_i32_39 : i32 to vector<1x256xi32>
    %101 = arith.addi %9, %100 : vector<1x256xi32>
    %c0_i32_40 = arith.constant 0 : i32
    %102 = vector.broadcast %c0_i32_40 : i32 to vector<1x256xi32>
    %103 = arith.cmpi sge, %101, %102 : vector<1x256xi32>
    %c0_i32_41 = arith.constant 0 : i32
    %104 = vector.broadcast %c0_i32_41 : i32 to vector<1x256xi32>
    %105 = arith.addi %9, %104 : vector<1x256xi32>
    %c16_i32_42 = arith.constant 16 : i32
    %106 = vector.broadcast %c16_i32_42 : i32 to vector<1x256xi32>
    %107 = arith.cmpi slt, %105, %106 : vector<1x256xi32>
    %108 = arith.andi %103, %107 : vector<1x256xi1>
    %c1_i32_43 = arith.constant 1 : i32
    %109 = vector.broadcast %c1_i32_43 : i32 to vector<1x256xi32>
    %110 = arith.addi %9, %109 : vector<1x256xi32>
    %c0_i32_44 = arith.constant 0 : i32
    %111 = vector.broadcast %c0_i32_44 : i32 to vector<1x256xi32>
    %112 = arith.cmpi sge, %110, %111 : vector<1x256xi32>
    %c1_i32_45 = arith.constant 1 : i32
    %113 = vector.broadcast %c1_i32_45 : i32 to vector<1x256xi32>
    %114 = arith.addi %9, %113 : vector<1x256xi32>
    %c16_i32_46 = arith.constant 16 : i32
    %115 = vector.broadcast %c16_i32_46 : i32 to vector<1x256xi32>
    %116 = arith.cmpi slt, %114, %115 : vector<1x256xi32>
    %117 = arith.andi %112, %116 : vector<1x256xi1>
    %c2_i32_47 = arith.constant 2 : i32
    %118 = vector.broadcast %c2_i32_47 : i32 to vector<1x256xi32>
    %119 = arith.addi %9, %118 : vector<1x256xi32>
    %c0_i32_48 = arith.constant 0 : i32
    %120 = vector.broadcast %c0_i32_48 : i32 to vector<1x256xi32>
    %121 = arith.cmpi sge, %119, %120 : vector<1x256xi32>
    %c2_i32_49 = arith.constant 2 : i32
    %122 = vector.broadcast %c2_i32_49 : i32 to vector<1x256xi32>
    %123 = arith.addi %9, %122 : vector<1x256xi32>
    %c16_i32_50 = arith.constant 16 : i32
    %124 = vector.broadcast %c16_i32_50 : i32 to vector<1x256xi32>
    %125 = arith.cmpi slt, %123, %124 : vector<1x256xi32>
    %126 = arith.andi %121, %125 : vector<1x256xi1>
    %c3_i32_51 = arith.constant 3 : i32
    %127 = vector.broadcast %c3_i32_51 : i32 to vector<1x256xi32>
    %128 = arith.addi %9, %127 : vector<1x256xi32>
    %c0_i32_52 = arith.constant 0 : i32
    %129 = vector.broadcast %c0_i32_52 : i32 to vector<1x256xi32>
    %130 = arith.cmpi sge, %128, %129 : vector<1x256xi32>
    %c3_i32_53 = arith.constant 3 : i32
    %131 = vector.broadcast %c3_i32_53 : i32 to vector<1x256xi32>
    %132 = arith.addi %9, %131 : vector<1x256xi32>
    %c16_i32_54 = arith.constant 16 : i32
    %133 = vector.broadcast %c16_i32_54 : i32 to vector<1x256xi32>
    %134 = arith.cmpi slt, %132, %133 : vector<1x256xi32>
    %135 = arith.andi %130, %134 : vector<1x256xi1>
    %cst_55 = arith.constant 0.000000e+00 : f32
    %136 = vector.broadcast %cst_55 : f32 to vector<1x256xf32>
    %c48_i32 = arith.constant 48 : i32
    %137 = tpu.dynamic_rotate %3 by %c48_i32 dim 1 : vector<1x256xf32>, i32 -> vector<1x256xf32>
    %cst_56 = arith.constant 0.000000e+00 : f32
    %138 = vector.broadcast %cst_56 : f32 to vector<1x256xf32>
    %139 = arith.select %18, %137, %138 : vector<1x256xi1>, vector<1x256xf32>
    %c3_i32_57 = arith.constant 3 : i32
    %140 = tpu.dynamic_rotate %139 by %c3_i32_57 dim 1 : vector<1x256xf32>, i32 -> vector<1x256xf32>
    %c0_58 = arith.constant 0 : index
    %141 = memref.load %arg1[%c0_58] : memref<98xf32, #tpu.memory_space<smem>>
    %cst_59 = arith.constant 0.000000e+00 : f32
    %142 = vector.broadcast %cst_59 : f32 to vector<1x256xf32>
    %143 = arith.select %81, %140, %142 : vector<1x256xi1>, vector<1x256xf32>
    %144 = vector.broadcast %141 : f32 to vector<1x256xf32>
    %145 = arith.mulf %144, %143 : vector<1x256xf32>
    %146 = arith.addf %136, %145 : vector<1x256xf32>
    %c2_i32_60 = arith.constant 2 : i32
    %147 = tpu.dynamic_rotate %139 by %c2_i32_60 dim 1 : vector<1x256xf32>, i32 -> vector<1x256xf32>
    %c1_61 = arith.constant 1 : index
    %148 = memref.load %arg1[%c1_61] : memref<98xf32, #tpu.memory_space<smem>>
    %cst_62 = arith.constant 0.000000e+00 : f32
    %149 = vector.broadcast %cst_62 : f32 to vector<1x256xf32>
    %150 = arith.select %90, %147, %149 : vector<1x256xi1>, vector<1x256xf32>
    %151 = vector.broadcast %148 : f32 to vector<1x256xf32>
    %152 = arith.mulf %151, %150 : vector<1x256xf32>
    %153 = arith.addf %146, %152 : vector<1x256xf32>
    %c1_i32_63 = arith.constant 1 : i32
    %154 = tpu.dynamic_rotate %139 by %c1_i32_63 dim 1 : vector<1x256xf32>, i32 -> vector<1x256xf32>
    %c2 = arith.constant 2 : index
    %155 = memref.load %arg1[%c2] : memref<98xf32, #tpu.memory_space<smem>>
    %cst_64 = arith.constant 0.000000e+00 : f32
    %156 = vector.broadcast %cst_64 : f32 to vector<1x256xf32>
    %157 = arith.select %99, %154, %156 : vector<1x256xi1>, vector<1x256xf32>
    %158 = vector.broadcast %155 : f32 to vector<1x256xf32>
    %159 = arith.mulf %158, %157 : vector<1x256xf32>
    %160 = arith.addf %153, %159 : vector<1x256xf32>
    %c3 = arith.constant 3 : index
    %161 = memref.load %arg1[%c3] : memref<98xf32, #tpu.memory_space<smem>>
    %cst_65 = arith.constant 0.000000e+00 : f32
    %162 = vector.broadcast %cst_65 : f32 to vector<1x256xf32>
    %163 = arith.select %108, %139, %162 : vector<1x256xi1>, vector<1x256xf32>
    %164 = vector.broadcast %161 : f32 to vector<1x256xf32>
    %165 = arith.mulf %164, %163 : vector<1x256xf32>
    %166 = arith.addf %160, %165 : vector<1x256xf32>
    %c255_i32 = arith.constant 255 : i32
    %167 = tpu.dynamic_rotate %139 by %c255_i32 dim 1 : vector<1x256xf32>, i32 -> vector<1x256xf32>
    %c4 = arith.constant 4 : index
    %168 = memref.load %arg1[%c4] : memref<98xf32, #tpu.memory_space<smem>>
    %cst_66 = arith.constant 0.000000e+00 : f32
    %169 = vector.broadcast %cst_66 : f32 to vector<1x256xf32>
    %170 = arith.select %117, %167, %169 : vector<1x256xi1>, vector<1x256xf32>
    %171 = vector.broadcast %168 : f32 to vector<1x256xf32>
    %172 = arith.mulf %171, %170 : vector<1x256xf32>
    %173 = arith.addf %166, %172 : vector<1x256xf32>
    %c254_i32 = arith.constant 254 : i32
    %174 = tpu.dynamic_rotate %139 by %c254_i32 dim 1 : vector<1x256xf32>, i32 -> vector<1x256xf32>
    %c5 = arith.constant 5 : index
    %175 = memref.load %arg1[%c5] : memref<98xf32, #tpu.memory_space<smem>>
    %cst_67 = arith.constant 0.000000e+00 : f32
    %176 = vector.broadcast %cst_67 : f32 to vector<1x256xf32>
    %177 = arith.select %126, %174, %176 : vector<1x256xi1>, vector<1x256xf32>
    %178 = vector.broadcast %175 : f32 to vector<1x256xf32>
    %179 = arith.mulf %178, %177 : vector<1x256xf32>
    %180 = arith.addf %173, %179 : vector<1x256xf32>
    %c253_i32 = arith.constant 253 : i32
    %181 = tpu.dynamic_rotate %139 by %c253_i32 dim 1 : vector<1x256xf32>, i32 -> vector<1x256xf32>
    %c6 = arith.constant 6 : index
    %182 = memref.load %arg1[%c6] : memref<98xf32, #tpu.memory_space<smem>>
    %cst_68 = arith.constant 0.000000e+00 : f32
    %183 = vector.broadcast %cst_68 : f32 to vector<1x256xf32>
    %184 = arith.select %135, %181, %183 : vector<1x256xi1>, vector<1x256xf32>
    %185 = vector.broadcast %182 : f32 to vector<1x256xf32>
    %186 = arith.mulf %185, %184 : vector<1x256xf32>
    %187 = arith.addf %180, %186 : vector<1x256xf32>
    %c32_i32 = arith.constant 32 : i32
    %188 = tpu.dynamic_rotate %3 by %c32_i32 dim 1 : vector<1x256xf32>, i32 -> vector<1x256xf32>
    %cst_69 = arith.constant 0.000000e+00 : f32
    %189 = vector.broadcast %cst_69 : f32 to vector<1x256xf32>
    %190 = arith.select %27, %188, %189 : vector<1x256xi1>, vector<1x256xf32>
    %c3_i32_70 = arith.constant 3 : i32
    %191 = tpu.dynamic_rotate %190 by %c3_i32_70 dim 1 : vector<1x256xf32>, i32 -> vector<1x256xf32>
    %c7 = arith.constant 7 : index
    %192 = memref.load %arg1[%c7] : memref<98xf32, #tpu.memory_space<smem>>
    %cst_71 = arith.constant 0.000000e+00 : f32
    %193 = vector.broadcast %cst_71 : f32 to vector<1x256xf32>
    %194 = arith.select %81, %191, %193 : vector<1x256xi1>, vector<1x256xf32>
    %195 = vector.broadcast %192 : f32 to vector<1x256xf32>
    %196 = arith.mulf %195, %194 : vector<1x256xf32>
    %197 = arith.addf %187, %196 : vector<1x256xf32>
    %c2_i32_72 = arith.constant 2 : i32
    %198 = tpu.dynamic_rotate %190 by %c2_i32_72 dim 1 : vector<1x256xf32>, i32 -> vector<1x256xf32>
    %c8 = arith.constant 8 : index
    %199 = memref.load %arg1[%c8] : memref<98xf32, #tpu.memory_space<smem>>
    %cst_73 = arith.constant 0.000000e+00 : f32
    %200 = vector.broadcast %cst_73 : f32 to vector<1x256xf32>
    %201 = arith.select %90, %198, %200 : vector<1x256xi1>, vector<1x256xf32>
    %202 = vector.broadcast %199 : f32 to vector<1x256xf32>
    %203 = arith.mulf %202, %201 : vector<1x256xf32>
    %204 = arith.addf %197, %203 : vector<1x256xf32>
    %c1_i32_74 = arith.constant 1 : i32
    %205 = tpu.dynamic_rotate %190 by %c1_i32_74 dim 1 : vector<1x256xf32>, i32 -> vector<1x256xf32>
    %c9 = arith.constant 9 : index
    %206 = memref.load %arg1[%c9] : memref<98xf32, #tpu.memory_space<smem>>
    %cst_75 = arith.constant 0.000000e+00 : f32
    %207 = vector.broadcast %cst_75 : f32 to vector<1x256xf32>
    %208 = arith.select %99, %205, %207 : vector<1x256xi1>, vector<1x256xf32>
    %209 = vector.broadcast %206 : f32 to vector<1x256xf32>
    %210 = arith.mulf %209, %208 : vector<1x256xf32>
    %211 = arith.addf %204, %210 : vector<1x256xf32>
    %c10 = arith.constant 10 : index
    %212 = memref.load %arg1[%c10] : memref<98xf32, #tpu.memory_space<smem>>
    %cst_76 = arith.constant 0.000000e+00 : f32
    %213 = vector.broadcast %cst_76 : f32 to vector<1x256xf32>
    %214 = arith.select %108, %190, %213 : vector<1x256xi1>, vector<1x256xf32>
    %215 = vector.broadcast %212 : f32 to vector<1x256xf32>
    %216 = arith.mulf %215, %214 : vector<1x256xf32>
    %217 = arith.addf %211, %216 : vector<1x256xf32>
    %c255_i32_77 = arith.constant 255 : i32
    %218 = tpu.dynamic_rotate %190 by %c255_i32_77 dim 1 : vector<1x256xf32>, i32 -> vector<1x256xf32>
    %c11 = arith.constant 11 : index
    %219 = memref.load %arg1[%c11] : memref<98xf32, #tpu.memory_space<smem>>
    %cst_78 = arith.constant 0.000000e+00 : f32
    %220 = vector.broadcast %cst_78 : f32 to vector<1x256xf32>
    %221 = arith.select %117, %218, %220 : vector<1x256xi1>, vector<1x256xf32>
    %222 = vector.broadcast %219 : f32 to vector<1x256xf32>
    %223 = arith.mulf %222, %221 : vector<1x256xf32>
    %224 = arith.addf %217, %223 : vector<1x256xf32>
    %c254_i32_79 = arith.constant 254 : i32
    %225 = tpu.dynamic_rotate %190 by %c254_i32_79 dim 1 : vector<1x256xf32>, i32 -> vector<1x256xf32>
    %c12 = arith.constant 12 : index
    %226 = memref.load %arg1[%c12] : memref<98xf32, #tpu.memory_space<smem>>
    %cst_80 = arith.constant 0.000000e+00 : f32
    %227 = vector.broadcast %cst_80 : f32 to vector<1x256xf32>
    %228 = arith.select %126, %225, %227 : vector<1x256xi1>, vector<1x256xf32>
    %229 = vector.broadcast %226 : f32 to vector<1x256xf32>
    %230 = arith.mulf %229, %228 : vector<1x256xf32>
    %231 = arith.addf %224, %230 : vector<1x256xf32>
    %c253_i32_81 = arith.constant 253 : i32
    %232 = tpu.dynamic_rotate %190 by %c253_i32_81 dim 1 : vector<1x256xf32>, i32 -> vector<1x256xf32>
    %c13 = arith.constant 13 : index
    %233 = memref.load %arg1[%c13] : memref<98xf32, #tpu.memory_space<smem>>
    %cst_82 = arith.constant 0.000000e+00 : f32
    %234 = vector.broadcast %cst_82 : f32 to vector<1x256xf32>
    %235 = arith.select %135, %232, %234 : vector<1x256xi1>, vector<1x256xf32>
    %236 = vector.broadcast %233 : f32 to vector<1x256xf32>
    %237 = arith.mulf %236, %235 : vector<1x256xf32>
    %238 = arith.addf %231, %237 : vector<1x256xf32>
    %c16_i32_83 = arith.constant 16 : i32
    %239 = tpu.dynamic_rotate %3 by %c16_i32_83 dim 1 : vector<1x256xf32>, i32 -> vector<1x256xf32>
    %cst_84 = arith.constant 0.000000e+00 : f32
    %240 = vector.broadcast %cst_84 : f32 to vector<1x256xf32>
    %241 = arith.select %36, %239, %240 : vector<1x256xi1>, vector<1x256xf32>
    %c3_i32_85 = arith.constant 3 : i32
    %242 = tpu.dynamic_rotate %241 by %c3_i32_85 dim 1 : vector<1x256xf32>, i32 -> vector<1x256xf32>
    %c14 = arith.constant 14 : index
    %243 = memref.load %arg1[%c14] : memref<98xf32, #tpu.memory_space<smem>>
    %cst_86 = arith.constant 0.000000e+00 : f32
    %244 = vector.broadcast %cst_86 : f32 to vector<1x256xf32>
    %245 = arith.select %81, %242, %244 : vector<1x256xi1>, vector<1x256xf32>
    %246 = vector.broadcast %243 : f32 to vector<1x256xf32>
    %247 = arith.mulf %246, %245 : vector<1x256xf32>
    %248 = arith.addf %238, %247 : vector<1x256xf32>
    %c2_i32_87 = arith.constant 2 : i32
    %249 = tpu.dynamic_rotate %241 by %c2_i32_87 dim 1 : vector<1x256xf32>, i32 -> vector<1x256xf32>
    %c15 = arith.constant 15 : index
    %250 = memref.load %arg1[%c15] : memref<98xf32, #tpu.memory_space<smem>>
    %cst_88 = arith.constant 0.000000e+00 : f32
    %251 = vector.broadcast %cst_88 : f32 to vector<1x256xf32>
    %252 = arith.select %90, %249, %251 : vector<1x256xi1>, vector<1x256xf32>
    %253 = vector.broadcast %250 : f32 to vector<1x256xf32>
    %254 = arith.mulf %253, %252 : vector<1x256xf32>
    %255 = arith.addf %248, %254 : vector<1x256xf32>
    %c1_i32_89 = arith.constant 1 : i32
    %256 = tpu.dynamic_rotate %241 by %c1_i32_89 dim 1 : vector<1x256xf32>, i32 -> vector<1x256xf32>
    %c16 = arith.constant 16 : index
    %257 = memref.load %arg1[%c16] : memref<98xf32, #tpu.memory_space<smem>>
    %cst_90 = arith.constant 0.000000e+00 : f32
    %258 = vector.broadcast %cst_90 : f32 to vector<1x256xf32>
    %259 = arith.select %99, %256, %258 : vector<1x256xi1>, vector<1x256xf32>
    %260 = vector.broadcast %257 : f32 to vector<1x256xf32>
    %261 = arith.mulf %260, %259 : vector<1x256xf32>
    %262 = arith.addf %255, %261 : vector<1x256xf32>
    %c17 = arith.constant 17 : index
    %263 = memref.load %arg1[%c17] : memref<98xf32, #tpu.memory_space<smem>>
    %cst_91 = arith.constant 0.000000e+00 : f32
    %264 = vector.broadcast %cst_91 : f32 to vector<1x256xf32>
    %265 = arith.select %108, %241, %264 : vector<1x256xi1>, vector<1x256xf32>
    %266 = vector.broadcast %263 : f32 to vector<1x256xf32>
    %267 = arith.mulf %266, %265 : vector<1x256xf32>
    %268 = arith.addf %262, %267 : vector<1x256xf32>
    %c255_i32_92 = arith.constant 255 : i32
    %269 = tpu.dynamic_rotate %241 by %c255_i32_92 dim 1 : vector<1x256xf32>, i32 -> vector<1x256xf32>
    %c18 = arith.constant 18 : index
    %270 = memref.load %arg1[%c18] : memref<98xf32, #tpu.memory_space<smem>>
    %cst_93 = arith.constant 0.000000e+00 : f32
    %271 = vector.broadcast %cst_93 : f32 to vector<1x256xf32>
    %272 = arith.select %117, %269, %271 : vector<1x256xi1>, vector<1x256xf32>
    %273 = vector.broadcast %270 : f32 to vector<1x256xf32>
    %274 = arith.mulf %273, %272 : vector<1x256xf32>
    %275 = arith.addf %268, %274 : vector<1x256xf32>
    %c254_i32_94 = arith.constant 254 : i32
    %276 = tpu.dynamic_rotate %241 by %c254_i32_94 dim 1 : vector<1x256xf32>, i32 -> vector<1x256xf32>
    %c19 = arith.constant 19 : index
    %277 = memref.load %arg1[%c19] : memref<98xf32, #tpu.memory_space<smem>>
    %cst_95 = arith.constant 0.000000e+00 : f32
    %278 = vector.broadcast %cst_95 : f32 to vector<1x256xf32>
    %279 = arith.select %126, %276, %278 : vector<1x256xi1>, vector<1x256xf32>
    %280 = vector.broadcast %277 : f32 to vector<1x256xf32>
    %281 = arith.mulf %280, %279 : vector<1x256xf32>
    %282 = arith.addf %275, %281 : vector<1x256xf32>
    %c253_i32_96 = arith.constant 253 : i32
    %283 = tpu.dynamic_rotate %241 by %c253_i32_96 dim 1 : vector<1x256xf32>, i32 -> vector<1x256xf32>
    %c20 = arith.constant 20 : index
    %284 = memref.load %arg1[%c20] : memref<98xf32, #tpu.memory_space<smem>>
    %cst_97 = arith.constant 0.000000e+00 : f32
    %285 = vector.broadcast %cst_97 : f32 to vector<1x256xf32>
    %286 = arith.select %135, %283, %285 : vector<1x256xi1>, vector<1x256xf32>
    %287 = vector.broadcast %284 : f32 to vector<1x256xf32>
    %288 = arith.mulf %287, %286 : vector<1x256xf32>
    %289 = arith.addf %282, %288 : vector<1x256xf32>
    %cst_98 = arith.constant 0.000000e+00 : f32
    %290 = vector.broadcast %cst_98 : f32 to vector<1x256xf32>
    %291 = arith.select %45, %3, %290 : vector<1x256xi1>, vector<1x256xf32>
    %c3_i32_99 = arith.constant 3 : i32
    %292 = tpu.dynamic_rotate %291 by %c3_i32_99 dim 1 : vector<1x256xf32>, i32 -> vector<1x256xf32>
    %c21 = arith.constant 21 : index
    %293 = memref.load %arg1[%c21] : memref<98xf32, #tpu.memory_space<smem>>
    %cst_100 = arith.constant 0.000000e+00 : f32
    %294 = vector.broadcast %cst_100 : f32 to vector<1x256xf32>
    %295 = arith.select %81, %292, %294 : vector<1x256xi1>, vector<1x256xf32>
    %296 = vector.broadcast %293 : f32 to vector<1x256xf32>
    %297 = arith.mulf %296, %295 : vector<1x256xf32>
    %298 = arith.addf %289, %297 : vector<1x256xf32>
    %c2_i32_101 = arith.constant 2 : i32
    %299 = tpu.dynamic_rotate %291 by %c2_i32_101 dim 1 : vector<1x256xf32>, i32 -> vector<1x256xf32>
    %c22 = arith.constant 22 : index
    %300 = memref.load %arg1[%c22] : memref<98xf32, #tpu.memory_space<smem>>
    %cst_102 = arith.constant 0.000000e+00 : f32
    %301 = vector.broadcast %cst_102 : f32 to vector<1x256xf32>
    %302 = arith.select %90, %299, %301 : vector<1x256xi1>, vector<1x256xf32>
    %303 = vector.broadcast %300 : f32 to vector<1x256xf32>
    %304 = arith.mulf %303, %302 : vector<1x256xf32>
    %305 = arith.addf %298, %304 : vector<1x256xf32>
    %c1_i32_103 = arith.constant 1 : i32
    %306 = tpu.dynamic_rotate %291 by %c1_i32_103 dim 1 : vector<1x256xf32>, i32 -> vector<1x256xf32>
    %c23 = arith.constant 23 : index
    %307 = memref.load %arg1[%c23] : memref<98xf32, #tpu.memory_space<smem>>
    %cst_104 = arith.constant 0.000000e+00 : f32
    %308 = vector.broadcast %cst_104 : f32 to vector<1x256xf32>
    %309 = arith.select %99, %306, %308 : vector<1x256xi1>, vector<1x256xf32>
    %310 = vector.broadcast %307 : f32 to vector<1x256xf32>
    %311 = arith.mulf %310, %309 : vector<1x256xf32>
    %312 = arith.addf %305, %311 : vector<1x256xf32>
    %c24 = arith.constant 24 : index
    %313 = memref.load %arg1[%c24] : memref<98xf32, #tpu.memory_space<smem>>
    %cst_105 = arith.constant 0.000000e+00 : f32
    %314 = vector.broadcast %cst_105 : f32 to vector<1x256xf32>
    %315 = arith.select %108, %291, %314 : vector<1x256xi1>, vector<1x256xf32>
    %316 = vector.broadcast %313 : f32 to vector<1x256xf32>
    %317 = arith.mulf %316, %315 : vector<1x256xf32>
    %318 = arith.addf %312, %317 : vector<1x256xf32>
    %c255_i32_106 = arith.constant 255 : i32
    %319 = tpu.dynamic_rotate %291 by %c255_i32_106 dim 1 : vector<1x256xf32>, i32 -> vector<1x256xf32>
    %c25 = arith.constant 25 : index
    %320 = memref.load %arg1[%c25] : memref<98xf32, #tpu.memory_space<smem>>
    %cst_107 = arith.constant 0.000000e+00 : f32
    %321 = vector.broadcast %cst_107 : f32 to vector<1x256xf32>
    %322 = arith.select %117, %319, %321 : vector<1x256xi1>, vector<1x256xf32>
    %323 = vector.broadcast %320 : f32 to vector<1x256xf32>
    %324 = arith.mulf %323, %322 : vector<1x256xf32>
    %325 = arith.addf %318, %324 : vector<1x256xf32>
    %c254_i32_108 = arith.constant 254 : i32
    %326 = tpu.dynamic_rotate %291 by %c254_i32_108 dim 1 : vector<1x256xf32>, i32 -> vector<1x256xf32>
    %c26 = arith.constant 26 : index
    %327 = memref.load %arg1[%c26] : memref<98xf32, #tpu.memory_space<smem>>
    %cst_109 = arith.constant 0.000000e+00 : f32
    %328 = vector.broadcast %cst_109 : f32 to vector<1x256xf32>
    %329 = arith.select %126, %326, %328 : vector<1x256xi1>, vector<1x256xf32>
    %330 = vector.broadcast %327 : f32 to vector<1x256xf32>
    %331 = arith.mulf %330, %329 : vector<1x256xf32>
    %332 = arith.addf %325, %331 : vector<1x256xf32>
    %c253_i32_110 = arith.constant 253 : i32
    %333 = tpu.dynamic_rotate %291 by %c253_i32_110 dim 1 : vector<1x256xf32>, i32 -> vector<1x256xf32>
    %c27 = arith.constant 27 : index
    %334 = memref.load %arg1[%c27] : memref<98xf32, #tpu.memory_space<smem>>
    %cst_111 = arith.constant 0.000000e+00 : f32
    %335 = vector.broadcast %cst_111 : f32 to vector<1x256xf32>
    %336 = arith.select %135, %333, %335 : vector<1x256xi1>, vector<1x256xf32>
    %337 = vector.broadcast %334 : f32 to vector<1x256xf32>
    %338 = arith.mulf %337, %336 : vector<1x256xf32>
    %339 = arith.addf %332, %338 : vector<1x256xf32>
    %c240_i32 = arith.constant 240 : i32
    %340 = tpu.dynamic_rotate %3 by %c240_i32 dim 1 : vector<1x256xf32>, i32 -> vector<1x256xf32>
    %cst_112 = arith.constant 0.000000e+00 : f32
    %341 = vector.broadcast %cst_112 : f32 to vector<1x256xf32>
    %342 = arith.select %54, %340, %341 : vector<1x256xi1>, vector<1x256xf32>
    %c3_i32_113 = arith.constant 3 : i32
    %343 = tpu.dynamic_rotate %342 by %c3_i32_113 dim 1 : vector<1x256xf32>, i32 -> vector<1x256xf32>
    %c28 = arith.constant 28 : index
    %344 = memref.load %arg1[%c28] : memref<98xf32, #tpu.memory_space<smem>>
    %cst_114 = arith.constant 0.000000e+00 : f32
    %345 = vector.broadcast %cst_114 : f32 to vector<1x256xf32>
    %346 = arith.select %81, %343, %345 : vector<1x256xi1>, vector<1x256xf32>
    %347 = vector.broadcast %344 : f32 to vector<1x256xf32>
    %348 = arith.mulf %347, %346 : vector<1x256xf32>
    %349 = arith.addf %339, %348 : vector<1x256xf32>
    %c2_i32_115 = arith.constant 2 : i32
    %350 = tpu.dynamic_rotate %342 by %c2_i32_115 dim 1 : vector<1x256xf32>, i32 -> vector<1x256xf32>
    %c29 = arith.constant 29 : index
    %351 = memref.load %arg1[%c29] : memref<98xf32, #tpu.memory_space<smem>>
    %cst_116 = arith.constant 0.000000e+00 : f32
    %352 = vector.broadcast %cst_116 : f32 to vector<1x256xf32>
    %353 = arith.select %90, %350, %352 : vector<1x256xi1>, vector<1x256xf32>
    %354 = vector.broadcast %351 : f32 to vector<1x256xf32>
    %355 = arith.mulf %354, %353 : vector<1x256xf32>
    %356 = arith.addf %349, %355 : vector<1x256xf32>
    %c1_i32_117 = arith.constant 1 : i32
    %357 = tpu.dynamic_rotate %342 by %c1_i32_117 dim 1 : vector<1x256xf32>, i32 -> vector<1x256xf32>
    %c30 = arith.constant 30 : index
    %358 = memref.load %arg1[%c30] : memref<98xf32, #tpu.memory_space<smem>>
    %cst_118 = arith.constant 0.000000e+00 : f32
    %359 = vector.broadcast %cst_118 : f32 to vector<1x256xf32>
    %360 = arith.select %99, %357, %359 : vector<1x256xi1>, vector<1x256xf32>
    %361 = vector.broadcast %358 : f32 to vector<1x256xf32>
    %362 = arith.mulf %361, %360 : vector<1x256xf32>
    %363 = arith.addf %356, %362 : vector<1x256xf32>
    %c31 = arith.constant 31 : index
    %364 = memref.load %arg1[%c31] : memref<98xf32, #tpu.memory_space<smem>>
    %cst_119 = arith.constant 0.000000e+00 : f32
    %365 = vector.broadcast %cst_119 : f32 to vector<1x256xf32>
    %366 = arith.select %108, %342, %365 : vector<1x256xi1>, vector<1x256xf32>
    %367 = vector.broadcast %364 : f32 to vector<1x256xf32>
    %368 = arith.mulf %367, %366 : vector<1x256xf32>
    %369 = arith.addf %363, %368 : vector<1x256xf32>
    %c255_i32_120 = arith.constant 255 : i32
    %370 = tpu.dynamic_rotate %342 by %c255_i32_120 dim 1 : vector<1x256xf32>, i32 -> vector<1x256xf32>
    %c32 = arith.constant 32 : index
    %371 = memref.load %arg1[%c32] : memref<98xf32, #tpu.memory_space<smem>>
    %cst_121 = arith.constant 0.000000e+00 : f32
    %372 = vector.broadcast %cst_121 : f32 to vector<1x256xf32>
    %373 = arith.select %117, %370, %372 : vector<1x256xi1>, vector<1x256xf32>
    %374 = vector.broadcast %371 : f32 to vector<1x256xf32>
    %375 = arith.mulf %374, %373 : vector<1x256xf32>
    %376 = arith.addf %369, %375 : vector<1x256xf32>
    %c254_i32_122 = arith.constant 254 : i32
    %377 = tpu.dynamic_rotate %342 by %c254_i32_122 dim 1 : vector<1x256xf32>, i32 -> vector<1x256xf32>
    %c33 = arith.constant 33 : index
    %378 = memref.load %arg1[%c33] : memref<98xf32, #tpu.memory_space<smem>>
    %cst_123 = arith.constant 0.000000e+00 : f32
    %379 = vector.broadcast %cst_123 : f32 to vector<1x256xf32>
    %380 = arith.select %126, %377, %379 : vector<1x256xi1>, vector<1x256xf32>
    %381 = vector.broadcast %378 : f32 to vector<1x256xf32>
    %382 = arith.mulf %381, %380 : vector<1x256xf32>
    %383 = arith.addf %376, %382 : vector<1x256xf32>
    %c253_i32_124 = arith.constant 253 : i32
    %384 = tpu.dynamic_rotate %342 by %c253_i32_124 dim 1 : vector<1x256xf32>, i32 -> vector<1x256xf32>
    %c34 = arith.constant 34 : index
    %385 = memref.load %arg1[%c34] : memref<98xf32, #tpu.memory_space<smem>>
    %cst_125 = arith.constant 0.000000e+00 : f32
    %386 = vector.broadcast %cst_125 : f32 to vector<1x256xf32>
    %387 = arith.select %135, %384, %386 : vector<1x256xi1>, vector<1x256xf32>
    %388 = vector.broadcast %385 : f32 to vector<1x256xf32>
    %389 = arith.mulf %388, %387 : vector<1x256xf32>
    %390 = arith.addf %383, %389 : vector<1x256xf32>
    %c224_i32 = arith.constant 224 : i32
    %391 = tpu.dynamic_rotate %3 by %c224_i32 dim 1 : vector<1x256xf32>, i32 -> vector<1x256xf32>
    %cst_126 = arith.constant 0.000000e+00 : f32
    %392 = vector.broadcast %cst_126 : f32 to vector<1x256xf32>
    %393 = arith.select %63, %391, %392 : vector<1x256xi1>, vector<1x256xf32>
    %c3_i32_127 = arith.constant 3 : i32
    %394 = tpu.dynamic_rotate %393 by %c3_i32_127 dim 1 : vector<1x256xf32>, i32 -> vector<1x256xf32>
    %c35 = arith.constant 35 : index
    %395 = memref.load %arg1[%c35] : memref<98xf32, #tpu.memory_space<smem>>
    %cst_128 = arith.constant 0.000000e+00 : f32
    %396 = vector.broadcast %cst_128 : f32 to vector<1x256xf32>
    %397 = arith.select %81, %394, %396 : vector<1x256xi1>, vector<1x256xf32>
    %398 = vector.broadcast %395 : f32 to vector<1x256xf32>
    %399 = arith.mulf %398, %397 : vector<1x256xf32>
    %400 = arith.addf %390, %399 : vector<1x256xf32>
    %c2_i32_129 = arith.constant 2 : i32
    %401 = tpu.dynamic_rotate %393 by %c2_i32_129 dim 1 : vector<1x256xf32>, i32 -> vector<1x256xf32>
    %c36 = arith.constant 36 : index
    %402 = memref.load %arg1[%c36] : memref<98xf32, #tpu.memory_space<smem>>
    %cst_130 = arith.constant 0.000000e+00 : f32
    %403 = vector.broadcast %cst_130 : f32 to vector<1x256xf32>
    %404 = arith.select %90, %401, %403 : vector<1x256xi1>, vector<1x256xf32>
    %405 = vector.broadcast %402 : f32 to vector<1x256xf32>
    %406 = arith.mulf %405, %404 : vector<1x256xf32>
    %407 = arith.addf %400, %406 : vector<1x256xf32>
    %c1_i32_131 = arith.constant 1 : i32
    %408 = tpu.dynamic_rotate %393 by %c1_i32_131 dim 1 : vector<1x256xf32>, i32 -> vector<1x256xf32>
    %c37 = arith.constant 37 : index
    %409 = memref.load %arg1[%c37] : memref<98xf32, #tpu.memory_space<smem>>
    %cst_132 = arith.constant 0.000000e+00 : f32
    %410 = vector.broadcast %cst_132 : f32 to vector<1x256xf32>
    %411 = arith.select %99, %408, %410 : vector<1x256xi1>, vector<1x256xf32>
    %412 = vector.broadcast %409 : f32 to vector<1x256xf32>
    %413 = arith.mulf %412, %411 : vector<1x256xf32>
    %414 = arith.addf %407, %413 : vector<1x256xf32>
    %c38 = arith.constant 38 : index
    %415 = memref.load %arg1[%c38] : memref<98xf32, #tpu.memory_space<smem>>
    %cst_133 = arith.constant 0.000000e+00 : f32
    %416 = vector.broadcast %cst_133 : f32 to vector<1x256xf32>
    %417 = arith.select %108, %393, %416 : vector<1x256xi1>, vector<1x256xf32>
    %418 = vector.broadcast %415 : f32 to vector<1x256xf32>
    %419 = arith.mulf %418, %417 : vector<1x256xf32>
    %420 = arith.addf %414, %419 : vector<1x256xf32>
    %c255_i32_134 = arith.constant 255 : i32
    %421 = tpu.dynamic_rotate %393 by %c255_i32_134 dim 1 : vector<1x256xf32>, i32 -> vector<1x256xf32>
    %c39 = arith.constant 39 : index
    %422 = memref.load %arg1[%c39] : memref<98xf32, #tpu.memory_space<smem>>
    %cst_135 = arith.constant 0.000000e+00 : f32
    %423 = vector.broadcast %cst_135 : f32 to vector<1x256xf32>
    %424 = arith.select %117, %421, %423 : vector<1x256xi1>, vector<1x256xf32>
    %425 = vector.broadcast %422 : f32 to vector<1x256xf32>
    %426 = arith.mulf %425, %424 : vector<1x256xf32>
    %427 = arith.addf %420, %426 : vector<1x256xf32>
    %c254_i32_136 = arith.constant 254 : i32
    %428 = tpu.dynamic_rotate %393 by %c254_i32_136 dim 1 : vector<1x256xf32>, i32 -> vector<1x256xf32>
    %c40 = arith.constant 40 : index
    %429 = memref.load %arg1[%c40] : memref<98xf32, #tpu.memory_space<smem>>
    %cst_137 = arith.constant 0.000000e+00 : f32
    %430 = vector.broadcast %cst_137 : f32 to vector<1x256xf32>
    %431 = arith.select %126, %428, %430 : vector<1x256xi1>, vector<1x256xf32>
    %432 = vector.broadcast %429 : f32 to vector<1x256xf32>
    %433 = arith.mulf %432, %431 : vector<1x256xf32>
    %434 = arith.addf %427, %433 : vector<1x256xf32>
    %c253_i32_138 = arith.constant 253 : i32
    %435 = tpu.dynamic_rotate %393 by %c253_i32_138 dim 1 : vector<1x256xf32>, i32 -> vector<1x256xf32>
    %c41 = arith.constant 41 : index
    %436 = memref.load %arg1[%c41] : memref<98xf32, #tpu.memory_space<smem>>
    %cst_139 = arith.constant 0.000000e+00 : f32
    %437 = vector.broadcast %cst_139 : f32 to vector<1x256xf32>
    %438 = arith.select %135, %435, %437 : vector<1x256xi1>, vector<1x256xf32>
    %439 = vector.broadcast %436 : f32 to vector<1x256xf32>
    %440 = arith.mulf %439, %438 : vector<1x256xf32>
    %441 = arith.addf %434, %440 : vector<1x256xf32>
    %c208_i32 = arith.constant 208 : i32
    %442 = tpu.dynamic_rotate %3 by %c208_i32 dim 1 : vector<1x256xf32>, i32 -> vector<1x256xf32>
    %cst_140 = arith.constant 0.000000e+00 : f32
    %443 = vector.broadcast %cst_140 : f32 to vector<1x256xf32>
    %444 = arith.select %72, %442, %443 : vector<1x256xi1>, vector<1x256xf32>
    %c3_i32_141 = arith.constant 3 : i32
    %445 = tpu.dynamic_rotate %444 by %c3_i32_141 dim 1 : vector<1x256xf32>, i32 -> vector<1x256xf32>
    %c42 = arith.constant 42 : index
    %446 = memref.load %arg1[%c42] : memref<98xf32, #tpu.memory_space<smem>>
    %cst_142 = arith.constant 0.000000e+00 : f32
    %447 = vector.broadcast %cst_142 : f32 to vector<1x256xf32>
    %448 = arith.select %81, %445, %447 : vector<1x256xi1>, vector<1x256xf32>
    %449 = vector.broadcast %446 : f32 to vector<1x256xf32>
    %450 = arith.mulf %449, %448 : vector<1x256xf32>
    %451 = arith.addf %441, %450 : vector<1x256xf32>
    %c2_i32_143 = arith.constant 2 : i32
    %452 = tpu.dynamic_rotate %444 by %c2_i32_143 dim 1 : vector<1x256xf32>, i32 -> vector<1x256xf32>
    %c43 = arith.constant 43 : index
    %453 = memref.load %arg1[%c43] : memref<98xf32, #tpu.memory_space<smem>>
    %cst_144 = arith.constant 0.000000e+00 : f32
    %454 = vector.broadcast %cst_144 : f32 to vector<1x256xf32>
    %455 = arith.select %90, %452, %454 : vector<1x256xi1>, vector<1x256xf32>
    %456 = vector.broadcast %453 : f32 to vector<1x256xf32>
    %457 = arith.mulf %456, %455 : vector<1x256xf32>
    %458 = arith.addf %451, %457 : vector<1x256xf32>
    %c1_i32_145 = arith.constant 1 : i32
    %459 = tpu.dynamic_rotate %444 by %c1_i32_145 dim 1 : vector<1x256xf32>, i32 -> vector<1x256xf32>
    %c44 = arith.constant 44 : index
    %460 = memref.load %arg1[%c44] : memref<98xf32, #tpu.memory_space<smem>>
    %cst_146 = arith.constant 0.000000e+00 : f32
    %461 = vector.broadcast %cst_146 : f32 to vector<1x256xf32>
    %462 = arith.select %99, %459, %461 : vector<1x256xi1>, vector<1x256xf32>
    %463 = vector.broadcast %460 : f32 to vector<1x256xf32>
    %464 = arith.mulf %463, %462 : vector<1x256xf32>
    %465 = arith.addf %458, %464 : vector<1x256xf32>
    %c45 = arith.constant 45 : index
    %466 = memref.load %arg1[%c45] : memref<98xf32, #tpu.memory_space<smem>>
    %cst_147 = arith.constant 0.000000e+00 : f32
    %467 = vector.broadcast %cst_147 : f32 to vector<1x256xf32>
    %468 = arith.select %108, %444, %467 : vector<1x256xi1>, vector<1x256xf32>
    %469 = vector.broadcast %466 : f32 to vector<1x256xf32>
    %470 = arith.mulf %469, %468 : vector<1x256xf32>
    %471 = arith.addf %465, %470 : vector<1x256xf32>
    %c255_i32_148 = arith.constant 255 : i32
    %472 = tpu.dynamic_rotate %444 by %c255_i32_148 dim 1 : vector<1x256xf32>, i32 -> vector<1x256xf32>
    %c46 = arith.constant 46 : index
    %473 = memref.load %arg1[%c46] : memref<98xf32, #tpu.memory_space<smem>>
    %cst_149 = arith.constant 0.000000e+00 : f32
    %474 = vector.broadcast %cst_149 : f32 to vector<1x256xf32>
    %475 = arith.select %117, %472, %474 : vector<1x256xi1>, vector<1x256xf32>
    %476 = vector.broadcast %473 : f32 to vector<1x256xf32>
    %477 = arith.mulf %476, %475 : vector<1x256xf32>
    %478 = arith.addf %471, %477 : vector<1x256xf32>
    %c254_i32_150 = arith.constant 254 : i32
    %479 = tpu.dynamic_rotate %444 by %c254_i32_150 dim 1 : vector<1x256xf32>, i32 -> vector<1x256xf32>
    %c47 = arith.constant 47 : index
    %480 = memref.load %arg1[%c47] : memref<98xf32, #tpu.memory_space<smem>>
    %cst_151 = arith.constant 0.000000e+00 : f32
    %481 = vector.broadcast %cst_151 : f32 to vector<1x256xf32>
    %482 = arith.select %126, %479, %481 : vector<1x256xi1>, vector<1x256xf32>
    %483 = vector.broadcast %480 : f32 to vector<1x256xf32>
    %484 = arith.mulf %483, %482 : vector<1x256xf32>
    %485 = arith.addf %478, %484 : vector<1x256xf32>
    %c253_i32_152 = arith.constant 253 : i32
    %486 = tpu.dynamic_rotate %444 by %c253_i32_152 dim 1 : vector<1x256xf32>, i32 -> vector<1x256xf32>
    %c48 = arith.constant 48 : index
    %487 = memref.load %arg1[%c48] : memref<98xf32, #tpu.memory_space<smem>>
    %cst_153 = arith.constant 0.000000e+00 : f32
    %488 = vector.broadcast %cst_153 : f32 to vector<1x256xf32>
    %489 = arith.select %135, %486, %488 : vector<1x256xi1>, vector<1x256xf32>
    %490 = vector.broadcast %487 : f32 to vector<1x256xf32>
    %491 = arith.mulf %490, %489 : vector<1x256xf32>
    %492 = arith.addf %485, %491 : vector<1x256xf32>
    %c48_i32_154 = arith.constant 48 : i32
    %493 = tpu.dynamic_rotate %7 by %c48_i32_154 dim 1 : vector<1x256xf32>, i32 -> vector<1x256xf32>
    %cst_155 = arith.constant 0.000000e+00 : f32
    %494 = vector.broadcast %cst_155 : f32 to vector<1x256xf32>
    %495 = arith.select %18, %493, %494 : vector<1x256xi1>, vector<1x256xf32>
    %c3_i32_156 = arith.constant 3 : i32
    %496 = tpu.dynamic_rotate %495 by %c3_i32_156 dim 1 : vector<1x256xf32>, i32 -> vector<1x256xf32>
    %c49 = arith.constant 49 : index
    %497 = memref.load %arg1[%c49] : memref<98xf32, #tpu.memory_space<smem>>
    %cst_157 = arith.constant 0.000000e+00 : f32
    %498 = vector.broadcast %cst_157 : f32 to vector<1x256xf32>
    %499 = arith.select %81, %496, %498 : vector<1x256xi1>, vector<1x256xf32>
    %500 = vector.broadcast %497 : f32 to vector<1x256xf32>
    %501 = arith.mulf %500, %499 : vector<1x256xf32>
    %502 = arith.addf %492, %501 : vector<1x256xf32>
    %c2_i32_158 = arith.constant 2 : i32
    %503 = tpu.dynamic_rotate %495 by %c2_i32_158 dim 1 : vector<1x256xf32>, i32 -> vector<1x256xf32>
    %c50 = arith.constant 50 : index
    %504 = memref.load %arg1[%c50] : memref<98xf32, #tpu.memory_space<smem>>
    %cst_159 = arith.constant 0.000000e+00 : f32
    %505 = vector.broadcast %cst_159 : f32 to vector<1x256xf32>
    %506 = arith.select %90, %503, %505 : vector<1x256xi1>, vector<1x256xf32>
    %507 = vector.broadcast %504 : f32 to vector<1x256xf32>
    %508 = arith.mulf %507, %506 : vector<1x256xf32>
    %509 = arith.addf %502, %508 : vector<1x256xf32>
    %c1_i32_160 = arith.constant 1 : i32
    %510 = tpu.dynamic_rotate %495 by %c1_i32_160 dim 1 : vector<1x256xf32>, i32 -> vector<1x256xf32>
    %c51 = arith.constant 51 : index
    %511 = memref.load %arg1[%c51] : memref<98xf32, #tpu.memory_space<smem>>
    %cst_161 = arith.constant 0.000000e+00 : f32
    %512 = vector.broadcast %cst_161 : f32 to vector<1x256xf32>
    %513 = arith.select %99, %510, %512 : vector<1x256xi1>, vector<1x256xf32>
    %514 = vector.broadcast %511 : f32 to vector<1x256xf32>
    %515 = arith.mulf %514, %513 : vector<1x256xf32>
    %516 = arith.addf %509, %515 : vector<1x256xf32>
    %c52 = arith.constant 52 : index
    %517 = memref.load %arg1[%c52] : memref<98xf32, #tpu.memory_space<smem>>
    %cst_162 = arith.constant 0.000000e+00 : f32
    %518 = vector.broadcast %cst_162 : f32 to vector<1x256xf32>
    %519 = arith.select %108, %495, %518 : vector<1x256xi1>, vector<1x256xf32>
    %520 = vector.broadcast %517 : f32 to vector<1x256xf32>
    %521 = arith.mulf %520, %519 : vector<1x256xf32>
    %522 = arith.addf %516, %521 : vector<1x256xf32>
    %c255_i32_163 = arith.constant 255 : i32
    %523 = tpu.dynamic_rotate %495 by %c255_i32_163 dim 1 : vector<1x256xf32>, i32 -> vector<1x256xf32>
    %c53 = arith.constant 53 : index
    %524 = memref.load %arg1[%c53] : memref<98xf32, #tpu.memory_space<smem>>
    %cst_164 = arith.constant 0.000000e+00 : f32
    %525 = vector.broadcast %cst_164 : f32 to vector<1x256xf32>
    %526 = arith.select %117, %523, %525 : vector<1x256xi1>, vector<1x256xf32>
    %527 = vector.broadcast %524 : f32 to vector<1x256xf32>
    %528 = arith.mulf %527, %526 : vector<1x256xf32>
    %529 = arith.addf %522, %528 : vector<1x256xf32>
    %c254_i32_165 = arith.constant 254 : i32
    %530 = tpu.dynamic_rotate %495 by %c254_i32_165 dim 1 : vector<1x256xf32>, i32 -> vector<1x256xf32>
    %c54 = arith.constant 54 : index
    %531 = memref.load %arg1[%c54] : memref<98xf32, #tpu.memory_space<smem>>
    %cst_166 = arith.constant 0.000000e+00 : f32
    %532 = vector.broadcast %cst_166 : f32 to vector<1x256xf32>
    %533 = arith.select %126, %530, %532 : vector<1x256xi1>, vector<1x256xf32>
    %534 = vector.broadcast %531 : f32 to vector<1x256xf32>
    %535 = arith.mulf %534, %533 : vector<1x256xf32>
    %536 = arith.addf %529, %535 : vector<1x256xf32>
    %c253_i32_167 = arith.constant 253 : i32
    %537 = tpu.dynamic_rotate %495 by %c253_i32_167 dim 1 : vector<1x256xf32>, i32 -> vector<1x256xf32>
    %c55 = arith.constant 55 : index
    %538 = memref.load %arg1[%c55] : memref<98xf32, #tpu.memory_space<smem>>
    %cst_168 = arith.constant 0.000000e+00 : f32
    %539 = vector.broadcast %cst_168 : f32 to vector<1x256xf32>
    %540 = arith.select %135, %537, %539 : vector<1x256xi1>, vector<1x256xf32>
    %541 = vector.broadcast %538 : f32 to vector<1x256xf32>
    %542 = arith.mulf %541, %540 : vector<1x256xf32>
    %543 = arith.addf %536, %542 : vector<1x256xf32>
    %c32_i32_169 = arith.constant 32 : i32
    %544 = tpu.dynamic_rotate %7 by %c32_i32_169 dim 1 : vector<1x256xf32>, i32 -> vector<1x256xf32>
    %cst_170 = arith.constant 0.000000e+00 : f32
    %545 = vector.broadcast %cst_170 : f32 to vector<1x256xf32>
    %546 = arith.select %27, %544, %545 : vector<1x256xi1>, vector<1x256xf32>
    %c3_i32_171 = arith.constant 3 : i32
    %547 = tpu.dynamic_rotate %546 by %c3_i32_171 dim 1 : vector<1x256xf32>, i32 -> vector<1x256xf32>
    %c56 = arith.constant 56 : index
    %548 = memref.load %arg1[%c56] : memref<98xf32, #tpu.memory_space<smem>>
    %cst_172 = arith.constant 0.000000e+00 : f32
    %549 = vector.broadcast %cst_172 : f32 to vector<1x256xf32>
    %550 = arith.select %81, %547, %549 : vector<1x256xi1>, vector<1x256xf32>
    %551 = vector.broadcast %548 : f32 to vector<1x256xf32>
    %552 = arith.mulf %551, %550 : vector<1x256xf32>
    %553 = arith.addf %543, %552 : vector<1x256xf32>
    %c2_i32_173 = arith.constant 2 : i32
    %554 = tpu.dynamic_rotate %546 by %c2_i32_173 dim 1 : vector<1x256xf32>, i32 -> vector<1x256xf32>
    %c57 = arith.constant 57 : index
    %555 = memref.load %arg1[%c57] : memref<98xf32, #tpu.memory_space<smem>>
    %cst_174 = arith.constant 0.000000e+00 : f32
    %556 = vector.broadcast %cst_174 : f32 to vector<1x256xf32>
    %557 = arith.select %90, %554, %556 : vector<1x256xi1>, vector<1x256xf32>
    %558 = vector.broadcast %555 : f32 to vector<1x256xf32>
    %559 = arith.mulf %558, %557 : vector<1x256xf32>
    %560 = arith.addf %553, %559 : vector<1x256xf32>
    %c1_i32_175 = arith.constant 1 : i32
    %561 = tpu.dynamic_rotate %546 by %c1_i32_175 dim 1 : vector<1x256xf32>, i32 -> vector<1x256xf32>
    %c58 = arith.constant 58 : index
    %562 = memref.load %arg1[%c58] : memref<98xf32, #tpu.memory_space<smem>>
    %cst_176 = arith.constant 0.000000e+00 : f32
    %563 = vector.broadcast %cst_176 : f32 to vector<1x256xf32>
    %564 = arith.select %99, %561, %563 : vector<1x256xi1>, vector<1x256xf32>
    %565 = vector.broadcast %562 : f32 to vector<1x256xf32>
    %566 = arith.mulf %565, %564 : vector<1x256xf32>
    %567 = arith.addf %560, %566 : vector<1x256xf32>
    %c59 = arith.constant 59 : index
    %568 = memref.load %arg1[%c59] : memref<98xf32, #tpu.memory_space<smem>>
    %cst_177 = arith.constant 0.000000e+00 : f32
    %569 = vector.broadcast %cst_177 : f32 to vector<1x256xf32>
    %570 = arith.select %108, %546, %569 : vector<1x256xi1>, vector<1x256xf32>
    %571 = vector.broadcast %568 : f32 to vector<1x256xf32>
    %572 = arith.mulf %571, %570 : vector<1x256xf32>
    %573 = arith.addf %567, %572 : vector<1x256xf32>
    %c255_i32_178 = arith.constant 255 : i32
    %574 = tpu.dynamic_rotate %546 by %c255_i32_178 dim 1 : vector<1x256xf32>, i32 -> vector<1x256xf32>
    %c60 = arith.constant 60 : index
    %575 = memref.load %arg1[%c60] : memref<98xf32, #tpu.memory_space<smem>>
    %cst_179 = arith.constant 0.000000e+00 : f32
    %576 = vector.broadcast %cst_179 : f32 to vector<1x256xf32>
    %577 = arith.select %117, %574, %576 : vector<1x256xi1>, vector<1x256xf32>
    %578 = vector.broadcast %575 : f32 to vector<1x256xf32>
    %579 = arith.mulf %578, %577 : vector<1x256xf32>
    %580 = arith.addf %573, %579 : vector<1x256xf32>
    %c254_i32_180 = arith.constant 254 : i32
    %581 = tpu.dynamic_rotate %546 by %c254_i32_180 dim 1 : vector<1x256xf32>, i32 -> vector<1x256xf32>
    %c61 = arith.constant 61 : index
    %582 = memref.load %arg1[%c61] : memref<98xf32, #tpu.memory_space<smem>>
    %cst_181 = arith.constant 0.000000e+00 : f32
    %583 = vector.broadcast %cst_181 : f32 to vector<1x256xf32>
    %584 = arith.select %126, %581, %583 : vector<1x256xi1>, vector<1x256xf32>
    %585 = vector.broadcast %582 : f32 to vector<1x256xf32>
    %586 = arith.mulf %585, %584 : vector<1x256xf32>
    %587 = arith.addf %580, %586 : vector<1x256xf32>
    %c253_i32_182 = arith.constant 253 : i32
    %588 = tpu.dynamic_rotate %546 by %c253_i32_182 dim 1 : vector<1x256xf32>, i32 -> vector<1x256xf32>
    %c62 = arith.constant 62 : index
    %589 = memref.load %arg1[%c62] : memref<98xf32, #tpu.memory_space<smem>>
    %cst_183 = arith.constant 0.000000e+00 : f32
    %590 = vector.broadcast %cst_183 : f32 to vector<1x256xf32>
    %591 = arith.select %135, %588, %590 : vector<1x256xi1>, vector<1x256xf32>
    %592 = vector.broadcast %589 : f32 to vector<1x256xf32>
    %593 = arith.mulf %592, %591 : vector<1x256xf32>
    %594 = arith.addf %587, %593 : vector<1x256xf32>
    %c16_i32_184 = arith.constant 16 : i32
    %595 = tpu.dynamic_rotate %7 by %c16_i32_184 dim 1 : vector<1x256xf32>, i32 -> vector<1x256xf32>
    %cst_185 = arith.constant 0.000000e+00 : f32
    %596 = vector.broadcast %cst_185 : f32 to vector<1x256xf32>
    %597 = arith.select %36, %595, %596 : vector<1x256xi1>, vector<1x256xf32>
    %c3_i32_186 = arith.constant 3 : i32
    %598 = tpu.dynamic_rotate %597 by %c3_i32_186 dim 1 : vector<1x256xf32>, i32 -> vector<1x256xf32>
    %c63 = arith.constant 63 : index
    %599 = memref.load %arg1[%c63] : memref<98xf32, #tpu.memory_space<smem>>
    %cst_187 = arith.constant 0.000000e+00 : f32
    %600 = vector.broadcast %cst_187 : f32 to vector<1x256xf32>
    %601 = arith.select %81, %598, %600 : vector<1x256xi1>, vector<1x256xf32>
    %602 = vector.broadcast %599 : f32 to vector<1x256xf32>
    %603 = arith.mulf %602, %601 : vector<1x256xf32>
    %604 = arith.addf %594, %603 : vector<1x256xf32>
    %c2_i32_188 = arith.constant 2 : i32
    %605 = tpu.dynamic_rotate %597 by %c2_i32_188 dim 1 : vector<1x256xf32>, i32 -> vector<1x256xf32>
    %c64 = arith.constant 64 : index
    %606 = memref.load %arg1[%c64] : memref<98xf32, #tpu.memory_space<smem>>
    %cst_189 = arith.constant 0.000000e+00 : f32
    %607 = vector.broadcast %cst_189 : f32 to vector<1x256xf32>
    %608 = arith.select %90, %605, %607 : vector<1x256xi1>, vector<1x256xf32>
    %609 = vector.broadcast %606 : f32 to vector<1x256xf32>
    %610 = arith.mulf %609, %608 : vector<1x256xf32>
    %611 = arith.addf %604, %610 : vector<1x256xf32>
    %c1_i32_190 = arith.constant 1 : i32
    %612 = tpu.dynamic_rotate %597 by %c1_i32_190 dim 1 : vector<1x256xf32>, i32 -> vector<1x256xf32>
    %c65 = arith.constant 65 : index
    %613 = memref.load %arg1[%c65] : memref<98xf32, #tpu.memory_space<smem>>
    %cst_191 = arith.constant 0.000000e+00 : f32
    %614 = vector.broadcast %cst_191 : f32 to vector<1x256xf32>
    %615 = arith.select %99, %612, %614 : vector<1x256xi1>, vector<1x256xf32>
    %616 = vector.broadcast %613 : f32 to vector<1x256xf32>
    %617 = arith.mulf %616, %615 : vector<1x256xf32>
    %618 = arith.addf %611, %617 : vector<1x256xf32>
    %c66 = arith.constant 66 : index
    %619 = memref.load %arg1[%c66] : memref<98xf32, #tpu.memory_space<smem>>
    %cst_192 = arith.constant 0.000000e+00 : f32
    %620 = vector.broadcast %cst_192 : f32 to vector<1x256xf32>
    %621 = arith.select %108, %597, %620 : vector<1x256xi1>, vector<1x256xf32>
    %622 = vector.broadcast %619 : f32 to vector<1x256xf32>
    %623 = arith.mulf %622, %621 : vector<1x256xf32>
    %624 = arith.addf %618, %623 : vector<1x256xf32>
    %c255_i32_193 = arith.constant 255 : i32
    %625 = tpu.dynamic_rotate %597 by %c255_i32_193 dim 1 : vector<1x256xf32>, i32 -> vector<1x256xf32>
    %c67 = arith.constant 67 : index
    %626 = memref.load %arg1[%c67] : memref<98xf32, #tpu.memory_space<smem>>
    %cst_194 = arith.constant 0.000000e+00 : f32
    %627 = vector.broadcast %cst_194 : f32 to vector<1x256xf32>
    %628 = arith.select %117, %625, %627 : vector<1x256xi1>, vector<1x256xf32>
    %629 = vector.broadcast %626 : f32 to vector<1x256xf32>
    %630 = arith.mulf %629, %628 : vector<1x256xf32>
    %631 = arith.addf %624, %630 : vector<1x256xf32>
    %c254_i32_195 = arith.constant 254 : i32
    %632 = tpu.dynamic_rotate %597 by %c254_i32_195 dim 1 : vector<1x256xf32>, i32 -> vector<1x256xf32>
    %c68 = arith.constant 68 : index
    %633 = memref.load %arg1[%c68] : memref<98xf32, #tpu.memory_space<smem>>
    %cst_196 = arith.constant 0.000000e+00 : f32
    %634 = vector.broadcast %cst_196 : f32 to vector<1x256xf32>
    %635 = arith.select %126, %632, %634 : vector<1x256xi1>, vector<1x256xf32>
    %636 = vector.broadcast %633 : f32 to vector<1x256xf32>
    %637 = arith.mulf %636, %635 : vector<1x256xf32>
    %638 = arith.addf %631, %637 : vector<1x256xf32>
    %c253_i32_197 = arith.constant 253 : i32
    %639 = tpu.dynamic_rotate %597 by %c253_i32_197 dim 1 : vector<1x256xf32>, i32 -> vector<1x256xf32>
    %c69 = arith.constant 69 : index
    %640 = memref.load %arg1[%c69] : memref<98xf32, #tpu.memory_space<smem>>
    %cst_198 = arith.constant 0.000000e+00 : f32
    %641 = vector.broadcast %cst_198 : f32 to vector<1x256xf32>
    %642 = arith.select %135, %639, %641 : vector<1x256xi1>, vector<1x256xf32>
    %643 = vector.broadcast %640 : f32 to vector<1x256xf32>
    %644 = arith.mulf %643, %642 : vector<1x256xf32>
    %645 = arith.addf %638, %644 : vector<1x256xf32>
    %cst_199 = arith.constant 0.000000e+00 : f32
    %646 = vector.broadcast %cst_199 : f32 to vector<1x256xf32>
    %647 = arith.select %45, %7, %646 : vector<1x256xi1>, vector<1x256xf32>
    %c3_i32_200 = arith.constant 3 : i32
    %648 = tpu.dynamic_rotate %647 by %c3_i32_200 dim 1 : vector<1x256xf32>, i32 -> vector<1x256xf32>
    %c70 = arith.constant 70 : index
    %649 = memref.load %arg1[%c70] : memref<98xf32, #tpu.memory_space<smem>>
    %cst_201 = arith.constant 0.000000e+00 : f32
    %650 = vector.broadcast %cst_201 : f32 to vector<1x256xf32>
    %651 = arith.select %81, %648, %650 : vector<1x256xi1>, vector<1x256xf32>
    %652 = vector.broadcast %649 : f32 to vector<1x256xf32>
    %653 = arith.mulf %652, %651 : vector<1x256xf32>
    %654 = arith.addf %645, %653 : vector<1x256xf32>
    %c2_i32_202 = arith.constant 2 : i32
    %655 = tpu.dynamic_rotate %647 by %c2_i32_202 dim 1 : vector<1x256xf32>, i32 -> vector<1x256xf32>
    %c71 = arith.constant 71 : index
    %656 = memref.load %arg1[%c71] : memref<98xf32, #tpu.memory_space<smem>>
    %cst_203 = arith.constant 0.000000e+00 : f32
    %657 = vector.broadcast %cst_203 : f32 to vector<1x256xf32>
    %658 = arith.select %90, %655, %657 : vector<1x256xi1>, vector<1x256xf32>
    %659 = vector.broadcast %656 : f32 to vector<1x256xf32>
    %660 = arith.mulf %659, %658 : vector<1x256xf32>
    %661 = arith.addf %654, %660 : vector<1x256xf32>
    %c1_i32_204 = arith.constant 1 : i32
    %662 = tpu.dynamic_rotate %647 by %c1_i32_204 dim 1 : vector<1x256xf32>, i32 -> vector<1x256xf32>
    %c72 = arith.constant 72 : index
    %663 = memref.load %arg1[%c72] : memref<98xf32, #tpu.memory_space<smem>>
    %cst_205 = arith.constant 0.000000e+00 : f32
    %664 = vector.broadcast %cst_205 : f32 to vector<1x256xf32>
    %665 = arith.select %99, %662, %664 : vector<1x256xi1>, vector<1x256xf32>
    %666 = vector.broadcast %663 : f32 to vector<1x256xf32>
    %667 = arith.mulf %666, %665 : vector<1x256xf32>
    %668 = arith.addf %661, %667 : vector<1x256xf32>
    %c73 = arith.constant 73 : index
    %669 = memref.load %arg1[%c73] : memref<98xf32, #tpu.memory_space<smem>>
    %cst_206 = arith.constant 0.000000e+00 : f32
    %670 = vector.broadcast %cst_206 : f32 to vector<1x256xf32>
    %671 = arith.select %108, %647, %670 : vector<1x256xi1>, vector<1x256xf32>
    %672 = vector.broadcast %669 : f32 to vector<1x256xf32>
    %673 = arith.mulf %672, %671 : vector<1x256xf32>
    %674 = arith.addf %668, %673 : vector<1x256xf32>
    %c255_i32_207 = arith.constant 255 : i32
    %675 = tpu.dynamic_rotate %647 by %c255_i32_207 dim 1 : vector<1x256xf32>, i32 -> vector<1x256xf32>
    %c74 = arith.constant 74 : index
    %676 = memref.load %arg1[%c74] : memref<98xf32, #tpu.memory_space<smem>>
    %cst_208 = arith.constant 0.000000e+00 : f32
    %677 = vector.broadcast %cst_208 : f32 to vector<1x256xf32>
    %678 = arith.select %117, %675, %677 : vector<1x256xi1>, vector<1x256xf32>
    %679 = vector.broadcast %676 : f32 to vector<1x256xf32>
    %680 = arith.mulf %679, %678 : vector<1x256xf32>
    %681 = arith.addf %674, %680 : vector<1x256xf32>
    %c254_i32_209 = arith.constant 254 : i32
    %682 = tpu.dynamic_rotate %647 by %c254_i32_209 dim 1 : vector<1x256xf32>, i32 -> vector<1x256xf32>
    %c75 = arith.constant 75 : index
    %683 = memref.load %arg1[%c75] : memref<98xf32, #tpu.memory_space<smem>>
    %cst_210 = arith.constant 0.000000e+00 : f32
    %684 = vector.broadcast %cst_210 : f32 to vector<1x256xf32>
    %685 = arith.select %126, %682, %684 : vector<1x256xi1>, vector<1x256xf32>
    %686 = vector.broadcast %683 : f32 to vector<1x256xf32>
    %687 = arith.mulf %686, %685 : vector<1x256xf32>
    %688 = arith.addf %681, %687 : vector<1x256xf32>
    %c253_i32_211 = arith.constant 253 : i32
    %689 = tpu.dynamic_rotate %647 by %c253_i32_211 dim 1 : vector<1x256xf32>, i32 -> vector<1x256xf32>
    %c76 = arith.constant 76 : index
    %690 = memref.load %arg1[%c76] : memref<98xf32, #tpu.memory_space<smem>>
    %cst_212 = arith.constant 0.000000e+00 : f32
    %691 = vector.broadcast %cst_212 : f32 to vector<1x256xf32>
    %692 = arith.select %135, %689, %691 : vector<1x256xi1>, vector<1x256xf32>
    %693 = vector.broadcast %690 : f32 to vector<1x256xf32>
    %694 = arith.mulf %693, %692 : vector<1x256xf32>
    %695 = arith.addf %688, %694 : vector<1x256xf32>
    %c240_i32_213 = arith.constant 240 : i32
    %696 = tpu.dynamic_rotate %7 by %c240_i32_213 dim 1 : vector<1x256xf32>, i32 -> vector<1x256xf32>
    %cst_214 = arith.constant 0.000000e+00 : f32
    %697 = vector.broadcast %cst_214 : f32 to vector<1x256xf32>
    %698 = arith.select %54, %696, %697 : vector<1x256xi1>, vector<1x256xf32>
    %c3_i32_215 = arith.constant 3 : i32
    %699 = tpu.dynamic_rotate %698 by %c3_i32_215 dim 1 : vector<1x256xf32>, i32 -> vector<1x256xf32>
    %c77 = arith.constant 77 : index
    %700 = memref.load %arg1[%c77] : memref<98xf32, #tpu.memory_space<smem>>
    %cst_216 = arith.constant 0.000000e+00 : f32
    %701 = vector.broadcast %cst_216 : f32 to vector<1x256xf32>
    %702 = arith.select %81, %699, %701 : vector<1x256xi1>, vector<1x256xf32>
    %703 = vector.broadcast %700 : f32 to vector<1x256xf32>
    %704 = arith.mulf %703, %702 : vector<1x256xf32>
    %705 = arith.addf %695, %704 : vector<1x256xf32>
    %c2_i32_217 = arith.constant 2 : i32
    %706 = tpu.dynamic_rotate %698 by %c2_i32_217 dim 1 : vector<1x256xf32>, i32 -> vector<1x256xf32>
    %c78 = arith.constant 78 : index
    %707 = memref.load %arg1[%c78] : memref<98xf32, #tpu.memory_space<smem>>
    %cst_218 = arith.constant 0.000000e+00 : f32
    %708 = vector.broadcast %cst_218 : f32 to vector<1x256xf32>
    %709 = arith.select %90, %706, %708 : vector<1x256xi1>, vector<1x256xf32>
    %710 = vector.broadcast %707 : f32 to vector<1x256xf32>
    %711 = arith.mulf %710, %709 : vector<1x256xf32>
    %712 = arith.addf %705, %711 : vector<1x256xf32>
    %c1_i32_219 = arith.constant 1 : i32
    %713 = tpu.dynamic_rotate %698 by %c1_i32_219 dim 1 : vector<1x256xf32>, i32 -> vector<1x256xf32>
    %c79 = arith.constant 79 : index
    %714 = memref.load %arg1[%c79] : memref<98xf32, #tpu.memory_space<smem>>
    %cst_220 = arith.constant 0.000000e+00 : f32
    %715 = vector.broadcast %cst_220 : f32 to vector<1x256xf32>
    %716 = arith.select %99, %713, %715 : vector<1x256xi1>, vector<1x256xf32>
    %717 = vector.broadcast %714 : f32 to vector<1x256xf32>
    %718 = arith.mulf %717, %716 : vector<1x256xf32>
    %719 = arith.addf %712, %718 : vector<1x256xf32>
    %c80 = arith.constant 80 : index
    %720 = memref.load %arg1[%c80] : memref<98xf32, #tpu.memory_space<smem>>
    %cst_221 = arith.constant 0.000000e+00 : f32
    %721 = vector.broadcast %cst_221 : f32 to vector<1x256xf32>
    %722 = arith.select %108, %698, %721 : vector<1x256xi1>, vector<1x256xf32>
    %723 = vector.broadcast %720 : f32 to vector<1x256xf32>
    %724 = arith.mulf %723, %722 : vector<1x256xf32>
    %725 = arith.addf %719, %724 : vector<1x256xf32>
    %c255_i32_222 = arith.constant 255 : i32
    %726 = tpu.dynamic_rotate %698 by %c255_i32_222 dim 1 : vector<1x256xf32>, i32 -> vector<1x256xf32>
    %c81 = arith.constant 81 : index
    %727 = memref.load %arg1[%c81] : memref<98xf32, #tpu.memory_space<smem>>
    %cst_223 = arith.constant 0.000000e+00 : f32
    %728 = vector.broadcast %cst_223 : f32 to vector<1x256xf32>
    %729 = arith.select %117, %726, %728 : vector<1x256xi1>, vector<1x256xf32>
    %730 = vector.broadcast %727 : f32 to vector<1x256xf32>
    %731 = arith.mulf %730, %729 : vector<1x256xf32>
    %732 = arith.addf %725, %731 : vector<1x256xf32>
    %c254_i32_224 = arith.constant 254 : i32
    %733 = tpu.dynamic_rotate %698 by %c254_i32_224 dim 1 : vector<1x256xf32>, i32 -> vector<1x256xf32>
    %c82 = arith.constant 82 : index
    %734 = memref.load %arg1[%c82] : memref<98xf32, #tpu.memory_space<smem>>
    %cst_225 = arith.constant 0.000000e+00 : f32
    %735 = vector.broadcast %cst_225 : f32 to vector<1x256xf32>
    %736 = arith.select %126, %733, %735 : vector<1x256xi1>, vector<1x256xf32>
    %737 = vector.broadcast %734 : f32 to vector<1x256xf32>
    %738 = arith.mulf %737, %736 : vector<1x256xf32>
    %739 = arith.addf %732, %738 : vector<1x256xf32>
    %c253_i32_226 = arith.constant 253 : i32
    %740 = tpu.dynamic_rotate %698 by %c253_i32_226 dim 1 : vector<1x256xf32>, i32 -> vector<1x256xf32>
    %c83 = arith.constant 83 : index
    %741 = memref.load %arg1[%c83] : memref<98xf32, #tpu.memory_space<smem>>
    %cst_227 = arith.constant 0.000000e+00 : f32
    %742 = vector.broadcast %cst_227 : f32 to vector<1x256xf32>
    %743 = arith.select %135, %740, %742 : vector<1x256xi1>, vector<1x256xf32>
    %744 = vector.broadcast %741 : f32 to vector<1x256xf32>
    %745 = arith.mulf %744, %743 : vector<1x256xf32>
    %746 = arith.addf %739, %745 : vector<1x256xf32>
    %c224_i32_228 = arith.constant 224 : i32
    %747 = tpu.dynamic_rotate %7 by %c224_i32_228 dim 1 : vector<1x256xf32>, i32 -> vector<1x256xf32>
    %cst_229 = arith.constant 0.000000e+00 : f32
    %748 = vector.broadcast %cst_229 : f32 to vector<1x256xf32>
    %749 = arith.select %63, %747, %748 : vector<1x256xi1>, vector<1x256xf32>
    %c3_i32_230 = arith.constant 3 : i32
    %750 = tpu.dynamic_rotate %749 by %c3_i32_230 dim 1 : vector<1x256xf32>, i32 -> vector<1x256xf32>
    %c84 = arith.constant 84 : index
    %751 = memref.load %arg1[%c84] : memref<98xf32, #tpu.memory_space<smem>>
    %cst_231 = arith.constant 0.000000e+00 : f32
    %752 = vector.broadcast %cst_231 : f32 to vector<1x256xf32>
    %753 = arith.select %81, %750, %752 : vector<1x256xi1>, vector<1x256xf32>
    %754 = vector.broadcast %751 : f32 to vector<1x256xf32>
    %755 = arith.mulf %754, %753 : vector<1x256xf32>
    %756 = arith.addf %746, %755 : vector<1x256xf32>
    %c2_i32_232 = arith.constant 2 : i32
    %757 = tpu.dynamic_rotate %749 by %c2_i32_232 dim 1 : vector<1x256xf32>, i32 -> vector<1x256xf32>
    %c85 = arith.constant 85 : index
    %758 = memref.load %arg1[%c85] : memref<98xf32, #tpu.memory_space<smem>>
    %cst_233 = arith.constant 0.000000e+00 : f32
    %759 = vector.broadcast %cst_233 : f32 to vector<1x256xf32>
    %760 = arith.select %90, %757, %759 : vector<1x256xi1>, vector<1x256xf32>
    %761 = vector.broadcast %758 : f32 to vector<1x256xf32>
    %762 = arith.mulf %761, %760 : vector<1x256xf32>
    %763 = arith.addf %756, %762 : vector<1x256xf32>
    %c1_i32_234 = arith.constant 1 : i32
    %764 = tpu.dynamic_rotate %749 by %c1_i32_234 dim 1 : vector<1x256xf32>, i32 -> vector<1x256xf32>
    %c86 = arith.constant 86 : index
    %765 = memref.load %arg1[%c86] : memref<98xf32, #tpu.memory_space<smem>>
    %cst_235 = arith.constant 0.000000e+00 : f32
    %766 = vector.broadcast %cst_235 : f32 to vector<1x256xf32>
    %767 = arith.select %99, %764, %766 : vector<1x256xi1>, vector<1x256xf32>
    %768 = vector.broadcast %765 : f32 to vector<1x256xf32>
    %769 = arith.mulf %768, %767 : vector<1x256xf32>
    %770 = arith.addf %763, %769 : vector<1x256xf32>
    %c87 = arith.constant 87 : index
    %771 = memref.load %arg1[%c87] : memref<98xf32, #tpu.memory_space<smem>>
    %cst_236 = arith.constant 0.000000e+00 : f32
    %772 = vector.broadcast %cst_236 : f32 to vector<1x256xf32>
    %773 = arith.select %108, %749, %772 : vector<1x256xi1>, vector<1x256xf32>
    %774 = vector.broadcast %771 : f32 to vector<1x256xf32>
    %775 = arith.mulf %774, %773 : vector<1x256xf32>
    %776 = arith.addf %770, %775 : vector<1x256xf32>
    %c255_i32_237 = arith.constant 255 : i32
    %777 = tpu.dynamic_rotate %749 by %c255_i32_237 dim 1 : vector<1x256xf32>, i32 -> vector<1x256xf32>
    %c88 = arith.constant 88 : index
    %778 = memref.load %arg1[%c88] : memref<98xf32, #tpu.memory_space<smem>>
    %cst_238 = arith.constant 0.000000e+00 : f32
    %779 = vector.broadcast %cst_238 : f32 to vector<1x256xf32>
    %780 = arith.select %117, %777, %779 : vector<1x256xi1>, vector<1x256xf32>
    %781 = vector.broadcast %778 : f32 to vector<1x256xf32>
    %782 = arith.mulf %781, %780 : vector<1x256xf32>
    %783 = arith.addf %776, %782 : vector<1x256xf32>
    %c254_i32_239 = arith.constant 254 : i32
    %784 = tpu.dynamic_rotate %749 by %c254_i32_239 dim 1 : vector<1x256xf32>, i32 -> vector<1x256xf32>
    %c89 = arith.constant 89 : index
    %785 = memref.load %arg1[%c89] : memref<98xf32, #tpu.memory_space<smem>>
    %cst_240 = arith.constant 0.000000e+00 : f32
    %786 = vector.broadcast %cst_240 : f32 to vector<1x256xf32>
    %787 = arith.select %126, %784, %786 : vector<1x256xi1>, vector<1x256xf32>
    %788 = vector.broadcast %785 : f32 to vector<1x256xf32>
    %789 = arith.mulf %788, %787 : vector<1x256xf32>
    %790 = arith.addf %783, %789 : vector<1x256xf32>
    %c253_i32_241 = arith.constant 253 : i32
    %791 = tpu.dynamic_rotate %749 by %c253_i32_241 dim 1 : vector<1x256xf32>, i32 -> vector<1x256xf32>
    %c90 = arith.constant 90 : index
    %792 = memref.load %arg1[%c90] : memref<98xf32, #tpu.memory_space<smem>>
    %cst_242 = arith.constant 0.000000e+00 : f32
    %793 = vector.broadcast %cst_242 : f32 to vector<1x256xf32>
    %794 = arith.select %135, %791, %793 : vector<1x256xi1>, vector<1x256xf32>
    %795 = vector.broadcast %792 : f32 to vector<1x256xf32>
    %796 = arith.mulf %795, %794 : vector<1x256xf32>
    %797 = arith.addf %790, %796 : vector<1x256xf32>
    %c208_i32_243 = arith.constant 208 : i32
    %798 = tpu.dynamic_rotate %7 by %c208_i32_243 dim 1 : vector<1x256xf32>, i32 -> vector<1x256xf32>
    %cst_244 = arith.constant 0.000000e+00 : f32
    %799 = vector.broadcast %cst_244 : f32 to vector<1x256xf32>
    %800 = arith.select %72, %798, %799 : vector<1x256xi1>, vector<1x256xf32>
    %c3_i32_245 = arith.constant 3 : i32
    %801 = tpu.dynamic_rotate %800 by %c3_i32_245 dim 1 : vector<1x256xf32>, i32 -> vector<1x256xf32>
    %c91 = arith.constant 91 : index
    %802 = memref.load %arg1[%c91] : memref<98xf32, #tpu.memory_space<smem>>
    %cst_246 = arith.constant 0.000000e+00 : f32
    %803 = vector.broadcast %cst_246 : f32 to vector<1x256xf32>
    %804 = arith.select %81, %801, %803 : vector<1x256xi1>, vector<1x256xf32>
    %805 = vector.broadcast %802 : f32 to vector<1x256xf32>
    %806 = arith.mulf %805, %804 : vector<1x256xf32>
    %807 = arith.addf %797, %806 : vector<1x256xf32>
    %c2_i32_247 = arith.constant 2 : i32
    %808 = tpu.dynamic_rotate %800 by %c2_i32_247 dim 1 : vector<1x256xf32>, i32 -> vector<1x256xf32>
    %c92 = arith.constant 92 : index
    %809 = memref.load %arg1[%c92] : memref<98xf32, #tpu.memory_space<smem>>
    %cst_248 = arith.constant 0.000000e+00 : f32
    %810 = vector.broadcast %cst_248 : f32 to vector<1x256xf32>
    %811 = arith.select %90, %808, %810 : vector<1x256xi1>, vector<1x256xf32>
    %812 = vector.broadcast %809 : f32 to vector<1x256xf32>
    %813 = arith.mulf %812, %811 : vector<1x256xf32>
    %814 = arith.addf %807, %813 : vector<1x256xf32>
    %c1_i32_249 = arith.constant 1 : i32
    %815 = tpu.dynamic_rotate %800 by %c1_i32_249 dim 1 : vector<1x256xf32>, i32 -> vector<1x256xf32>
    %c93 = arith.constant 93 : index
    %816 = memref.load %arg1[%c93] : memref<98xf32, #tpu.memory_space<smem>>
    %cst_250 = arith.constant 0.000000e+00 : f32
    %817 = vector.broadcast %cst_250 : f32 to vector<1x256xf32>
    %818 = arith.select %99, %815, %817 : vector<1x256xi1>, vector<1x256xf32>
    %819 = vector.broadcast %816 : f32 to vector<1x256xf32>
    %820 = arith.mulf %819, %818 : vector<1x256xf32>
    %821 = arith.addf %814, %820 : vector<1x256xf32>
    %c94 = arith.constant 94 : index
    %822 = memref.load %arg1[%c94] : memref<98xf32, #tpu.memory_space<smem>>
    %cst_251 = arith.constant 0.000000e+00 : f32
    %823 = vector.broadcast %cst_251 : f32 to vector<1x256xf32>
    %824 = arith.select %108, %800, %823 : vector<1x256xi1>, vector<1x256xf32>
    %825 = vector.broadcast %822 : f32 to vector<1x256xf32>
    %826 = arith.mulf %825, %824 : vector<1x256xf32>
    %827 = arith.addf %821, %826 : vector<1x256xf32>
    %c255_i32_252 = arith.constant 255 : i32
    %828 = tpu.dynamic_rotate %800 by %c255_i32_252 dim 1 : vector<1x256xf32>, i32 -> vector<1x256xf32>
    %c95 = arith.constant 95 : index
    %829 = memref.load %arg1[%c95] : memref<98xf32, #tpu.memory_space<smem>>
    %cst_253 = arith.constant 0.000000e+00 : f32
    %830 = vector.broadcast %cst_253 : f32 to vector<1x256xf32>
    %831 = arith.select %117, %828, %830 : vector<1x256xi1>, vector<1x256xf32>
    %832 = vector.broadcast %829 : f32 to vector<1x256xf32>
    %833 = arith.mulf %832, %831 : vector<1x256xf32>
    %834 = arith.addf %827, %833 : vector<1x256xf32>
    %c254_i32_254 = arith.constant 254 : i32
    %835 = tpu.dynamic_rotate %800 by %c254_i32_254 dim 1 : vector<1x256xf32>, i32 -> vector<1x256xf32>
    %c96 = arith.constant 96 : index
    %836 = memref.load %arg1[%c96] : memref<98xf32, #tpu.memory_space<smem>>
    %cst_255 = arith.constant 0.000000e+00 : f32
    %837 = vector.broadcast %cst_255 : f32 to vector<1x256xf32>
    %838 = arith.select %126, %835, %837 : vector<1x256xi1>, vector<1x256xf32>
    %839 = vector.broadcast %836 : f32 to vector<1x256xf32>
    %840 = arith.mulf %839, %838 : vector<1x256xf32>
    %841 = arith.addf %834, %840 : vector<1x256xf32>
    %c253_i32_256 = arith.constant 253 : i32
    %842 = tpu.dynamic_rotate %800 by %c253_i32_256 dim 1 : vector<1x256xf32>, i32 -> vector<1x256xf32>
    %c97 = arith.constant 97 : index
    %843 = memref.load %arg1[%c97] : memref<98xf32, #tpu.memory_space<smem>>
    %cst_257 = arith.constant 0.000000e+00 : f32
    %844 = vector.broadcast %cst_257 : f32 to vector<1x256xf32>
    %845 = arith.select %135, %842, %844 : vector<1x256xi1>, vector<1x256xf32>
    %846 = vector.broadcast %843 : f32 to vector<1x256xf32>
    %847 = arith.mulf %846, %845 : vector<1x256xf32>
    %848 = arith.addf %841, %847 : vector<1x256xf32>
    %849 = arith.negf %848 : vector<1x256xf32>
    %850 = math.exp %849 : vector<1x256xf32>
    %cst_258 = arith.constant 1.000000e+00 : f32
    %851 = vector.broadcast %cst_258 : f32 to vector<1x256xf32>
    %852 = arith.addf %851, %850 : vector<1x256xf32>
    %853 = arith.divf %851, %852 : vector<1x256xf32>
    %c0_259 = arith.constant 0 : index
    %c0_260 = arith.constant 0 : index
    %c0_261 = arith.constant 0 : index
    %854 = vector.load %arg3[%c0_259, %c0_260, %c0_261] : memref<1x4x256xf32, #tpu.memory_space<vmem>>, vector<1x4x256xf32>
    %855 = vector.shape_cast %854 : vector<1x4x256xf32> to vector<4x256xf32>
    %856 = vector.broadcast %853 : vector<1x256xf32> to vector<4x256xf32>
    %857 = arith.mulf %856, %855 : vector<4x256xf32>
    %c0_262 = arith.constant 0 : index
    %c0_263 = arith.constant 0 : index
    %c0_264 = arith.constant 0 : index
    %858 = vector.load %arg4[%c0_262, %c0_263, %c0_264] : memref<1x4x256xf32, #tpu.memory_space<vmem>>, vector<1x4x256xf32>
    %859 = vector.shape_cast %858 : vector<1x4x256xf32> to vector<4x256xf32>
    %860 = vector.shape_cast %857 : vector<4x256xf32> to vector<1x4x256xf32>
    tpu.vector_store %arg4[%c0_262, %c0_263, %c0_264], %860 {strides = array<i32>} : memref<1x4x256xf32, #tpu.memory_space<vmem>>, vector<1x4x256xf32>,
    return
  }
  func.func @transform_0(%arg0: i32) -> i32 {
    %c0_i32 = arith.constant 0 : i32
    %c0_i32_0 = arith.constant 0 : i32
    return %c0_i32 : i32
  }
  func.func @transform_1(%arg0: i32) -> (i32, i32) {
    %c0_i32 = arith.constant 0 : i32
    %c0_i32_0 = arith.constant 0 : i32
    %c0_i32_1 = arith.constant 0 : i32
    return %c0_i32, %c0_i32_0 : i32, i32
  }
  func.func @transform_2(%arg0: i32) -> (i32, i32, i32) {
    %c0_i32 = arith.constant 0 : i32
    %c0_i32_0 = arith.constant 0 : i32
    %c0_i32_1 = arith.constant 0 : i32
    return %arg0, %c0_i32, %c0_i32_0 : i32, i32, i32
  }
  func.func @transform_3(%arg0: i32) -> (i32, i32, i32) {
    %c0_i32 = arith.constant 0 : i32
    %c0_i32_0 = arith.constant 0 : i32
    %c0_i32_1 = arith.constant 0 : i32
    return %arg0, %c0_i32, %c0_i32_0 : i32, i32, i32
  }
}

</mosaic_0001>

<llo_original>
// kernel: tpu_custom_call.1
$region0: #{tpu_custom_call.1}
  #allocation0 [shape = 'u32[]', space=smem, size = 0x4, offset = 0x4, fixed_abs, tag = 'smem constant byte address 0x4 - core index']
  #allocation1 [shape = 'u32[144,128]{1,0:T(1,128)}', space=vmem, size = 0x12000, scoped, tag = 'internal scratch']
  %s0 = inlined_call_operand.hbm [shape: f32[98], index: 0, kind: input, shape index: {}]
  %s1 = inlined_call_operand.hbm [shape: s32[2,256], index: 1, kind: input, shape index: {}]
  %s2 = inlined_call_operand.hbm [shape: f32[2,4,256], index: 2, kind: input, shape index: {}]
  %s3 = inlined_call_operand.hbm [shape: f32[2,4,256], index: 3, kind: output, shape index: {}]
  %s4 = sld [smem:[#allocation0]]
  $region57: #{tpu_custom_call.1} parent=0
    _
  %s6 = ssub.s32 1, %s4
  %s7 = scalar_select 0, %s6, %s4
  $region1: #{tpu_custom_call.1} parent=0
    #allocation2 [shape = 'u8[512]{0}', space=smem, size = 0x200, scoped, tag = 'input window, operand 0, single buffered']
    #allocation3 [shape = 's32[2]{0}', space=sflag, size = 0x8, scoped, tag = 'scoped memory for tpu_custom_call.1']
    #allocation4 [shape = 's32[2]{0}', space=sflag, size = 0x8, scoped, tag = 'scoped memory for tpu_custom_call.1']
    #allocation5 [shape = 's32[2]{0}', space=sflag, size = 0x8, scoped, tag = 'scoped memory for tpu_custom_call.1']
    #allocation6 [shape = 'u8[2048]{0}', space=vmem, size = 0x800, scoped, tag = 'input window, operand 1, single buffered']
    #allocation7 [shape = 'u8[8192]{0}', space=vmem, size = 0x2000, scoped, tag = 'input window, operand 2']
    #allocation8 [shape = 's32[2]{0}', space=sflag, size = 0x8, scoped, tag = 'scoped memory for tpu_custom_call.1']
    #allocation9 [shape = 'u8[8192]{0}', space=vmem, size = 0x2000, scoped, tag = 'output window, operand 0']
    %8 = vsyncpa [#allocation5], 0
    %9 = vsyncpa [#allocation3], 0
    %10 = vsyncpa [#allocation8], 0
    %s11 = scalar_lea.sflag [#allocation8], 1
    %12 = vsyncpa %s11, 0
    %13 = vsyncpa [#allocation4], 0
    %s14 = scalar_lea.sflag [#allocation4], 1
    %15 = vsyncpa %s14, 0
    loop: start=0, step=1, limit=4
    $region2: #{tpu_custom_call.1} parent=1 // loop_pre_header
      _
    $region3: #{tpu_custom_call.1} parent=1 // loop_header
      %s17 = sphi 0, %s21
      %p18 = scmp.ge.s32.totalorder %s17, 4
      %s25 = sphi 0, %s25
      %s27 = sphi 0, %s25
      %s28 = sphi 0, %s27
      %s42 = sphi 0, %s28
      %s46 = sphi 0, %s46
      %s48 = sphi 0, %s46
      %s49 = sphi 0, %s48
      %s63 = sphi 0, %s49
      %s69 = sphi 0, %s71
      %s72 = sphi 0, %s69
      %s73 = sphi 0, %s72
      %s89 = sphi 0, %s73
      %s95 = sphi 0, %s97
      %s98 = sphi 0, %s95
      %s99 = sphi 0, %s98
      %s115 = sphi 0, %s99
    $region4: #{tpu_custom_call.1} parent=1 // loop_header_branch
      %20 = sbr.rel (%p18) target = $region8
    $region5: #{tpu_custom_call.1} parent=1 // loop_body
      %s22 = ssub.s32 %s17, 1
      %s23 = ssub.s32 %s17, 2
      %s24 = sadd.s32 %s17, 1
      %s26 = sadd.s32 %s25, 1
      %p29 = scmp.eq.s32.totalorder %s17, 1
      %p30 = scmp.ne.s32.totalorder %s25, %s27
      %p31 = scmp.eq.s32.totalorder %s17, 0
      %p32 = por %p30, %p31
      %p33 = scmp.ne.s32.totalorder %s25, %s27
      %p34 = scmp.eq.s32.totalorder %s22, 1
      %p35 = por %p33, %p34
      %p36 = scmp.ne.s32.totalorder %s27, %s28
      %p37 = scmp.eq.s32.totalorder %s22, 0
      %p38 = por %p36, %p37
      %p39 = scmp.ne.s32.totalorder %s27, %s28
      %p40 = scmp.eq.s32.totalorder %s23, 1
      %p41 = por %p39, %p40
      %p43 = scmp.ne.s32.totalorder %s28, %s42
      %p44 = scmp.eq.s32.totalorder %s23, 0
      %p45 = por %p43, %p44
      %s47 = sadd.s32 %s46, 1
      %p50 = scmp.eq.s32.totalorder %s17, 1
      %p51 = scmp.ne.s32.totalorder %s46, %s48
      %p52 = scmp.eq.s32.totalorder %s17, 0
      %p53 = por %p51, %p52
      %p54 = scmp.ne.s32.totalorder %s46, %s48
      %p55 = scmp.eq.s32.totalorder %s22, 1
      %p56 = por %p54, %p55
      %p57 = scmp.ne.s32.totalorder %s48, %s49
      %p58 = scmp.eq.s32.totalorder %s22, 0
      %p59 = por %p57, %p58
      %p60 = scmp.ne.s32.totalorder %s48, %s49
      %p61 = scmp.eq.s32.totalorder %s23, 1
      %p62 = por %p60, %p61
      %p64 = scmp.ne.s32.totalorder %s49, %s63
      %p65 = scmp.eq.s32.totalorder %s23, 0
      %p66 = por %p64, %p65
      %s67 = ssub.s32 %s17, %s24
      %p68 = scmp.eq.s32.totalorder %s67, 0
      %s70 = sadd.s32 %s69, 1
      %s71 = scalar_select %p68, %s69, %s70
      %p74 = pneg %p68
      %p75 = scmp.eq.s32.totalorder %s17, 1
      %p76 = por %p74, %p75
      %p77 = scmp.ne.s32.totalorder %s69, %s72
      %p78 = scmp.eq.s32.totalorder %s17, 0
      %p79 = por %p77, %p78
      %p80 = scmp.ne.s32.totalorder %s69, %s72
      %p81 = scmp.eq.s32.totalorder %s22, 1
      %p82 = por %p80, %p81
      %p83 = scmp.ne.s32.totalorder %s72, %s73
      %p84 = scmp.eq.s32.totalorder %s22, 0
      %p85 = por %p83, %p84
      %p86 = scmp.ne.s32.totalorder %s72, %s73
      %p87 = scmp.eq.s32.totalorder %s23, 1
      %p88 = por %p86, %p87
      %p90 = scmp.ne.s32.totalorder %s73, %s89
      %p91 = scmp.eq.s32.totalorder %s23, 0
      %p92 = por %p90, %p91
      %s93 = ssub.s32 %s17, %s24
      %p94 = scmp.eq.s32.totalorder %s93, 0
      %s96 = sadd.s32 %s95, 1
      %s97 = scalar_select %p94, %s95, %s96
      %p100 = pneg %p94
      %p101 = scmp.eq.s32.totalorder %s17, 1
      %p102 = por %p100, %p101
      %p103 = scmp.ne.s32.totalorder %s95, %s98
      %p104 = scmp.eq.s32.totalorder %s17, 0
      %p105 = por %p103, %p104
      %p106 = scmp.ne.s32.totalorder %s95, %s98
      %p107 = scmp.eq.s32.totalorder %s22, 1
      %p108 = por %p106, %p107
      %p109 = scmp.ne.s32.totalorder %s98, %s99
      %p110 = scmp.eq.s32.totalorder %s22, 0
      %p111 = por %p109, %p110
      %p112 = scmp.ne.s32.totalorder %s98, %s99
      %p113 = scmp.eq.s32.totalorder %s23, 1
      %p114 = por %p112, %p113
      %p116 = scmp.ne.s32.totalorder %s99, %s115
      %p117 = scmp.eq.s32.totalorder %s23, 0
      %p118 = por %p116, %p117
      %p119 = scmp.le.s32.totalorder 1, %s17
      %p120 = scmp.lt.s32.totalorder %s17, 3
      %p121 = pnand %p119, %p120
      %p122 = pneg %p121
      // Predicated region
      $region9: #{tpu_custom_call.1} parent=5 // pred_check
        _
      $region10: #{tpu_custom_call.1} parent=5 // pred_check_branch
        %124 = sbr.rel (%p121) target = $region12
      $region11: #{tpu_custom_call.1} parent=5 // pred_region
        %s125 = ssub.s32 %s17, 1
        // Predicated region
        $region13: #{tpu_custom_call.1} parent=11 // pred_check
          %p126 = pneg %p38
        $region14: #{tpu_custom_call.1} parent=11 // pred_check_branch
          %128 = sbr.rel (%p126) target = $region16
        $region15: #{tpu_custom_call.1} parent=11 // pred_region
          %s130 = ssub.s32 16, 16
          %131 = vsyncadd [#allocation5], %s130
          %134 = dma.hbm_to_smem %s0, 16, [#allocation2], [#allocation5]
        $region16: #{tpu_custom_call.1} parent=11 // pred_fallthru
          _
        // Predicated region
        $region17: #{tpu_custom_call.1} parent=11 // pred_check
          %p135 = pneg %p59
        $region18: #{tpu_custom_call.1} parent=11 // pred_check_branch
          %137 = sbr.rel (%p135) target = $region20
        $region19: #{tpu_custom_call.1} parent=11 // pred_region
          %s139 = ssub.s32 64, 64
          %140 = vsyncadd [#allocation3], %s139
          %s142 = sshll.u32 [#allocation6], 4
          %s143 = int_to_ptr.vmem [resolvable:$true] %s142
          %145 = dma.hbm_to_vmem [thread:$0]  %s1, 64, %s143, [#allocation3]
        $region20: #{tpu_custom_call.1} parent=11 // pred_fallthru
          _
      $region12: #{tpu_custom_call.1} parent=5 // pred_fallthru
        _
      %p146 = scmp.lt.s32.totalorder %s17, 2
      // Predicated region
      $region21: #{tpu_custom_call.1} parent=5 // pred_check
        %p147 = pneg %p146
      $region22: #{tpu_custom_call.1} parent=5 // pred_check_branch
        %149 = sbr.rel (%p147) target = $region24
      $region23: #{tpu_custom_call.1} parent=5 // pred_region
        // Predicated region
        $region25: #{tpu_custom_call.1} parent=23 // pred_check
          %p150 = pneg %p79
        $region26: #{tpu_custom_call.1} parent=23 // pred_check_branch
          %152 = sbr.rel (%p150) target = $region28
        $region27: #{tpu_custom_call.1} parent=23 // pred_region
          %s153 = sand.u32 %s69, 1
          %s154 = scalar_lea.sflag [#allocation8], %s153
          %s155 = sand.u32 %s69, 1
          %s156 = smul.addr %s155, 8
          %s157 = scalar_lea.vmem [#allocation7], %s156
          %s159 = ssub.s32 128, 128
          %160 = vsyncadd %s154, %s159
          %s161 = smul.addr %s17, 2
          %s162 = smul.addr %s161, 64
          %s163 = scalar_lea.hbm %s2, %s162
          %s165 = sshll.u32 %s157, 4
          %s166 = int_to_ptr.vmem [resolvable:$true] %s165
          %168 = dma.hbm_to_vmem [thread:$0]  %s163, 128, %s166, %s154
        $region28: #{tpu_custom_call.1} parent=23 // pred_fallthru
          _
      $region24: #{tpu_custom_call.1} parent=5 // pred_fallthru
        _
      %p169 = scmp.le.s32.totalorder 1, %s17
      %p170 = scmp.lt.s32.totalorder %s17, 3
      %p171 = pnand %p169, %p170
      %p172 = pneg %p171
      // Predicated region
      $region29: #{tpu_custom_call.1} parent=5 // pred_check
        _
      $region30: #{tpu_custom_call.1} parent=5 // pred_check_branch
        %174 = sbr.rel (%p171) target = $region32
      $region31: #{tpu_custom_call.1} parent=5 // pred_region
        %s175 = ssub.s32 %s17, 1
        // Predicated region
        $region33: #{tpu_custom_call.1} parent=31 // pred_check
          %p176 = pneg %p38
        $region34: #{tpu_custom_call.1} parent=31 // pred_check_branch
          %178 = sbr.rel (%p176) target = $region36
        $region35: #{tpu_custom_call.1} parent=31 // pred_region
          %179 = dma.done [#allocation5], 16
        $region36: #{tpu_custom_call.1} parent=31 // pred_fallthru
          _
        // Predicated region
        $region37: #{tpu_custom_call.1} parent=31 // pred_check
          %p180 = pneg %p59
        $region38: #{tpu_custom_call.1} parent=31 // pred_check_branch
          %182 = sbr.rel (%p180) target = $region40
        $region39: #{tpu_custom_call.1} parent=31 // pred_region
          %183 = dma.done [#allocation3], 64
        $region40: #{tpu_custom_call.1} parent=31 // pred_fallthru
          _
        %s184 = sand.u32 %s72, 1
        %s185 = scalar_lea.sflag [#allocation8], %s184
        %s186 = sand.u32 %s72, 1
        %s187 = smul.addr %s186, 8
        %s188 = scalar_lea.vmem [#allocation7], %s187
        // Predicated region
        $region41: #{tpu_custom_call.1} parent=31 // pred_check
          %p189 = pneg %p85
        $region42: #{tpu_custom_call.1} parent=31 // pred_check_branch
          %191 = sbr.rel (%p189) target = $region44
        $region43: #{tpu_custom_call.1} parent=31 // pred_region
          %192 = dma.done %s185, 128
        $region44: #{tpu_custom_call.1} parent=31 // pred_fallthru
          _
        %193 = sfence
        %p194 = pneg %p38
        %p195 = pneg %p35
        %p196 = pneg %p59
        %p197 = pneg %p56
        %s198 = sand.u32 %s72, 1
        %s199 = scalar_lea.sflag [#allocation8], %s198
        %s200 = sand.u32 %s72, 1
        %s201 = smul.addr %s200, 8
        %s202 = scalar_lea.vmem [#allocation7], %s201
        %p203 = pneg %p85
        %p204 = pneg %p82
        %p205 = pneg %p111
        %p206 = pneg %p108
        %s207 = sand.u32 %s98, 1
        %s208 = scalar_lea.sflag [#allocation4], %s207
        %s209 = sand.u32 %s98, 1
        %s210 = smul.addr %s209, 8
        %s211 = scalar_lea.vmem [#allocation9], %s210
        %v212 = vld [vmem:[%s188] sm:$0xff]
        %v214 = vcombine.high %v212, %v212
        %vm216 = vcmask 1043456
        %v217 = vsel %vm216, %v212, -inf
        %v218 = vrot.slane %v217, 4
        %v219 = vmax.f32 %v217, %v218
        %v220 = vrot.slane %v219, 2
        %v221 = vmax.f32 %v219, %v220
        %v222 = vrot.slane %v221, 1
        %v223 = vmax.f32 %v221, %v222
        %v224 = vsel %vm216, %v214, -inf
        %v225 = vrot.slane %v224, 4
        %v226 = vmax.f32 %v224, %v225
        %v227 = vrot.slane %v226, 2
        %v228 = vmax.f32 %v226, %v227
        %v229 = vrot.slane %v228, 1
        %v230 = vmax.f32 %v228, %v229
        %v231 = vsel %vm216, %v212, 0.0
        %v232 = vrot.slane %v231, 4
        %v233 = vadd.f32 %v231, %v232
        %v234 = vrot.slane %v233, 2
        %v235 = vadd.f32 %v233, %v234
        %v236 = vrot.slane %v235, 1
        %v237 = vadd.f32 %v235, %v236
        %v238 = vsel %vm216, %v214, 0.0
        %v239 = vrot.slane %v238, 4
        %v240 = vadd.f32 %v238, %v239
        %v241 = vrot.slane %v240, 2
        %v242 = vadd.f32 %v240, %v241
        %v243 = vrot.slane %v242, 1
        %v244 = vadd.f32 %v242, %v243
        %v245 = vmul.f32 %v237, 0.25
        %v246 = vmul.f32 %v244, 0.25
        %v247 = vld [vmem:[#allocation6] ss:$2 sm:$0x3]
        %s248 = scalar_lea.vmem [#allocation6], 1
        %v249 = vld [vmem:[%s248] ss:$2 sm:$0x3]
        %v250 = vadd.s32 %v247, 4294967293
        %vm251 = vcmp.ge.s32.totalorder %v250, 0
        %vm252 = vcmp.lt.s32.totalorder %v250, 16
        %vm253 = vmand %vm251, %vm252
        %v254 = vadd.s32 %v247, 4294967294
        %vm255 = vcmp.ge.s32.totalorder %v254, 0
        %vm256 = vcmp.lt.s32.totalorder %v254, 16
        %vm257 = vmand %vm255, %vm256
        %v258 = vadd.s32 %v247, 4294967295
        %vm259 = vcmp.ge.s32.totalorder %v258, 0
        %vm260 = vcmp.lt.s32.totalorder %v258, 16
        %vm261 = vmand %vm259, %vm260
        %vm262 = vcmp.ge.s32.totalorder %v247, 0
        %vm263 = vcmp.lt.s32.totalorder %v247, 16
        %vm264 = vmand %vm262, %vm263
        %v265 = vadd.s32 %v247, 1
        %vm266 = vcmp.ge.s32.totalorder %v265, 0
        %vm267 = vcmp.lt.s32.totalorder %v265, 16
        %vm268 = vmand %vm266, %vm267
        %v269 = vadd.s32 %v247, 2
        %vm270 = vcmp.ge.s32.totalorder %v269, 0
        %vm271 = vcmp.lt.s32.totalorder %v269, 16
        %vm272 = vmand %vm270, %vm271
        %v273 = vadd.s32 %v247, 3
        %vm274 = vcmp.ge.s32.totalorder %v273, 0
        %vm275 = vcmp.lt.s32.totalorder %v273, 16
        %vm276 = vmand %vm274, %vm275
        %v277 = vadd.s32 %v249, 4294967293
        %vm278 = vcmp.ge.s32.totalorder %v277, 0
        %vm279 = vcmp.lt.s32.totalorder %v277, 16
        %vm280 = vmand %vm278, %vm279
        %v281 = vadd.s32 %v249, 4294967294
        %vm282 = vcmp.ge.s32.totalorder %v281, 0
        %vm283 = vcmp.lt.s32.totalorder %v281, 16
        %vm284 = vmand %vm282, %vm283
        %v285 = vadd.s32 %v249, 4294967295
        %vm286 = vcmp.ge.s32.totalorder %v285, 0
        %vm287 = vcmp.lt.s32.totalorder %v285, 16
        %vm288 = vmand %vm286, %vm287
        %vm289 = vcmp.ge.s32.totalorder %v249, 0
        %vm290 = vcmp.lt.s32.totalorder %v249, 16
        %vm291 = vmand %vm289, %vm290
        %v292 = vadd.s32 %v249, 1
        %vm293 = vcmp.ge.s32.totalorder %v292, 0
        %vm294 = vcmp.lt.s32.totalorder %v292, 16
        %vm295 = vmand %vm293, %vm294
        %v296 = vadd.s32 %v249, 2
        %vm297 = vcmp.ge.s32.totalorder %v296, 0
        %vm298 = vcmp.lt.s32.totalorder %v296, 16
        %vm299 = vmand %vm297, %vm298
        %v300 = vadd.s32 %v249, 3
        %vm301 = vcmp.ge.s32.totalorder %v300, 0
        %vm302 = vcmp.lt.s32.totalorder %v300, 16
        %vm303 = vmand %vm301, %vm302
        %304 = vrot.lane.b32.xlu0 %v223, 48
        %v305 = vpop.permute.xlu0 %304
        %306 = vrot.lane.b32.xlu0 %v230, 48
        %v307 = vpop.permute.xlu0 %306
        %v308 = vlaneseq
        %v309 = vand.u32 %v308, 127
        %vm310 = vcmp.lt.s32.totalorder %v309, 48
        %v311 = vsel %vm310, %v305, %v307
        %v312 = vsel %vm310, %v307, %v305
        %v315 = vcombine.low %v312, %v311
        %v317 = vunpack.c.l.s4 1966171168
        %v318 = vunpack.c.0.s8 %v317
        %v319 = vlaneseq
        %v320 = vshrl.u32 %v319, 7
        %v321 = vsub.s32 %v318, %v320
        %v322 = vrot.slane %v315, %v321
        %v324 = vunpack.c.l.s4 1966171168
        %v325 = vunpack.c.0.s8 %v324
        %v326 = vlaneseq
        %v327 = vshrl.u32 %v326, 7
        %v328 = vsub.s32 %v325, %v327
        %v329 = vrot.slane %v322, %v328
        %v331 = vsel %vm253, %v329, 0.0
        %v333 = vlaneseq
        %v334 = vshrl.u32 %v333, 7
        %v335 = vsub.s32 0, %v334
        %v336 = vrot.slane %v331, %v335
        %v337 = vlaneseq
        %v338 = vshrl.u32 %v337, 7
        %v339 = vsub.s32 1, %v338
        %v340 = vrot.slane %v331, %v339
        %343 = vrot.lane.b32.xlu0 %v336, 3
        %v344 = vpop.permute.xlu0 %343
        %345 = vrot.lane.b32.xlu0 %v340, 3
        %v346 = vpop.permute.xlu0 %345
        %vm347 = vcmp.lt.s32.totalorder %v309, 3
        %v348 = vsel %vm347, %v344, %v346
        %v349 = vsel %vm347, %v346, %v344
        %s350 = sld [smem:[#allocation2]]
        %v353 = vcombine.low %v349, %v348
        %v355 = vunpack.c.l.s4 1966171168
        %v356 = vunpack.c.0.s8 %v355
        %v357 = vlaneseq
        %v358 = vshrl.u32 %v357, 7
        %v359 = vsub.s32 %v356, %v358
        %v360 = vrot.slane %v353, %v359
        %v362 = vunpack.c.l.s4 1966171168
        %v363 = vunpack.c.0.s8 %v362
        %v364 = vlaneseq
        %v365 = vshrl.u32 %v364, 7
        %v366 = vsub.s32 %v363, %v365
        %v367 = vrot.slane %v360, %v366
        %v369 = vsel %vm280, %v367, 0.0
        %v370 = vstv %s350
        %v371 = vmul.f32 %v370, %v369
        %v372 = vadd.f32 %v371, 0.0
        %373 = vrot.lane.b32.xlu0 %v336, 2
        %v374 = vpop.permute.xlu0 %373
        %375 = vrot.lane.b32.xlu0 %v340, 2
        %v376 = vpop.permute.xlu0 %375
        %vm377 = vcmp.lt.s32.totalorder %v309, 2
        %v378 = vsel %vm377, %v374, %v376
        %v379 = vsel %vm377, %v376, %v374
        %s380 = sld [smem:[#allocation2 + $0x1]]
        %v383 = vcombine.low %v379, %v378
        %v385 = vunpack.c.l.s4 1966171168
        %v386 = vunpack.c.0.s8 %v385
        %v387 = vlaneseq
        %v388 = vshrl.u32 %v387, 7
        %v389 = vsub.s32 %v386, %v388
        %v390 = vrot.slane %v383, %v389
        %v392 = vunpack.c.l.s4 1966171168
        %v393 = vunpack.c.0.s8 %v392
        %v394 = vlaneseq
        %v395 = vshrl.u32 %v394, 7
        %v396 = vsub.s32 %v393, %v395
        %v397 = vrot.slane %v390, %v396
        %v399 = vsel %vm284, %v397, 0.0
        %v400 = vstv %s380
        %v401 = vmul.f32 %v400, %v399
        %v402 = vadd.f32 %v372, %v401
        %403 = vrot.lane.b32.xlu0 %v336, 1
        %v404 = vpop.permute.xlu0 %403
        %405 = vrot.lane.b32.xlu0 %v340, 1
        %v406 = vpop.permute.xlu0 %405
        %vm407 = vcmp.lt.s32.totalorder %v309, 1
        %v408 = vsel %vm407, %v404, %v406
        %v409 = vsel %vm407, %v406, %v404
        %s410 = sld [smem:[#allocation2 + $0x2]]
        %v413 = vcombine.low %v409, %v408
        %v415 = vunpack.c.l.s4 1966171168
        %v416 = vunpack.c.0.s8 %v415
        %v417 = vlaneseq
        %v418 = vshrl.u32 %v417, 7
        %v419 = vsub.s32 %v416, %v418
        %v420 = vrot.slane %v413, %v419
        %v422 = vunpack.c.l.s4 1966171168
        %v423 = vunpack.c.0.s8 %v422
        %v424 = vlaneseq
        %v425 = vshrl.u32 %v424, 7
        %v426 = vsub.s32 %v423, %v425
        %v427 = vrot.slane %v420, %v426
        %v429 = vsel %vm288, %v427, 0.0
        %v430 = vstv %s410
        %v431 = vmul.f32 %v430, %v429
        %v432 = vadd.f32 %v402, %v431
        %s433 = sld [smem:[#allocation2 + $0x3]]
        %v434 = vsel %vm291, %v331, 0.0
        %v435 = vstv %s433
        %v436 = vmul.f32 %v435, %v434
        %v437 = vadd.f32 %v432, %v436
        %438 = vrot.lane.b32.xlu0 %v336, 127
        %v439 = vpop.permute.xlu0 %438
        %440 = vrot.lane.b32.xlu0 %v340, 127
        %v441 = vpop.permute.xlu0 %440
        %vm442 = vcmp.lt.s32.totalorder %v309, 127
        %v443 = vsel %vm442, %v439, %v441
        %v444 = vsel %vm442, %v441, %v439
        %s445 = sld [smem:[#allocation2 + $0x4]]
        %v448 = vcombine.low %v443, %v444
        %v450 = vunpack.c.l.s4 1966171168
        %v451 = vunpack.c.0.s8 %v450
        %v452 = vlaneseq
        %v453 = vshrl.u32 %v452, 7
        %v454 = vsub.s32 %v451, %v453
        %v455 = vrot.slane %v448, %v454
        %v457 = vunpack.c.l.s4 1966171168
        %v458 = vunpack.c.0.s8 %v457
        %v459 = vlaneseq
        %v460 = vshrl.u32 %v459, 7
        %v461 = vsub.s32 %v458, %v460
        %v462 = vrot.slane %v455, %v461
        %v464 = vsel %vm295, %v462, 0.0
        %v465 = vstv %s445
        %v466 = vmul.f32 %v465, %v464
        %v467 = vadd.f32 %v437, %v466
        %468 = vrot.lane.b32.xlu0 %v336, 126
        %v469 = vpop.permute.xlu0 %468
        %470 = vrot.lane.b32.xlu0 %v340, 126
        %v471 = vpop.permute.xlu0 %470
        %vm472 = vcmp.lt.s32.totalorder %v309, 126
        %v473 = vsel %vm472, %v469, %v471
        %v474 = vsel %vm472, %v471, %v469
        %s475 = sld [smem:[#allocation2 + $0x5]]
        %v478 = vcombine.low %v473, %v474
        %v480 = vunpack.c.l.s4 1966171168
        %v481 = vunpack.c.0.s8 %v480
        %v482 = vlaneseq
        %v483 = vshrl.u32 %v482, 7
        %v484 = vsub.s32 %v481, %v483
        %v485 = vrot.slane %v478, %v484
        %v487 = vunpack.c.l.s4 1966171168
        %v488 = vunpack.c.0.s8 %v487
        %v489 = vlaneseq
        %v490 = vshrl.u32 %v489, 7
        %v491 = vsub.s32 %v488, %v490
        %v492 = vrot.slane %v485, %v491
        %v494 = vsel %vm299, %v492, 0.0
        %v495 = vstv %s475
        %v496 = vmul.f32 %v495, %v494
        %v497 = vadd.f32 %v467, %v496
        %498 = vrot.lane.b32.xlu0 %v336, 125
        %v499 = vpop.permute.xlu0 %498
        %500 = vrot.lane.b32.xlu0 %v340, 125
        %v501 = vpop.permute.xlu0 %500
        %vm502 = vcmp.lt.s32.totalorder %v309, 125
        %v503 = vsel %vm502, %v499, %v501
        %v504 = vsel %vm502, %v501, %v499
        %s505 = sld [smem:[#allocation2 + $0x6]]
        %v508 = vcombine.low %v503, %v504
        %v510 = vunpack.c.l.s4 1966171168
        %v511 = vunpack.c.0.s8 %v510
        %v512 = vlaneseq
        %v513 = vshrl.u32 %v512, 7
        %v514 = vsub.s32 %v511, %v513
        %v515 = vrot.slane %v508, %v514
        %v517 = vunpack.c.l.s4 1966171168
        %v518 = vunpack.c.0.s8 %v517
        %v519 = vlaneseq
        %v520 = vshrl.u32 %v519, 7
        %v521 = vsub.s32 %v518, %v520
        %v522 = vrot.slane %v515, %v521
        %v524 = vsel %vm303, %v522, 0.0
        %v525 = vstv %s505
        %v526 = vmul.f32 %v525, %v524
        %v527 = vadd.f32 %v497, %v526
        %528 = vrot.lane.b32.xlu0 %v223, 32
        %v529 = vpop.permute.xlu0 %528
        %530 = vrot.lane.b32.xlu0 %v230, 32
        %v531 = vpop.permute.xlu0 %530
        %vm532 = vcmp.lt.s32.totalorder %v309, 32
        %v533 = vsel %vm532, %v529, %v531
        %v534 = vsel %vm532, %v531, %v529
        %v537 = vcombine.low %v534, %v533
        %v539 = vunpack.c.l.s4 1966171168
        %v540 = vunpack.c.0.s8 %v539
        %v541 = vlaneseq
        %v542 = vshrl.u32 %v541, 7
        %v543 = vsub.s32 %v540, %v542
        %v544 = vrot.slane %v537, %v543
        %v546 = vunpack.c.l.s4 1966171168
        %v547 = vunpack.c.0.s8 %v546
        %v548 = vlaneseq
        %v549 = vshrl.u32 %v548, 7
        %v550 = vsub.s32 %v547, %v549
        %v551 = vrot.slane %v544, %v550
        %v553 = vsel %vm257, %v551, 0.0
        %v555 = vlaneseq
        %v556 = vshrl.u32 %v555, 7
        %v557 = vsub.s32 0, %v556
        %v558 = vrot.slane %v553, %v557
        %v559 = vlaneseq
        %v560 = vshrl.u32 %v559, 7
        %v561 = vsub.s32 1, %v560
        %v562 = vrot.slane %v553, %v561
        %565 = vrot.lane.b32.xlu0 %v558, 3
        %v566 = vpop.permute.xlu0 %565
        %567 = vrot.lane.b32.xlu0 %v562, 3
        %v568 = vpop.permute.xlu0 %567
        %v569 = vsel %vm347, %v566, %v568
        %v570 = vsel %vm347, %v568, %v566
        %s571 = sld [smem:[#allocation2 + $0x7]]
        %v574 = vcombine.low %v570, %v569
        %v576 = vunpack.c.l.s4 1966171168
        %v577 = vunpack.c.0.s8 %v576
        %v578 = vlaneseq
        %v579 = vshrl.u32 %v578, 7
        %v580 = vsub.s32 %v577, %v579
        %v581 = vrot.slane %v574, %v580
        %v583 = vunpack.c.l.s4 1966171168
        %v584 = vunpack.c.0.s8 %v583
        %v585 = vlaneseq
        %v586 = vshrl.u32 %v585, 7
        %v587 = vsub.s32 %v584, %v586
        %v588 = vrot.slane %v581, %v587
        %v590 = vsel %vm280, %v588, 0.0
        %v591 = vstv %s571
        %v592 = vmul.f32 %v591, %v590
        %v593 = vadd.f32 %v527, %v592
        %594 = vrot.lane.b32.xlu0 %v558, 2
        %v595 = vpop.permute.xlu0 %594
        %596 = vrot.lane.b32.xlu0 %v562, 2
        %v597 = vpop.permute.xlu0 %596
        %v598 = vsel %vm377, %v595, %v597
        %v599 = vsel %vm377, %v597, %v595
        %s600 = sld [smem:[#allocation2 + $0x8]]
        %v603 = vcombine.low %v599, %v598
        %v605 = vunpack.c.l.s4 1966171168
        %v606 = vunpack.c.0.s8 %v605
        %v607 = vlaneseq
        %v608 = vshrl.u32 %v607, 7
        %v609 = vsub.s32 %v606, %v608
        %v610 = vrot.slane %v603, %v609
        %v612 = vunpack.c.l.s4 1966171168
        %v613 = vunpack.c.0.s8 %v612
        %v614 = vlaneseq
        %v615 = vshrl.u32 %v614, 7
        %v616 = vsub.s32 %v613, %v615
        %v617 = vrot.slane %v610, %v616
        %v619 = vsel %vm284, %v617, 0.0
        %v620 = vstv %s600
        %v621 = vmul.f32 %v620, %v619
        %v622 = vadd.f32 %v593, %v621
        %623 = vrot.lane.b32.xlu0 %v558, 1
        %v624 = vpop.permute.xlu0 %623
        %625 = vrot.lane.b32.xlu0 %v562, 1
        %v626 = vpop.permute.xlu0 %625
        %v627 = vsel %vm407, %v624, %v626
        %v628 = vsel %vm407, %v626, %v624
        %s629 = sld [smem:[#allocation2 + $0x9]]
        %v632 = vcombine.low %v628, %v627
        %v634 = vunpack.c.l.s4 1966171168
        %v635 = vunpack.c.0.s8 %v634
        %v636 = vlaneseq
        %v637 = vshrl.u32 %v636, 7
        %v638 = vsub.s32 %v635, %v637
        %v639 = vrot.slane %v632, %v638
        %v641 = vunpack.c.l.s4 1966171168
        %v642 = vunpack.c.0.s8 %v641
        %v643 = vlaneseq
        %v644 = vshrl.u32 %v643, 7
        %v645 = vsub.s32 %v642, %v644
        %v646 = vrot.slane %v639, %v645
        %v648 = vsel %vm288, %v646, 0.0
        %v649 = vstv %s629
        %v650 = vmul.f32 %v649, %v648
        %v651 = vadd.f32 %v622, %v650
        %s652 = sld [smem:[#allocation2 + $0xa]]
        %v653 = vsel %vm291, %v553, 0.0
        %v654 = vstv %s652
        %v655 = vmul.f32 %v654, %v653
        %v656 = vadd.f32 %v651, %v655
        %657 = vrot.lane.b32.xlu0 %v558, 127
        %v658 = vpop.permute.xlu0 %657
        %659 = vrot.lane.b32.xlu0 %v562, 127
        %v660 = vpop.permute.xlu0 %659
        %v661 = vsel %vm442, %v658, %v660
        %v662 = vsel %vm442, %v660, %v658
        %s663 = sld [smem:[#allocation2 + $0xb]]
        %v666 = vcombine.low %v661, %v662
        %v668 = vunpack.c.l.s4 1966171168
        %v669 = vunpack.c.0.s8 %v668
        %v670 = vlaneseq
        %v671 = vshrl.u32 %v670, 7
        %v672 = vsub.s32 %v669, %v671
        %v673 = vrot.slane %v666, %v672
        %v675 = vunpack.c.l.s4 1966171168
        %v676 = vunpack.c.0.s8 %v675
        %v677 = vlaneseq
        %v678 = vshrl.u32 %v677, 7
        %v679 = vsub.s32 %v676, %v678
        %v680 = vrot.slane %v673, %v679
        %v682 = vsel %vm295, %v680, 0.0
        %v683 = vstv %s663
        %v684 = vmul.f32 %v683, %v682
        %v685 = vadd.f32 %v656, %v684
        %686 = vrot.lane.b32.xlu0 %v558, 126
        %v687 = vpop.permute.xlu0 %686
        %688 = vrot.lane.b32.xlu0 %v562, 126
        %v689 = vpop.permute.xlu0 %688
        %v690 = vsel %vm472, %v687, %v689
        %v691 = vsel %vm472, %v689, %v687
        %s692 = sld [smem:[#allocation2 + $0xc]]
        %v695 = vcombine.low %v690, %v691
        %v697 = vunpack.c.l.s4 1966171168
        %v698 = vunpack.c.0.s8 %v697
        %v699 = vlaneseq
        %v700 = vshrl.u32 %v699, 7
        %v701 = vsub.s32 %v698, %v700
        %v702 = vrot.slane %v695, %v701
        %v704 = vunpack.c.l.s4 1966171168
        %v705 = vunpack.c.0.s8 %v704
        %v706 = vlaneseq
        %v707 = vshrl.u32 %v706, 7
        %v708 = vsub.s32 %v705, %v707
        %v709 = vrot.slane %v702, %v708
        %v711 = vsel %vm299, %v709, 0.0
        %v712 = vstv %s692
        %v713 = vmul.f32 %v712, %v711
        %v714 = vadd.f32 %v685, %v713
        %715 = vrot.lane.b32.xlu0 %v558, 125
        %v716 = vpop.permute.xlu0 %715
        %717 = vrot.lane.b32.xlu0 %v562, 125
        %v718 = vpop.permute.xlu0 %717
        %v719 = vsel %vm502, %v716, %v718
        %v720 = vsel %vm502, %v718, %v716
        %s721 = sld [smem:[#allocation2 + $0xd]]
        %v724 = vcombine.low %v719, %v720
        %v726 = vunpack.c.l.s4 1966171168
        %v727 = vunpack.c.0.s8 %v726
        %v728 = vlaneseq
        %v729 = vshrl.u32 %v728, 7
        %v730 = vsub.s32 %v727, %v729
        %v731 = vrot.slane %v724, %v730
        %v733 = vunpack.c.l.s4 1966171168
        %v734 = vunpack.c.0.s8 %v733
        %v735 = vlaneseq
        %v736 = vshrl.u32 %v735, 7
        %v737 = vsub.s32 %v734, %v736
        %v738 = vrot.slane %v731, %v737
        %v740 = vsel %vm303, %v738, 0.0
        %v741 = vstv %s721
        %v742 = vmul.f32 %v741, %v740
        %v743 = vadd.f32 %v714, %v742
        %744 = vrot.lane.b32.xlu0 %v223, 16
        %v745 = vpop.permute.xlu0 %744
        %746 = vrot.lane.b32.xlu0 %v230, 16
        %v747 = vpop.permute.xlu0 %746
        %vm748 = vcmp.lt.s32.totalorder %v309, 16
        %v749 = vsel %vm748, %v745, %v747
        %v750 = vsel %vm748, %v747, %v745
        %v753 = vcombine.low %v750, %v749
        %v755 = vunpack.c.l.s4 1966171168
        %v756 = vunpack.c.0.s8 %v755
        %v757 = vlaneseq
        %v758 = vshrl.u32 %v757, 7
        %v759 = vsub.s32 %v756, %v758
        %v760 = vrot.slane %v753, %v759
        %v762 = vunpack.c.l.s4 1966171168
        %v763 = vunpack.c.0.s8 %v762
        %v764 = vlaneseq
        %v765 = vshrl.u32 %v764, 7
        %v766 = vsub.s32 %v763, %v765
        %v767 = vrot.slane %v760, %v766
        %v769 = vsel %vm261, %v767, 0.0
        %v771 = vlaneseq
        %v772 = vshrl.u32 %v771, 7
        %v773 = vsub.s32 0, %v772
        %v774 = vrot.slane %v769, %v773
        %v775 = vlaneseq
        %v776 = vshrl.u32 %v775, 7
        %v777 = vsub.s32 1, %v776
        %v778 = vrot.slane %v769, %v777
        %781 = vrot.lane.b32.xlu0 %v774, 3
        %v782 = vpop.permute.xlu0 %781
        %783 = vrot.lane.b32.xlu0 %v778, 3
        %v784 = vpop.permute.xlu0 %783
        %v785 = vsel %vm347, %v782, %v784
        %v786 = vsel %vm347, %v784, %v782
        %s787 = sld [smem:[#allocation2 + $0xe]]
        %v790 = vcombine.low %v786, %v785
        %v792 = vunpack.c.l.s4 1966171168
        %v793 = vunpack.c.0.s8 %v792
        %v794 = vlaneseq
        %v795 = vshrl.u32 %v794, 7
        %v796 = vsub.s32 %v793, %v795
        %v797 = vrot.slane %v790, %v796
        %v799 = vunpack.c.l.s4 1966171168
        %v800 = vunpack.c.0.s8 %v799
        %v801 = vlaneseq
        %v802 = vshrl.u32 %v801, 7
        %v803 = vsub.s32 %v800, %v802
        %v804 = vrot.slane %v797, %v803
        %v806 = vsel %vm280, %v804, 0.0
        %v807 = vstv %s787
        %v808 = vmul.f32 %v807, %v806
        %v809 = vadd.f32 %v743, %v808
        %810 = vrot.lane.b32.xlu0 %v774, 2
        %v811 = vpop.permute.xlu0 %810
        %812 = vrot.lane.b32.xlu0 %v778, 2
        %v813 = vpop.permute.xlu0 %812
        %v814 = vsel %vm377, %v811, %v813
        %v815 = vsel %vm377, %v813, %v811
        %s816 = sld [smem:[#allocation2 + $0xf]]
        %v819 = vcombine.low %v815, %v814
        %v821 = vunpack.c.l.s4 1966171168
        %v822 = vunpack.c.0.s8 %v821
        %v823 = vlaneseq
        %v824 = vshrl.u32 %v823, 7
        %v825 = vsub.s32 %v822, %v824
        %v826 = vrot.slane %v819, %v825
        %v828 = vunpack.c.l.s4 1966171168
        %v829 = vunpack.c.0.s8 %v828
        %v830 = vlaneseq
        %v831 = vshrl.u32 %v830, 7
        %v832 = vsub.s32 %v829, %v831
        %v833 = vrot.slane %v826, %v832
        %v835 = vsel %vm284, %v833, 0.0
        %v836 = vstv %s816
        %v837 = vmul.f32 %v836, %v835
        %v838 = vadd.f32 %v809, %v837
        %839 = vrot.lane.b32.xlu0 %v774, 1
        %v840 = vpop.permute.xlu0 %839
        %841 = vrot.lane.b32.xlu0 %v778, 1
        %v842 = vpop.permute.xlu0 %841
        %v843 = vsel %vm407, %v840, %v842
        %v844 = vsel %vm407, %v842, %v840
        %s845 = sld [smem:[#allocation2 + $0x10]]
        %v848 = vcombine.low %v844, %v843
        %v850 = vunpack.c.l.s4 1966171168
        %v851 = vunpack.c.0.s8 %v850
        %v852 = vlaneseq
        %v853 = vshrl.u32 %v852, 7
        %v854 = vsub.s32 %v851, %v853
        %v855 = vrot.slane %v848, %v854
        %v857 = vunpack.c.l.s4 1966171168
        %v858 = vunpack.c.0.s8 %v857
        %v859 = vlaneseq
        %v860 = vshrl.u32 %v859, 7
        %v861 = vsub.s32 %v858, %v860
        %v862 = vrot.slane %v855, %v861
        %v864 = vsel %vm288, %v862, 0.0
        %v865 = vstv %s845
        %v866 = vmul.f32 %v865, %v864
        %v867 = vadd.f32 %v838, %v866
        %s868 = sld [smem:[#allocation2 + $0x11]]
        %v869 = vsel %vm291, %v769, 0.0
        %v870 = vstv %s868
        %v871 = vmul.f32 %v870, %v869
        %v872 = vadd.f32 %v867, %v871
        %873 = vrot.lane.b32.xlu0 %v774, 127
        %v874 = vpop.permute.xlu0 %873
        %875 = vrot.lane.b32.xlu0 %v778, 127
        %v876 = vpop.permute.xlu0 %875
        %v877 = vsel %vm442, %v874, %v876
        %v878 = vsel %vm442, %v876, %v874
        %s879 = sld [smem:[#allocation2 + $0x12]]
        %v882 = vcombine.low %v877, %v878
        %v884 = vunpack.c.l.s4 1966171168
        %v885 = vunpack.c.0.s8 %v884
        %v886 = vlaneseq
        %v887 = vshrl.u32 %v886, 7
        %v888 = vsub.s32 %v885, %v887
        %v889 = vrot.slane %v882, %v888
        %v891 = vunpack.c.l.s4 1966171168
        %v892 = vunpack.c.0.s8 %v891
        %v893 = vlaneseq
        %v894 = vshrl.u32 %v893, 7
        %v895 = vsub.s32 %v892, %v894
        %v896 = vrot.slane %v889, %v895
        %v898 = vsel %vm295, %v896, 0.0
        %v899 = vstv %s879
        %v900 = vmul.f32 %v899, %v898
        %v901 = vadd.f32 %v872, %v900
        %902 = vrot.lane.b32.xlu0 %v774, 126
        %v903 = vpop.permute.xlu0 %902
        %904 = vrot.lane.b32.xlu0 %v778, 126
        %v905 = vpop.permute.xlu0 %904
        %v906 = vsel %vm472, %v903, %v905
        %v907 = vsel %vm472, %v905, %v903
        %s908 = sld [smem:[#allocation2 + $0x13]]
        %v911 = vcombine.low %v906, %v907
        %v913 = vunpack.c.l.s4 1966171168
        %v914 = vunpack.c.0.s8 %v913
        %v915 = vlaneseq
        %v916 = vshrl.u32 %v915, 7
        %v917 = vsub.s32 %v914, %v916
        %v918 = vrot.slane %v911, %v917
        %v920 = vunpack.c.l.s4 1966171168
        %v921 = vunpack.c.0.s8 %v920
        %v922 = vlaneseq
        %v923 = vshrl.u32 %v922, 7
        %v924 = vsub.s32 %v921, %v923
        %v925 = vrot.slane %v918, %v924
        %v927 = vsel %vm299, %v925, 0.0
        %v928 = vstv %s908
        %v929 = vmul.f32 %v928, %v927
        %v930 = vadd.f32 %v901, %v929
        %931 = vrot.lane.b32.xlu0 %v774, 125
        %v932 = vpop.permute.xlu0 %931
        %933 = vrot.lane.b32.xlu0 %v778, 125
        %v934 = vpop.permute.xlu0 %933
        %v935 = vsel %vm502, %v932, %v934
        %v936 = vsel %vm502, %v934, %v932
        %s937 = sld [smem:[#allocation2 + $0x14]]
        %v940 = vcombine.low %v935, %v936
        %v942 = vunpack.c.l.s4 1966171168
        %v943 = vunpack.c.0.s8 %v942
        %v944 = vlaneseq
        %v945 = vshrl.u32 %v944, 7
        %v946 = vsub.s32 %v943, %v945
        %v947 = vrot.slane %v940, %v946
        %v949 = vunpack.c.l.s4 1966171168
        %v950 = vunpack.c.0.s8 %v949
        %v951 = vlaneseq
        %v952 = vshrl.u32 %v951, 7
        %v953 = vsub.s32 %v950, %v952
        %v954 = vrot.slane %v947, %v953
        %v956 = vsel %vm303, %v954, 0.0
        %v957 = vstv %s937
        %v958 = vmul.f32 %v957, %v956
        %v959 = vadd.f32 %v930, %v958
        %v962 = vcombine.low %v223, %v230
        %v964 = vunpack.c.l.s4 1966171168
        %v965 = vunpack.c.0.s8 %v964
        %v966 = vlaneseq
        %v967 = vshrl.u32 %v966, 7
        %v968 = vsub.s32 %v965, %v967
        %v969 = vrot.slane %v962, %v968
        %v971 = vunpack.c.l.s4 1966171168
        %v972 = vunpack.c.0.s8 %v971
        %v973 = vlaneseq
        %v974 = vshrl.u32 %v973, 7
        %v975 = vsub.s32 %v972, %v974
        %v976 = vrot.slane %v969, %v975
        %v978 = vsel %vm264, %v976, 0.0
        %v980 = vlaneseq
        %v981 = vshrl.u32 %v980, 7
        %v982 = vsub.s32 0, %v981
        %v983 = vrot.slane %v978, %v982
        %v984 = vlaneseq
        %v985 = vshrl.u32 %v984, 7
        %v986 = vsub.s32 1, %v985
        %v987 = vrot.slane %v978, %v986
        %990 = vrot.lane.b32.xlu0 %v983, 3
        %v991 = vpop.permute.xlu0 %990
        %992 = vrot.lane.b32.xlu0 %v987, 3
        %v993 = vpop.permute.xlu0 %992
        %v994 = vsel %vm347, %v991, %v993
        %v995 = vsel %vm347, %v993, %v991
        %s996 = sld [smem:[#allocation2 + $0x15]]
        %v999 = vcombine.low %v995, %v994
        %v1001 = vunpack.c.l.s4 1966171168
        %v1002 = vunpack.c.0.s8 %v1001
        %v1003 = vlaneseq
        %v1004 = vshrl.u32 %v1003, 7
        %v1005 = vsub.s32 %v1002, %v1004
        %v1006 = vrot.slane %v999, %v1005
        %v1008 = vunpack.c.l.s4 1966171168
        %v1009 = vunpack.c.0.s8 %v1008
        %v1010 = vlaneseq
        %v1011 = vshrl.u32 %v1010, 7
        %v1012 = vsub.s32 %v1009, %v1011
        %v1013 = vrot.slane %v1006, %v1012
        %v1015 = vsel %vm280, %v1013, 0.0
        %v1016 = vstv %s996
        %v1017 = vmul.f32 %v1016, %v1015
        %v1018 = vadd.f32 %v959, %v1017
        %1019 = vrot.lane.b32.xlu0 %v983, 2
        %v1020 = vpop.permute.xlu0 %1019
        %1021 = vrot.lane.b32.xlu0 %v987, 2
        %v1022 = vpop.permute.xlu0 %1021
        %v1023 = vsel %vm377, %v1020, %v1022
        %v1024 = vsel %vm377, %v1022, %v1020
        %s1025 = sld [smem:[#allocation2 + $0x16]]
        %v1028 = vcombine.low %v1024, %v1023
        %v1030 = vunpack.c.l.s4 1966171168
        %v1031 = vunpack.c.0.s8 %v1030
        %v1032 = vlaneseq
        %v1033 = vshrl.u32 %v1032, 7
        %v1034 = vsub.s32 %v1031, %v1033
        %v1035 = vrot.slane %v1028, %v1034
        %v1037 = vunpack.c.l.s4 1966171168
        %v1038 = vunpack.c.0.s8 %v1037
        %v1039 = vlaneseq
        %v1040 = vshrl.u32 %v1039, 7
        %v1041 = vsub.s32 %v1038, %v1040
        %v1042 = vrot.slane %v1035, %v1041
        %v1044 = vsel %vm284, %v1042, 0.0
        %v1045 = vstv %s1025
        %v1046 = vmul.f32 %v1045, %v1044
        %v1047 = vadd.f32 %v1018, %v1046
        %1048 = vrot.lane.b32.xlu0 %v983, 1
        %v1049 = vpop.permute.xlu0 %1048
        %1050 = vrot.lane.b32.xlu0 %v987, 1
        %v1051 = vpop.permute.xlu0 %1050
        %v1052 = vsel %vm407, %v1049, %v1051
        %v1053 = vsel %vm407, %v1051, %v1049
        %s1054 = sld [smem:[#allocation2 + $0x17]]
        %v1057 = vcombine.low %v1053, %v1052
        %v1059 = vunpack.c.l.s4 1966171168
        %v1060 = vunpack.c.0.s8 %v1059
        %v1061 = vlaneseq
        %v1062 = vshrl.u32 %v1061, 7
        %v1063 = vsub.s32 %v1060, %v1062
        %v1064 = vrot.slane %v1057, %v1063
        %v1066 = vunpack.c.l.s4 1966171168
        %v1067 = vunpack.c.0.s8 %v1066
        %v1068 = vlaneseq
        %v1069 = vshrl.u32 %v1068, 7
        %v1070 = vsub.s32 %v1067, %v1069
        %v1071 = vrot.slane %v1064, %v1070
        %v1073 = vsel %vm288, %v1071, 0.0
        %v1074 = vstv %s1054
        %v1075 = vmul.f32 %v1074, %v1073
        %v1076 = vadd.f32 %v1047, %v1075
        %s1077 = sld [smem:[#allocation2 + $0x18]]
        %v1078 = vsel %vm291, %v978, 0.0
        %v1079 = vstv %s1077
        %v1080 = vmul.f32 %v1079, %v1078
        %v1081 = vadd.f32 %v1076, %v1080
        %1082 = vrot.lane.b32.xlu0 %v983, 127
        %v1083 = vpop.permute.xlu0 %1082
        %1084 = vrot.lane.b32.xlu0 %v987, 127
        %v1085 = vpop.permute.xlu0 %1084
        %v1086 = vsel %vm442, %v1083, %v1085
        %v1087 = vsel %vm442, %v1085, %v1083
        %s1088 = sld [smem:[#allocation2 + $0x19]]
        %v1091 = vcombine.low %v1086, %v1087
        %v1093 = vunpack.c.l.s4 1966171168
        %v1094 = vunpack.c.0.s8 %v1093
        %v1095 = vlaneseq
        %v1096 = vshrl.u32 %v1095, 7
        %v1097 = vsub.s32 %v1094, %v1096
        %v1098 = vrot.slane %v1091, %v1097
        %v1100 = vunpack.c.l.s4 1966171168
        %v1101 = vunpack.c.0.s8 %v1100
        %v1102 = vlaneseq
        %v1103 = vshrl.u32 %v1102, 7
        %v1104 = vsub.s32 %v1101, %v1103
        %v1105 = vrot.slane %v1098, %v1104
        %v1107 = vsel %vm295, %v1105, 0.0
        %v1108 = vstv %s1088
        %v1109 = vmul.f32 %v1108, %v1107
        %v1110 = vadd.f32 %v1081, %v1109
        %1111 = vrot.lane.b32.xlu0 %v983, 126
        %v1112 = vpop.permute.xlu0 %1111
        %1113 = vrot.lane.b32.xlu0 %v987, 126
        %v1114 = vpop.permute.xlu0 %1113
        %v1115 = vsel %vm472, %v1112, %v1114
        %v1116 = vsel %vm472, %v1114, %v1112
        %s1117 = sld [smem:[#allocation2 + $0x1a]]
        %v1120 = vcombine.low %v1115, %v1116
        %v1122 = vunpack.c.l.s4 1966171168
        %v1123 = vunpack.c.0.s8 %v1122
        %v1124 = vlaneseq
        %v1125 = vshrl.u32 %v1124, 7
        %v1126 = vsub.s32 %v1123, %v1125
        %v1127 = vrot.slane %v1120, %v1126
        %v1129 = vunpack.c.l.s4 1966171168
        %v1130 = vunpack.c.0.s8 %v1129
        %v1131 = vlaneseq
        %v1132 = vshrl.u32 %v1131, 7
        %v1133 = vsub.s32 %v1130, %v1132
        %v1134 = vrot.slane %v1127, %v1133
        %v1136 = vsel %vm299, %v1134, 0.0
        %v1137 = vstv %s1117
        %v1138 = vmul.f32 %v1137, %v1136
        %v1139 = vadd.f32 %v1110, %v1138
        %1140 = vrot.lane.b32.xlu0 %v983, 125
        %v1141 = vpop.permute.xlu0 %1140
        %1142 = vrot.lane.b32.xlu0 %v987, 125
        %v1143 = vpop.permute.xlu0 %1142
        %v1144 = vsel %vm502, %v1141, %v1143
        %v1145 = vsel %vm502, %v1143, %v1141
        %s1146 = sld [smem:[#allocation2 + $0x1b]]
        %v1149 = vcombine.low %v1144, %v1145
        %v1151 = vunpack.c.l.s4 1966171168
        %v1152 = vunpack.c.0.s8 %v1151
        %v1153 = vlaneseq
        %v1154 = vshrl.u32 %v1153, 7
        %v1155 = vsub.s32 %v1152, %v1154
        %v1156 = vrot.slane %v1149, %v1155
        %v1158 = vunpack.c.l.s4 1966171168
        %v1159 = vunpack.c.0.s8 %v1158
        %v1160 = vlaneseq
        %v1161 = vshrl.u32 %v1160, 7
        %v1162 = vsub.s32 %v1159, %v1161
        %v1163 = vrot.slane %v1156, %v1162
        %v1165 = vsel %vm303, %v1163, 0.0
        %v1166 = vstv %s1146
        %v1167 = vmul.f32 %v1166, %v1165
        %v1168 = vadd.f32 %v1139, %v1167
        %1169 = vrot.lane.b32.xlu0 %v223, 112
        %v1170 = vpop.permute.xlu0 %1169
        %1171 = vrot.lane.b32.xlu0 %v230, 112
        %v1172 = vpop.permute.xlu0 %1171
        %vm1173 = vcmp.lt.s32.totalorder %v309, 112
        %v1174 = vsel %vm1173, %v1170, %v1172
        %v1175 = vsel %vm1173, %v1172, %v1170
        %v1178 = vcombine.low %v1174, %v1175
        %v1180 = vunpack.c.l.s4 1966171168
        %v1181 = vunpack.c.0.s8 %v1180
        %v1182 = vlaneseq
        %v1183 = vshrl.u32 %v1182, 7
        %v1184 = vsub.s32 %v1181, %v1183
        %v1185 = vrot.slane %v1178, %v1184
        %v1187 = vunpack.c.l.s4 1966171168
        %v1188 = vunpack.c.0.s8 %v1187
        %v1189 = vlaneseq
        %v1190 = vshrl.u32 %v1189, 7
        %v1191 = vsub.s32 %v1188, %v1190
        %v1192 = vrot.slane %v1185, %v1191
        %v1194 = vsel %vm268, %v1192, 0.0
        %v1196 = vlaneseq
        %v1197 = vshrl.u32 %v1196, 7
        %v1198 = vsub.s32 0, %v1197
        %v1199 = vrot.slane %v1194, %v1198
        %v1200 = vlaneseq
        %v1201 = vshrl.u32 %v1200, 7
        %v1202 = vsub.s32 1, %v1201
        %v1203 = vrot.slane %v1194, %v1202
        %1206 = vrot.lane.b32.xlu0 %v1199, 3
        %v1207 = vpop.permute.xlu0 %1206
        %1208 = vrot.lane.b32.xlu0 %v1203, 3
        %v1209 = vpop.permute.xlu0 %1208
        %v1210 = vsel %vm347, %v1207, %v1209
        %v1211 = vsel %vm347, %v1209, %v1207
        %s1212 = sld [smem:[#allocation2 + $0x1c]]
        %v1215 = vcombine.low %v1211, %v1210
        %v1217 = vunpack.c.l.s4 1966171168
        %v1218 = vunpack.c.0.s8 %v1217
        %v1219 = vlaneseq
        %v1220 = vshrl.u32 %v1219, 7
        %v1221 = vsub.s32 %v1218, %v1220
        %v1222 = vrot.slane %v1215, %v1221
        %v1224 = vunpack.c.l.s4 1966171168
        %v1225 = vunpack.c.0.s8 %v1224
        %v1226 = vlaneseq
        %v1227 = vshrl.u32 %v1226, 7
        %v1228 = vsub.s32 %v1225, %v1227
        %v1229 = vrot.slane %v1222, %v1228
        %v1231 = vsel %vm280, %v1229, 0.0
        %v1232 = vstv %s1212
        %v1233 = vmul.f32 %v1232, %v1231
        %v1234 = vadd.f32 %v1168, %v1233
        %1235 = vrot.lane.b32.xlu0 %v1199, 2
        %v1236 = vpop.permute.xlu0 %1235
        %1237 = vrot.lane.b32.xlu0 %v1203, 2
        %v1238 = vpop.permute.xlu0 %1237
        %v1239 = vsel %vm377, %v1236, %v1238
        %v1240 = vsel %vm377, %v1238, %v1236
        %s1241 = sld [smem:[#allocation2 + $0x1d]]
        %v1244 = vcombine.low %v1240, %v1239
        %v1246 = vunpack.c.l.s4 1966171168
        %v1247 = vunpack.c.0.s8 %v1246
        %v1248 = vlaneseq
        %v1249 = vshrl.u32 %v1248, 7
        %v1250 = vsub.s32 %v1247, %v1249
        %v1251 = vrot.slane %v1244, %v1250
        %v1253 = vunpack.c.l.s4 1966171168
        %v1254 = vunpack.c.0.s8 %v1253
        %v1255 = vlaneseq
        %v1256 = vshrl.u32 %v1255, 7
        %v1257 = vsub.s32 %v1254, %v1256
        %v1258 = vrot.slane %v1251, %v1257
        %v1260 = vsel %vm284, %v1258, 0.0
        %v1261 = vstv %s1241
        %v1262 = vmul.f32 %v1261, %v1260
        %v1263 = vadd.f32 %v1234, %v1262
        %1264 = vrot.lane.b32.xlu0 %v1199, 1
        %v1265 = vpop.permute.xlu0 %1264
        %1266 = vrot.lane.b32.xlu0 %v1203, 1
        %v1267 = vpop.permute.xlu0 %1266
        %v1268 = vsel %vm407, %v1265, %v1267
        %v1269 = vsel %vm407, %v1267, %v1265
        %s1270 = sld [smem:[#allocation2 + $0x1e]]
        %v1273 = vcombine.low %v1269, %v1268
        %v1275 = vunpack.c.l.s4 1966171168
        %v1276 = vunpack.c.0.s8 %v1275
        %v1277 = vlaneseq
        %v1278 = vshrl.u32 %v1277, 7
        %v1279 = vsub.s32 %v1276, %v1278
        %v1280 = vrot.slane %v1273, %v1279
        %v1282 = vunpack.c.l.s4 1966171168
        %v1283 = vunpack.c.0.s8 %v1282
        %v1284 = vlaneseq
        %v1285 = vshrl.u32 %v1284, 7
        %v1286 = vsub.s32 %v1283, %v1285
        %v1287 = vrot.slane %v1280, %v1286
        %v1289 = vsel %vm288, %v1287, 0.0
        %v1290 = vstv %s1270
        %v1291 = vmul.f32 %v1290, %v1289
        %v1292 = vadd.f32 %v1263, %v1291
        %s1293 = sld [smem:[#allocation2 + $0x1f]]
        %v1294 = vsel %vm291, %v1194, 0.0
        %v1295 = vstv %s1293
        %v1296 = vmul.f32 %v1295, %v1294
        %v1297 = vadd.f32 %v1292, %v1296
        %1298 = vrot.lane.b32.xlu0 %v1199, 127
        %v1299 = vpop.permute.xlu0 %1298
        %1300 = vrot.lane.b32.xlu0 %v1203, 127
        %v1301 = vpop.permute.xlu0 %1300
        %v1302 = vsel %vm442, %v1299, %v1301
        %v1303 = vsel %vm442, %v1301, %v1299
        %s1304 = sld [smem:[#allocation2 + $0x20]]
        %v1307 = vcombine.low %v1302, %v1303
        %v1309 = vunpack.c.l.s4 1966171168
        %v1310 = vunpack.c.0.s8 %v1309
        %v1311 = vlaneseq
        %v1312 = vshrl.u32 %v1311, 7
        %v1313 = vsub.s32 %v1310, %v1312
        %v1314 = vrot.slane %v1307, %v1313
        %v1316 = vunpack.c.l.s4 1966171168
        %v1317 = vunpack.c.0.s8 %v1316
        %v1318 = vlaneseq
        %v1319 = vshrl.u32 %v1318, 7
        %v1320 = vsub.s32 %v1317, %v1319
        %v1321 = vrot.slane %v1314, %v1320
        %v1323 = vsel %vm295, %v1321, 0.0
        %v1324 = vstv %s1304
        %v1325 = vmul.f32 %v1324, %v1323
        %v1326 = vadd.f32 %v1297, %v1325
        %1327 = vrot.lane.b32.xlu0 %v1199, 126
        %v1328 = vpop.permute.xlu0 %1327
        %1329 = vrot.lane.b32.xlu0 %v1203, 126
        %v1330 = vpop.permute.xlu0 %1329
        %v1331 = vsel %vm472, %v1328, %v1330
        %v1332 = vsel %vm472, %v1330, %v1328
        %s1333 = sld [smem:[#allocation2 + $0x21]]
        %v1336 = vcombine.low %v1331, %v1332
        %v1338 = vunpack.c.l.s4 1966171168
        %v1339 = vunpack.c.0.s8 %v1338
        %v1340 = vlaneseq
        %v1341 = vshrl.u32 %v1340, 7
        %v1342 = vsub.s32 %v1339, %v1341
        %v1343 = vrot.slane %v1336, %v1342
        %v1345 = vunpack.c.l.s4 1966171168
        %v1346 = vunpack.c.0.s8 %v1345
        %v1347 = vlaneseq
        %v1348 = vshrl.u32 %v1347, 7
        %v1349 = vsub.s32 %v1346, %v1348
        %v1350 = vrot.slane %v1343, %v1349
        %v1352 = vsel %vm299, %v1350, 0.0
        %v1353 = vstv %s1333
        %v1354 = vmul.f32 %v1353, %v1352
        %v1355 = vadd.f32 %v1326, %v1354
        %1356 = vrot.lane.b32.xlu0 %v1199, 125
        %v1357 = vpop.permute.xlu0 %1356
        %1358 = vrot.lane.b32.xlu0 %v1203, 125
        %v1359 = vpop.permute.xlu0 %1358
        %v1360 = vsel %vm502, %v1357, %v1359
        %v1361 = vsel %vm502, %v1359, %v1357
        %s1362 = sld [smem:[#allocation2 + $0x22]]
        %v1365 = vcombine.low %v1360, %v1361
        %v1367 = vunpack.c.l.s4 1966171168
        %v1368 = vunpack.c.0.s8 %v1367
        %v1369 = vlaneseq
        %v1370 = vshrl.u32 %v1369, 7
        %v1371 = vsub.s32 %v1368, %v1370
        %v1372 = vrot.slane %v1365, %v1371
        %v1374 = vunpack.c.l.s4 1966171168
        %v1375 = vunpack.c.0.s8 %v1374
        %v1376 = vlaneseq
        %v1377 = vshrl.u32 %v1376, 7
        %v1378 = vsub.s32 %v1375, %v1377
        %v1379 = vrot.slane %v1372, %v1378
        %v1381 = vsel %vm303, %v1379, 0.0
        %v1382 = vstv %s1362
        %v1383 = vmul.f32 %v1382, %v1381
        %v1384 = vadd.f32 %v1355, %v1383
        %1385 = vrot.lane.b32.xlu0 %v223, 96
        %v1386 = vpop.permute.xlu0 %1385
        %1387 = vrot.lane.b32.xlu0 %v230, 96
        %v1388 = vpop.permute.xlu0 %1387
        %vm1389 = vcmp.lt.s32.totalorder %v309, 96
        %v1390 = vsel %vm1389, %v1386, %v1388
        %v1391 = vsel %vm1389, %v1388, %v1386
        %v1394 = vcombine.low %v1390, %v1391
        %v1396 = vunpack.c.l.s4 1966171168
        %v1397 = vunpack.c.0.s8 %v1396
        %v1398 = vlaneseq
        %v1399 = vshrl.u32 %v1398, 7
        %v1400 = vsub.s32 %v1397, %v1399
        %v1401 = vrot.slane %v1394, %v1400
        %v1403 = vunpack.c.l.s4 1966171168
        %v1404 = vunpack.c.0.s8 %v1403
        %v1405 = vlaneseq
        %v1406 = vshrl.u32 %v1405, 7
        %v1407 = vsub.s32 %v1404, %v1406
        %v1408 = vrot.slane %v1401, %v1407
        %v1410 = vsel %vm272, %v1408, 0.0
        %v1412 = vlaneseq
        %v1413 = vshrl.u32 %v1412, 7
        %v1414 = vsub.s32 0, %v1413
        %v1415 = vrot.slane %v1410, %v1414
        %v1416 = vlaneseq
        %v1417 = vshrl.u32 %v1416, 7
        %v1418 = vsub.s32 1, %v1417
        %v1419 = vrot.slane %v1410, %v1418
        %1422 = vrot.lane.b32.xlu0 %v1415, 3
        %v1423 = vpop.permute.xlu0 %1422
        %1424 = vrot.lane.b32.xlu0 %v1419, 3
        %v1425 = vpop.permute.xlu0 %1424
        %v1426 = vsel %vm347, %v1423, %v1425
        %v1427 = vsel %vm347, %v1425, %v1423
        %s1428 = sld [smem:[#allocation2 + $0x23]]
        %v1431 = vcombine.low %v1427, %v1426
        %v1433 = vunpack.c.l.s4 1966171168
        %v1434 = vunpack.c.0.s8 %v1433
        %v1435 = vlaneseq
        %v1436 = vshrl.u32 %v1435, 7
        %v1437 = vsub.s32 %v1434, %v1436
        %v1438 = vrot.slane %v1431, %v1437
        %v1440 = vunpack.c.l.s4 1966171168
        %v1441 = vunpack.c.0.s8 %v1440
        %v1442 = vlaneseq
        %v1443 = vshrl.u32 %v1442, 7
        %v1444 = vsub.s32 %v1441, %v1443
        %v1445 = vrot.slane %v1438, %v1444
        %v1447 = vsel %vm280, %v1445, 0.0
        %v1448 = vstv %s1428
        %v1449 = vmul.f32 %v1448, %v1447
        %v1450 = vadd.f32 %v1384, %v1449
        %1451 = vrot.lane.b32.xlu0 %v1415, 2
        %v1452 = vpop.permute.xlu0 %1451
        %1453 = vrot.lane.b32.xlu0 %v1419, 2
        %v1454 = vpop.permute.xlu0 %1453
        %v1455 = vsel %vm377, %v1452, %v1454
        %v1456 = vsel %vm377, %v1454, %v1452
        %s1457 = sld [smem:[#allocation2 + $0x24]]
        %v1460 = vcombine.low %v1456, %v1455
        %v1462 = vunpack.c.l.s4 1966171168
        %v1463 = vunpack.c.0.s8 %v1462
        %v1464 = vlaneseq
        %v1465 = vshrl.u32 %v1464, 7
        %v1466 = vsub.s32 %v1463, %v1465
        %v1467 = vrot.slane %v1460, %v1466
        %v1469 = vunpack.c.l.s4 1966171168
        %v1470 = vunpack.c.0.s8 %v1469
        %v1471 = vlaneseq
        %v1472 = vshrl.u32 %v1471, 7
        %v1473 = vsub.s32 %v1470, %v1472
        %v1474 = vrot.slane %v1467, %v1473
        %v1476 = vsel %vm284, %v1474, 0.0
        %v1477 = vstv %s1457
        %v1478 = vmul.f32 %v1477, %v1476
        %v1479 = vadd.f32 %v1450, %v1478
        %1480 = vrot.lane.b32.xlu0 %v1415, 1
        %v1481 = vpop.permute.xlu0 %1480
        %1482 = vrot.lane.b32.xlu0 %v1419, 1
        %v1483 = vpop.permute.xlu0 %1482
        %v1484 = vsel %vm407, %v1481, %v1483
        %v1485 = vsel %vm407, %v1483, %v1481
        %s1486 = sld [smem:[#allocation2 + $0x25]]
        %v1489 = vcombine.low %v1485, %v1484
        %v1491 = vunpack.c.l.s4 1966171168
        %v1492 = vunpack.c.0.s8 %v1491
        %v1493 = vlaneseq
        %v1494 = vshrl.u32 %v1493, 7
        %v1495 = vsub.s32 %v1492, %v1494
        %v1496 = vrot.slane %v1489, %v1495
        %v1498 = vunpack.c.l.s4 1966171168
        %v1499 = vunpack.c.0.s8 %v1498
        %v1500 = vlaneseq
        %v1501 = vshrl.u32 %v1500, 7
        %v1502 = vsub.s32 %v1499, %v1501
        %v1503 = vrot.slane %v1496, %v1502
        %v1505 = vsel %vm288, %v1503, 0.0
        %v1506 = vstv %s1486
        %v1507 = vmul.f32 %v1506, %v1505
        %v1508 = vadd.f32 %v1479, %v1507
        %s1509 = sld [smem:[#allocation2 + $0x26]]
        %v1510 = vsel %vm291, %v1410, 0.0
        %v1511 = vstv %s1509
        %v1512 = vmul.f32 %v1511, %v1510
        %v1513 = vadd.f32 %v1508, %v1512
        %1514 = vrot.lane.b32.xlu0 %v1415, 127
        %v1515 = vpop.permute.xlu0 %1514
        %1516 = vrot.lane.b32.xlu0 %v1419, 127
        %v1517 = vpop.permute.xlu0 %1516
        %v1518 = vsel %vm442, %v1515, %v1517
        %v1519 = vsel %vm442, %v1517, %v1515
        %s1520 = sld [smem:[#allocation2 + $0x27]]
        %v1523 = vcombine.low %v1518, %v1519
        %v1525 = vunpack.c.l.s4 1966171168
        %v1526 = vunpack.c.0.s8 %v1525
        %v1527 = vlaneseq
        %v1528 = vshrl.u32 %v1527, 7
        %v1529 = vsub.s32 %v1526, %v1528
        %v1530 = vrot.slane %v1523, %v1529
        %v1532 = vunpack.c.l.s4 1966171168
        %v1533 = vunpack.c.0.s8 %v1532
        %v1534 = vlaneseq
        %v1535 = vshrl.u32 %v1534, 7
        %v1536 = vsub.s32 %v1533, %v1535
        %v1537 = vrot.slane %v1530, %v1536
        %v1539 = vsel %vm295, %v1537, 0.0
        %v1540 = vstv %s1520
        %v1541 = vmul.f32 %v1540, %v1539
        %v1542 = vadd.f32 %v1513, %v1541
        %1543 = vrot.lane.b32.xlu0 %v1415, 126
        %v1544 = vpop.permute.xlu0 %1543
        %1545 = vrot.lane.b32.xlu0 %v1419, 126
        %v1546 = vpop.permute.xlu0 %1545
        %v1547 = vsel %vm472, %v1544, %v1546
        %v1548 = vsel %vm472, %v1546, %v1544
        %s1549 = sld [smem:[#allocation2 + $0x28]]
        %v1552 = vcombine.low %v1547, %v1548
        %v1554 = vunpack.c.l.s4 1966171168
        %v1555 = vunpack.c.0.s8 %v1554
        %v1556 = vlaneseq
        %v1557 = vshrl.u32 %v1556, 7
        %v1558 = vsub.s32 %v1555, %v1557
        %v1559 = vrot.slane %v1552, %v1558
        %v1561 = vunpack.c.l.s4 1966171168
        %v1562 = vunpack.c.0.s8 %v1561
        %v1563 = vlaneseq
        %v1564 = vshrl.u32 %v1563, 7
        %v1565 = vsub.s32 %v1562, %v1564
        %v1566 = vrot.slane %v1559, %v1565
        %v1568 = vsel %vm299, %v1566, 0.0
        %v1569 = vstv %s1549
        %v1570 = vmul.f32 %v1569, %v1568
        %v1571 = vadd.f32 %v1542, %v1570
        %1572 = vrot.lane.b32.xlu0 %v1415, 125
        %v1573 = vpop.permute.xlu0 %1572
        %1574 = vrot.lane.b32.xlu0 %v1419, 125
        %v1575 = vpop.permute.xlu0 %1574
        %v1576 = vsel %vm502, %v1573, %v1575
        %v1577 = vsel %vm502, %v1575, %v1573
        %s1578 = sld [smem:[#allocation2 + $0x29]]
        %v1581 = vcombine.low %v1576, %v1577
        %v1583 = vunpack.c.l.s4 1966171168
        %v1584 = vunpack.c.0.s8 %v1583
        %v1585 = vlaneseq
        %v1586 = vshrl.u32 %v1585, 7
        %v1587 = vsub.s32 %v1584, %v1586
        %v1588 = vrot.slane %v1581, %v1587
        %v1590 = vunpack.c.l.s4 1966171168
        %v1591 = vunpack.c.0.s8 %v1590
        %v1592 = vlaneseq
        %v1593 = vshrl.u32 %v1592, 7
        %v1594 = vsub.s32 %v1591, %v1593
        %v1595 = vrot.slane %v1588, %v1594
        %v1597 = vsel %vm303, %v1595, 0.0
        %v1598 = vstv %s1578
        %v1599 = vmul.f32 %v1598, %v1597
        %v1600 = vadd.f32 %v1571, %v1599
        %1601 = vrot.lane.b32.xlu0 %v223, 80
        %v1602 = vpop.permute.xlu0 %1601
        %1603 = vrot.lane.b32.xlu0 %v230, 80
        %v1604 = vpop.permute.xlu0 %1603
        %vm1605 = vcmp.lt.s32.totalorder %v309, 80
        %v1606 = vsel %vm1605, %v1602, %v1604
        %v1607 = vsel %vm1605, %v1604, %v1602
        %v1610 = vcombine.low %v1606, %v1607
        %v1612 = vunpack.c.l.s4 1966171168
        %v1613 = vunpack.c.0.s8 %v1612
        %v1614 = vlaneseq
        %v1615 = vshrl.u32 %v1614, 7
        %v1616 = vsub.s32 %v1613, %v1615
        %v1617 = vrot.slane %v1610, %v1616
        %v1619 = vunpack.c.l.s4 1966171168
        %v1620 = vunpack.c.0.s8 %v1619
        %v1621 = vlaneseq
        %v1622 = vshrl.u32 %v1621, 7
        %v1623 = vsub.s32 %v1620, %v1622
        %v1624 = vrot.slane %v1617, %v1623
        %v1626 = vsel %vm276, %v1624, 0.0
        %v1628 = vlaneseq
        %v1629 = vshrl.u32 %v1628, 7
        %v1630 = vsub.s32 0, %v1629
        %v1631 = vrot.slane %v1626, %v1630
        %v1632 = vlaneseq
        %v1633 = vshrl.u32 %v1632, 7
        %v1634 = vsub.s32 1, %v1633
        %v1635 = vrot.slane %v1626, %v1634
        %1638 = vrot.lane.b32.xlu0 %v1631, 3
        %v1639 = vpop.permute.xlu0 %1638
        %1640 = vrot.lane.b32.xlu0 %v1635, 3
        %v1641 = vpop.permute.xlu0 %1640
        %v1642 = vsel %vm347, %v1639, %v1641
        %v1643 = vsel %vm347, %v1641, %v1639
        %s1644 = sld [smem:[#allocation2 + $0x2a]]
        %v1647 = vcombine.low %v1643, %v1642
        %v1649 = vunpack.c.l.s4 1966171168
        %v1650 = vunpack.c.0.s8 %v1649
        %v1651 = vlaneseq
        %v1652 = vshrl.u32 %v1651, 7
        %v1653 = vsub.s32 %v1650, %v1652
        %v1654 = vrot.slane %v1647, %v1653
        %v1656 = vunpack.c.l.s4 1966171168
        %v1657 = vunpack.c.0.s8 %v1656
        %v1658 = vlaneseq
        %v1659 = vshrl.u32 %v1658, 7
        %v1660 = vsub.s32 %v1657, %v1659
        %v1661 = vrot.slane %v1654, %v1660
        %v1663 = vsel %vm280, %v1661, 0.0
        %v1664 = vstv %s1644
        %v1665 = vmul.f32 %v1664, %v1663
        %v1666 = vadd.f32 %v1600, %v1665
        %1667 = vrot.lane.b32.xlu0 %v1631, 2
        %v1668 = vpop.permute.xlu0 %1667
        %1669 = vrot.lane.b32.xlu0 %v1635, 2
        %v1670 = vpop.permute.xlu0 %1669
        %v1671 = vsel %vm377, %v1668, %v1670
        %v1672 = vsel %vm377, %v1670, %v1668
        %s1673 = sld [smem:[#allocation2 + $0x2b]]
        %v1676 = vcombine.low %v1672, %v1671
        %v1678 = vunpack.c.l.s4 1966171168
        %v1679 = vunpack.c.0.s8 %v1678
        %v1680 = vlaneseq
        %v1681 = vshrl.u32 %v1680, 7
        %v1682 = vsub.s32 %v1679, %v1681
        %v1683 = vrot.slane %v1676, %v1682
        %v1685 = vunpack.c.l.s4 1966171168
        %v1686 = vunpack.c.0.s8 %v1685
        %v1687 = vlaneseq
        %v1688 = vshrl.u32 %v1687, 7
        %v1689 = vsub.s32 %v1686, %v1688
        %v1690 = vrot.slane %v1683, %v1689
        %v1692 = vsel %vm284, %v1690, 0.0
        %v1693 = vstv %s1673
        %v1694 = vmul.f32 %v1693, %v1692
        %v1695 = vadd.f32 %v1666, %v1694
        %1696 = vrot.lane.b32.xlu0 %v1631, 1
        %v1697 = vpop.permute.xlu0 %1696
        %1698 = vrot.lane.b32.xlu0 %v1635, 1
        %v1699 = vpop.permute.xlu0 %1698
        %v1700 = vsel %vm407, %v1697, %v1699
        %v1701 = vsel %vm407, %v1699, %v1697
        %s1702 = sld [smem:[#allocation2 + $0x2c]]
        %v1705 = vcombine.low %v1701, %v1700
        %v1707 = vunpack.c.l.s4 1966171168
        %v1708 = vunpack.c.0.s8 %v1707
        %v1709 = vlaneseq
        %v1710 = vshrl.u32 %v1709, 7
        %v1711 = vsub.s32 %v1708, %v1710
        %v1712 = vrot.slane %v1705, %v1711
        %v1714 = vunpack.c.l.s4 1966171168
        %v1715 = vunpack.c.0.s8 %v1714
        %v1716 = vlaneseq
        %v1717 = vshrl.u32 %v1716, 7
        %v1718 = vsub.s32 %v1715, %v1717
        %v1719 = vrot.slane %v1712, %v1718
        %v1721 = vsel %vm288, %v1719, 0.0
        %v1722 = vstv %s1702
        %v1723 = vmul.f32 %v1722, %v1721
        %v1724 = vadd.f32 %v1695, %v1723
        %s1725 = sld [smem:[#allocation2 + $0x2d]]
        %v1726 = vsel %vm291, %v1626, 0.0
        %v1727 = vstv %s1725
        %v1728 = vmul.f32 %v1727, %v1726
        %v1729 = vadd.f32 %v1724, %v1728
        %1730 = vrot.lane.b32.xlu0 %v1631, 127
        %v1731 = vpop.permute.xlu0 %1730
        %1732 = vrot.lane.b32.xlu0 %v1635, 127
        %v1733 = vpop.permute.xlu0 %1732
        %v1734 = vsel %vm442, %v1731, %v1733
        %v1735 = vsel %vm442, %v1733, %v1731
        %s1736 = sld [smem:[#allocation2 + $0x2e]]
        %v1739 = vcombine.low %v1734, %v1735
        %v1741 = vunpack.c.l.s4 1966171168
        %v1742 = vunpack.c.0.s8 %v1741
        %v1743 = vlaneseq
        %v1744 = vshrl.u32 %v1743, 7
        %v1745 = vsub.s32 %v1742, %v1744
        %v1746 = vrot.slane %v1739, %v1745
        %v1748 = vunpack.c.l.s4 1966171168
        %v1749 = vunpack.c.0.s8 %v1748
        %v1750 = vlaneseq
        %v1751 = vshrl.u32 %v1750, 7
        %v1752 = vsub.s32 %v1749, %v1751
        %v1753 = vrot.slane %v1746, %v1752
        %v1755 = vsel %vm295, %v1753, 0.0
        %v1756 = vstv %s1736
        %v1757 = vmul.f32 %v1756, %v1755
        %v1758 = vadd.f32 %v1729, %v1757
        %1759 = vrot.lane.b32.xlu0 %v1631, 126
        %v1760 = vpop.permute.xlu0 %1759
        %1761 = vrot.lane.b32.xlu0 %v1635, 126
        %v1762 = vpop.permute.xlu0 %1761
        %v1763 = vsel %vm472, %v1760, %v1762
        %v1764 = vsel %vm472, %v1762, %v1760
        %s1765 = sld [smem:[#allocation2 + $0x2f]]
        %v1768 = vcombine.low %v1763, %v1764
        %v1770 = vunpack.c.l.s4 1966171168
        %v1771 = vunpack.c.0.s8 %v1770
        %v1772 = vlaneseq
        %v1773 = vshrl.u32 %v1772, 7
        %v1774 = vsub.s32 %v1771, %v1773
        %v1775 = vrot.slane %v1768, %v1774
        %v1777 = vunpack.c.l.s4 1966171168
        %v1778 = vunpack.c.0.s8 %v1777
        %v1779 = vlaneseq
        %v1780 = vshrl.u32 %v1779, 7
        %v1781 = vsub.s32 %v1778, %v1780
        %v1782 = vrot.slane %v1775, %v1781
        %v1784 = vsel %vm299, %v1782, 0.0
        %v1785 = vstv %s1765
        %v1786 = vmul.f32 %v1785, %v1784
        %v1787 = vadd.f32 %v1758, %v1786
        %1788 = vrot.lane.b32.xlu0 %v1631, 125
        %v1789 = vpop.permute.xlu0 %1788
        %1790 = vrot.lane.b32.xlu0 %v1635, 125
        %v1791 = vpop.permute.xlu0 %1790
        %v1792 = vsel %vm502, %v1789, %v1791
        %v1793 = vsel %vm502, %v1791, %v1789
        %s1794 = sld [smem:[#allocation2 + $0x30]]
        %v1797 = vcombine.low %v1792, %v1793
        %v1799 = vunpack.c.l.s4 1966171168
        %v1800 = vunpack.c.0.s8 %v1799
        %v1801 = vlaneseq
        %v1802 = vshrl.u32 %v1801, 7
        %v1803 = vsub.s32 %v1800, %v1802
        %v1804 = vrot.slane %v1797, %v1803
        %v1806 = vunpack.c.l.s4 1966171168
        %v1807 = vunpack.c.0.s8 %v1806
        %v1808 = vlaneseq
        %v1809 = vshrl.u32 %v1808, 7
        %v1810 = vsub.s32 %v1807, %v1809
        %v1811 = vrot.slane %v1804, %v1810
        %v1813 = vsel %vm303, %v1811, 0.0
        %v1814 = vstv %s1794
        %v1815 = vmul.f32 %v1814, %v1813
        %v1816 = vadd.f32 %v1787, %v1815
        %1817 = vrot.lane.b32.xlu0 %v245, 48
        %v1818 = vpop.permute.xlu0 %1817
        %1819 = vrot.lane.b32.xlu0 %v246, 48
        %v1820 = vpop.permute.xlu0 %1819
        %v1821 = vsel %vm310, %v1818, %v1820
        %v1822 = vsel %vm310, %v1820, %v1818
        %v1825 = vcombine.low %v1822, %v1821
        %v1827 = vunpack.c.l.s4 1966171168
        %v1828 = vunpack.c.0.s8 %v1827
        %v1829 = vlaneseq
        %v1830 = vshrl.u32 %v1829, 7
        %v1831 = vsub.s32 %v1828, %v1830
        %v1832 = vrot.slane %v1825, %v1831
        %v1834 = vunpack.c.l.s4 1966171168
        %v1835 = vunpack.c.0.s8 %v1834
        %v1836 = vlaneseq
        %v1837 = vshrl.u32 %v1836, 7
        %v1838 = vsub.s32 %v1835, %v1837
        %v1839 = vrot.slane %v1832, %v1838
        %v1841 = vsel %vm253, %v1839, 0.0
        %v1843 = vlaneseq
        %v1844 = vshrl.u32 %v1843, 7
        %v1845 = vsub.s32 0, %v1844
        %v1846 = vrot.slane %v1841, %v1845
        %v1847 = vlaneseq
        %v1848 = vshrl.u32 %v1847, 7
        %v1849 = vsub.s32 1, %v1848
        %v1850 = vrot.slane %v1841, %v1849
        %1853 = vrot.lane.b32.xlu0 %v1846, 3
        %v1854 = vpop.permute.xlu0 %1853
        %1855 = vrot.lane.b32.xlu0 %v1850, 3
        %v1856 = vpop.permute.xlu0 %1855
        %v1857 = vsel %vm347, %v1854, %v1856
        %v1858 = vsel %vm347, %v1856, %v1854
        %s1859 = sld [smem:[#allocation2 + $0x31]]
        %v1862 = vcombine.low %v1858, %v1857
        %v1864 = vunpack.c.l.s4 1966171168
        %v1865 = vunpack.c.0.s8 %v1864
        %v1866 = vlaneseq
        %v1867 = vshrl.u32 %v1866, 7
        %v1868 = vsub.s32 %v1865, %v1867
        %v1869 = vrot.slane %v1862, %v1868
        %v1871 = vunpack.c.l.s4 1966171168
        %v1872 = vunpack.c.0.s8 %v1871
        %v1873 = vlaneseq
        %v1874 = vshrl.u32 %v1873, 7
        %v1875 = vsub.s32 %v1872, %v1874
        %v1876 = vrot.slane %v1869, %v1875
        %v1878 = vsel %vm280, %v1876, 0.0
        %v1879 = vstv %s1859
        %v1880 = vmul.f32 %v1879, %v1878
        %v1881 = vadd.f32 %v1816, %v1880
        %1882 = vrot.lane.b32.xlu0 %v1846, 2
        %v1883 = vpop.permute.xlu0 %1882
        %1884 = vrot.lane.b32.xlu0 %v1850, 2
        %v1885 = vpop.permute.xlu0 %1884
        %v1886 = vsel %vm377, %v1883, %v1885
        %v1887 = vsel %vm377, %v1885, %v1883
        %s1888 = sld [smem:[#allocation2 + $0x32]]
        %v1891 = vcombine.low %v1887, %v1886
        %v1893 = vunpack.c.l.s4 1966171168
        %v1894 = vunpack.c.0.s8 %v1893
        %v1895 = vlaneseq
        %v1896 = vshrl.u32 %v1895, 7
        %v1897 = vsub.s32 %v1894, %v1896
        %v1898 = vrot.slane %v1891, %v1897
        %v1900 = vunpack.c.l.s4 1966171168
        %v1901 = vunpack.c.0.s8 %v1900
        %v1902 = vlaneseq
        %v1903 = vshrl.u32 %v1902, 7
        %v1904 = vsub.s32 %v1901, %v1903
        %v1905 = vrot.slane %v1898, %v1904
        %v1907 = vsel %vm284, %v1905, 0.0
        %v1908 = vstv %s1888
        %v1909 = vmul.f32 %v1908, %v1907
        %v1910 = vadd.f32 %v1881, %v1909
        %1911 = vrot.lane.b32.xlu0 %v1846, 1
        %v1912 = vpop.permute.xlu0 %1911
        %1913 = vrot.lane.b32.xlu0 %v1850, 1
        %v1914 = vpop.permute.xlu0 %1913
        %v1915 = vsel %vm407, %v1912, %v1914
        %v1916 = vsel %vm407, %v1914, %v1912
        %s1917 = sld [smem:[#allocation2 + $0x33]]
        %v1920 = vcombine.low %v1916, %v1915
        %v1922 = vunpack.c.l.s4 1966171168
        %v1923 = vunpack.c.0.s8 %v1922
        %v1924 = vlaneseq
        %v1925 = vshrl.u32 %v1924, 7
        %v1926 = vsub.s32 %v1923, %v1925
        %v1927 = vrot.slane %v1920, %v1926
        %v1929 = vunpack.c.l.s4 1966171168
        %v1930 = vunpack.c.0.s8 %v1929
        %v1931 = vlaneseq
        %v1932 = vshrl.u32 %v1931, 7
        %v1933 = vsub.s32 %v1930, %v1932
        %v1934 = vrot.slane %v1927, %v1933
        %v1936 = vsel %vm288, %v1934, 0.0
        %v1937 = vstv %s1917
        %v1938 = vmul.f32 %v1937, %v1936
        %v1939 = vadd.f32 %v1910, %v1938
        %s1940 = sld [smem:[#allocation2 + $0x34]]
        %v1941 = vsel %vm291, %v1841, 0.0
        %v1942 = vstv %s1940
        %v1943 = vmul.f32 %v1942, %v1941
        %v1944 = vadd.f32 %v1939, %v1943
        %1945 = vrot.lane.b32.xlu0 %v1846, 127
        %v1946 = vpop.permute.xlu0 %1945
        %1947 = vrot.lane.b32.xlu0 %v1850, 127
        %v1948 = vpop.permute.xlu0 %1947
        %v1949 = vsel %vm442, %v1946, %v1948
        %v1950 = vsel %vm442, %v1948, %v1946
        %s1951 = sld [smem:[#allocation2 + $0x35]]
        %v1954 = vcombine.low %v1949, %v1950
        %v1956 = vunpack.c.l.s4 1966171168
        %v1957 = vunpack.c.0.s8 %v1956
        %v1958 = vlaneseq
        %v1959 = vshrl.u32 %v1958, 7
        %v1960 = vsub.s32 %v1957, %v1959
        %v1961 = vrot.slane %v1954, %v1960
        %v1963 = vunpack.c.l.s4 1966171168
        %v1964 = vunpack.c.0.s8 %v1963
        %v1965 = vlaneseq
        %v1966 = vshrl.u32 %v1965, 7
        %v1967 = vsub.s32 %v1964, %v1966
        %v1968 = vrot.slane %v1961, %v1967
        %v1970 = vsel %vm295, %v1968, 0.0
        %v1971 = vstv %s1951
        %v1972 = vmul.f32 %v1971, %v1970
        %v1973 = vadd.f32 %v1944, %v1972
        %1974 = vrot.lane.b32.xlu0 %v1846, 126
        %v1975 = vpop.permute.xlu0 %1974
        %1976 = vrot.lane.b32.xlu0 %v1850, 126
        %v1977 = vpop.permute.xlu0 %1976
        %v1978 = vsel %vm472, %v1975, %v1977
        %v1979 = vsel %vm472, %v1977, %v1975
        %s1980 = sld [smem:[#allocation2 + $0x36]]
        %v1983 = vcombine.low %v1978, %v1979
        %v1985 = vunpack.c.l.s4 1966171168
        %v1986 = vunpack.c.0.s8 %v1985
        %v1987 = vlaneseq
        %v1988 = vshrl.u32 %v1987, 7
        %v1989 = vsub.s32 %v1986, %v1988
        %v1990 = vrot.slane %v1983, %v1989
        %v1992 = vunpack.c.l.s4 1966171168
        %v1993 = vunpack.c.0.s8 %v1992
        %v1994 = vlaneseq
        %v1995 = vshrl.u32 %v1994, 7
        %v1996 = vsub.s32 %v1993, %v1995
        %v1997 = vrot.slane %v1990, %v1996
        %v1999 = vsel %vm299, %v1997, 0.0
        %v2000 = vstv %s1980
        %v2001 = vmul.f32 %v2000, %v1999
        %v2002 = vadd.f32 %v1973, %v2001
        %2003 = vrot.lane.b32.xlu0 %v1846, 125
        %v2004 = vpop.permute.xlu0 %2003
        %2005 = vrot.lane.b32.xlu0 %v1850, 125
        %v2006 = vpop.permute.xlu0 %2005
        %v2007 = vsel %vm502, %v2004, %v2006
        %v2008 = vsel %vm502, %v2006, %v2004
        %s2009 = sld [smem:[#allocation2 + $0x37]]
        %v2012 = vcombine.low %v2007, %v2008
        %v2014 = vunpack.c.l.s4 1966171168
        %v2015 = vunpack.c.0.s8 %v2014
        %v2016 = vlaneseq
        %v2017 = vshrl.u32 %v2016, 7
        %v2018 = vsub.s32 %v2015, %v2017
        %v2019 = vrot.slane %v2012, %v2018
        %v2021 = vunpack.c.l.s4 1966171168
        %v2022 = vunpack.c.0.s8 %v2021
        %v2023 = vlaneseq
        %v2024 = vshrl.u32 %v2023, 7
        %v2025 = vsub.s32 %v2022, %v2024
        %v2026 = vrot.slane %v2019, %v2025
        %v2028 = vsel %vm303, %v2026, 0.0
        %v2029 = vstv %s2009
        %v2030 = vmul.f32 %v2029, %v2028
        %v2031 = vadd.f32 %v2002, %v2030
        %2032 = vrot.lane.b32.xlu0 %v245, 32
        %v2033 = vpop.permute.xlu0 %2032
        %2034 = vrot.lane.b32.xlu0 %v246, 32
        %v2035 = vpop.permute.xlu0 %2034
        %v2036 = vsel %vm532, %v2033, %v2035
        %v2037 = vsel %vm532, %v2035, %v2033
        %v2040 = vcombine.low %v2037, %v2036
        %v2042 = vunpack.c.l.s4 1966171168
        %v2043 = vunpack.c.0.s8 %v2042
        %v2044 = vlaneseq
        %v2045 = vshrl.u32 %v2044, 7
        %v2046 = vsub.s32 %v2043, %v2045
        %v2047 = vrot.slane %v2040, %v2046
        %v2049 = vunpack.c.l.s4 1966171168
        %v2050 = vunpack.c.0.s8 %v2049
        %v2051 = vlaneseq
        %v2052 = vshrl.u32 %v2051, 7
        %v2053 = vsub.s32 %v2050, %v2052
        %v2054 = vrot.slane %v2047, %v2053
        %v2056 = vsel %vm257, %v2054, 0.0
        %v2058 = vlaneseq
        %v2059 = vshrl.u32 %v2058, 7
        %v2060 = vsub.s32 0, %v2059
        %v2061 = vrot.slane %v2056, %v2060
        %v2062 = vlaneseq
        %v2063 = vshrl.u32 %v2062, 7
        %v2064 = vsub.s32 1, %v2063
        %v2065 = vrot.slane %v2056, %v2064
        %2068 = vrot.lane.b32.xlu0 %v2061, 3
        %v2069 = vpop.permute.xlu0 %2068
        %2070 = vrot.lane.b32.xlu0 %v2065, 3
        %v2071 = vpop.permute.xlu0 %2070
        %v2072 = vsel %vm347, %v2069, %v2071
        %v2073 = vsel %vm347, %v2071, %v2069
        %s2074 = sld [smem:[#allocation2 + $0x38]]
        %v2077 = vcombine.low %v2073, %v2072
        %v2079 = vunpack.c.l.s4 1966171168
        %v2080 = vunpack.c.0.s8 %v2079
        %v2081 = vlaneseq
        %v2082 = vshrl.u32 %v2081, 7
        %v2083 = vsub.s32 %v2080, %v2082
        %v2084 = vrot.slane %v2077, %v2083
        %v2086 = vunpack.c.l.s4 1966171168
        %v2087 = vunpack.c.0.s8 %v2086
        %v2088 = vlaneseq
        %v2089 = vshrl.u32 %v2088, 7
        %v2090 = vsub.s32 %v2087, %v2089
        %v2091 = vrot.slane %v2084, %v2090
        %v2093 = vsel %vm280, %v2091, 0.0
        %v2094 = vstv %s2074
        %v2095 = vmul.f32 %v2094, %v2093
        %v2096 = vadd.f32 %v2031, %v2095
        %2097 = vrot.lane.b32.xlu0 %v2061, 2
        %v2098 = vpop.permute.xlu0 %2097
        %2099 = vrot.lane.b32.xlu0 %v2065, 2
        %v2100 = vpop.permute.xlu0 %2099
        %v2101 = vsel %vm377, %v2098, %v2100
        %v2102 = vsel %vm377, %v2100, %v2098
        %s2103 = sld [smem:[#allocation2 + $0x39]]
        %v2106 = vcombine.low %v2102, %v2101
        %v2108 = vunpack.c.l.s4 1966171168
        %v2109 = vunpack.c.0.s8 %v2108
        %v2110 = vlaneseq
        %v2111 = vshrl.u32 %v2110, 7
        %v2112 = vsub.s32 %v2109, %v2111
        %v2113 = vrot.slane %v2106, %v2112
        %v2115 = vunpack.c.l.s4 1966171168
        %v2116 = vunpack.c.0.s8 %v2115
        %v2117 = vlaneseq
        %v2118 = vshrl.u32 %v2117, 7
        %v2119 = vsub.s32 %v2116, %v2118
        %v2120 = vrot.slane %v2113, %v2119
        %v2122 = vsel %vm284, %v2120, 0.0
        %v2123 = vstv %s2103
        %v2124 = vmul.f32 %v2123, %v2122
        %v2125 = vadd.f32 %v2096, %v2124
        %2126 = vrot.lane.b32.xlu0 %v2061, 1
        %v2127 = vpop.permute.xlu0 %2126
        %2128 = vrot.lane.b32.xlu0 %v2065, 1
        %v2129 = vpop.permute.xlu0 %2128
        %v2130 = vsel %vm407, %v2127, %v2129
        %v2131 = vsel %vm407, %v2129, %v2127
        %s2132 = sld [smem:[#allocation2 + $0x3a]]
        %v2135 = vcombine.low %v2131, %v2130
        %v2137 = vunpack.c.l.s4 1966171168
        %v2138 = vunpack.c.0.s8 %v2137
        %v2139 = vlaneseq
        %v2140 = vshrl.u32 %v2139, 7
        %v2141 = vsub.s32 %v2138, %v2140
        %v2142 = vrot.slane %v2135, %v2141
        %v2144 = vunpack.c.l.s4 1966171168
        %v2145 = vunpack.c.0.s8 %v2144
        %v2146 = vlaneseq
        %v2147 = vshrl.u32 %v2146, 7
        %v2148 = vsub.s32 %v2145, %v2147
        %v2149 = vrot.slane %v2142, %v2148
        %v2151 = vsel %vm288, %v2149, 0.0
        %v2152 = vstv %s2132
        %v2153 = vmul.f32 %v2152, %v2151
        %v2154 = vadd.f32 %v2125, %v2153
        %s2155 = sld [smem:[#allocation2 + $0x3b]]
        %v2156 = vsel %vm291, %v2056, 0.0
        %v2157 = vstv %s2155
        %v2158 = vmul.f32 %v2157, %v2156
        %v2159 = vadd.f32 %v2154, %v2158
        %2160 = vrot.lane.b32.xlu0 %v2061, 127
        %v2161 = vpop.permute.xlu0 %2160
        %2162 = vrot.lane.b32.xlu0 %v2065, 127
        %v2163 = vpop.permute.xlu0 %2162
        %v2164 = vsel %vm442, %v2161, %v2163
        %v2165 = vsel %vm442, %v2163, %v2161
        %s2166 = sld [smem:[#allocation2 + $0x3c]]
        %v2169 = vcombine.low %v2164, %v2165
        %v2171 = vunpack.c.l.s4 1966171168
        %v2172 = vunpack.c.0.s8 %v2171
        %v2173 = vlaneseq
        %v2174 = vshrl.u32 %v2173, 7
        %v2175 = vsub.s32 %v2172, %v2174
        %v2176 = vrot.slane %v2169, %v2175
        %v2178 = vunpack.c.l.s4 1966171168
        %v2179 = vunpack.c.0.s8 %v2178
        %v2180 = vlaneseq
        %v2181 = vshrl.u32 %v2180, 7
        %v2182 = vsub.s32 %v2179, %v2181
        %v2183 = vrot.slane %v2176, %v2182
        %v2185 = vsel %vm295, %v2183, 0.0
        %v2186 = vstv %s2166
        %v2187 = vmul.f32 %v2186, %v2185
        %v2188 = vadd.f32 %v2159, %v2187
        %2189 = vrot.lane.b32.xlu0 %v2061, 126
        %v2190 = vpop.permute.xlu0 %2189
        %2191 = vrot.lane.b32.xlu0 %v2065, 126
        %v2192 = vpop.permute.xlu0 %2191
        %v2193 = vsel %vm472, %v2190, %v2192
        %v2194 = vsel %vm472, %v2192, %v2190
        %s2195 = sld [smem:[#allocation2 + $0x3d]]
        %v2198 = vcombine.low %v2193, %v2194
        %v2200 = vunpack.c.l.s4 1966171168
        %v2201 = vunpack.c.0.s8 %v2200
        %v2202 = vlaneseq
        %v2203 = vshrl.u32 %v2202, 7
        %v2204 = vsub.s32 %v2201, %v2203
        %v2205 = vrot.slane %v2198, %v2204
        %v2207 = vunpack.c.l.s4 1966171168
        %v2208 = vunpack.c.0.s8 %v2207
        %v2209 = vlaneseq
        %v2210 = vshrl.u32 %v2209, 7
        %v2211 = vsub.s32 %v2208, %v2210
        %v2212 = vrot.slane %v2205, %v2211
        %v2214 = vsel %vm299, %v2212, 0.0
        %v2215 = vstv %s2195
        %v2216 = vmul.f32 %v2215, %v2214
        %v2217 = vadd.f32 %v2188, %v2216
        %2218 = vrot.lane.b32.xlu0 %v2061, 125
        %v2219 = vpop.permute.xlu0 %2218
        %2220 = vrot.lane.b32.xlu0 %v2065, 125
        %v2221 = vpop.permute.xlu0 %2220
        %v2222 = vsel %vm502, %v2219, %v2221
        %v2223 = vsel %vm502, %v2221, %v2219
        %s2224 = sld [smem:[#allocation2 + $0x3e]]
        %v2227 = vcombine.low %v2222, %v2223
        %v2229 = vunpack.c.l.s4 1966171168
        %v2230 = vunpack.c.0.s8 %v2229
        %v2231 = vlaneseq
        %v2232 = vshrl.u32 %v2231, 7
        %v2233 = vsub.s32 %v2230, %v2232
        %v2234 = vrot.slane %v2227, %v2233
        %v2236 = vunpack.c.l.s4 1966171168
        %v2237 = vunpack.c.0.s8 %v2236
        %v2238 = vlaneseq
        %v2239 = vshrl.u32 %v2238, 7
        %v2240 = vsub.s32 %v2237, %v2239
        %v2241 = vrot.slane %v2234, %v2240
        %v2243 = vsel %vm303, %v2241, 0.0
        %v2244 = vstv %s2224
        %v2245 = vmul.f32 %v2244, %v2243
        %v2246 = vadd.f32 %v2217, %v2245
        %2247 = vrot.lane.b32.xlu0 %v245, 16
        %v2248 = vpop.permute.xlu0 %2247
        %2249 = vrot.lane.b32.xlu0 %v246, 16
        %v2250 = vpop.permute.xlu0 %2249
        %v2251 = vsel %vm748, %v2248, %v2250
        %v2252 = vsel %vm748, %v2250, %v2248
        %v2255 = vcombine.low %v2252, %v2251
        %v2257 = vunpack.c.l.s4 1966171168
        %v2258 = vunpack.c.0.s8 %v2257
        %v2259 = vlaneseq
        %v2260 = vshrl.u32 %v2259, 7
        %v2261 = vsub.s32 %v2258, %v2260
        %v2262 = vrot.slane %v2255, %v2261
        %v2264 = vunpack.c.l.s4 1966171168
        %v2265 = vunpack.c.0.s8 %v2264
        %v2266 = vlaneseq
        %v2267 = vshrl.u32 %v2266, 7
        %v2268 = vsub.s32 %v2265, %v2267
        %v2269 = vrot.slane %v2262, %v2268
        %v2271 = vsel %vm261, %v2269, 0.0
        %v2273 = vlaneseq
        %v2274 = vshrl.u32 %v2273, 7
        %v2275 = vsub.s32 0, %v2274
        %v2276 = vrot.slane %v2271, %v2275
        %v2277 = vlaneseq
        %v2278 = vshrl.u32 %v2277, 7
        %v2279 = vsub.s32 1, %v2278
        %v2280 = vrot.slane %v2271, %v2279
        %2283 = vrot.lane.b32.xlu0 %v2276, 3
        %v2284 = vpop.permute.xlu0 %2283
        %2285 = vrot.lane.b32.xlu0 %v2280, 3
        %v2286 = vpop.permute.xlu0 %2285
        %v2287 = vsel %vm347, %v2284, %v2286
        %v2288 = vsel %vm347, %v2286, %v2284
        %s2289 = sld [smem:[#allocation2 + $0x3f]]
        %v2292 = vcombine.low %v2288, %v2287
        %v2294 = vunpack.c.l.s4 1966171168
        %v2295 = vunpack.c.0.s8 %v2294
        %v2296 = vlaneseq
        %v2297 = vshrl.u32 %v2296, 7
        %v2298 = vsub.s32 %v2295, %v2297
        %v2299 = vrot.slane %v2292, %v2298
        %v2301 = vunpack.c.l.s4 1966171168
        %v2302 = vunpack.c.0.s8 %v2301
        %v2303 = vlaneseq
        %v2304 = vshrl.u32 %v2303, 7
        %v2305 = vsub.s32 %v2302, %v2304
        %v2306 = vrot.slane %v2299, %v2305
        %v2308 = vsel %vm280, %v2306, 0.0
        %v2309 = vstv %s2289
        %v2310 = vmul.f32 %v2309, %v2308
        %v2311 = vadd.f32 %v2246, %v2310
        %2312 = vrot.lane.b32.xlu0 %v2276, 2
        %v2313 = vpop.permute.xlu0 %2312
        %2314 = vrot.lane.b32.xlu0 %v2280, 2
        %v2315 = vpop.permute.xlu0 %2314
        %v2316 = vsel %vm377, %v2313, %v2315
        %v2317 = vsel %vm377, %v2315, %v2313
        %s2318 = sld [smem:[#allocation2 + $0x40]]
        %v2321 = vcombine.low %v2317, %v2316
        %v2323 = vunpack.c.l.s4 1966171168
        %v2324 = vunpack.c.0.s8 %v2323
        %v2325 = vlaneseq
        %v2326 = vshrl.u32 %v2325, 7
        %v2327 = vsub.s32 %v2324, %v2326
        %v2328 = vrot.slane %v2321, %v2327
        %v2330 = vunpack.c.l.s4 1966171168
        %v2331 = vunpack.c.0.s8 %v2330
        %v2332 = vlaneseq
        %v2333 = vshrl.u32 %v2332, 7
        %v2334 = vsub.s32 %v2331, %v2333
        %v2335 = vrot.slane %v2328, %v2334
        %v2337 = vsel %vm284, %v2335, 0.0
        %v2338 = vstv %s2318
        %v2339 = vmul.f32 %v2338, %v2337
        %v2340 = vadd.f32 %v2311, %v2339
        %2341 = vrot.lane.b32.xlu0 %v2276, 1
        %v2342 = vpop.permute.xlu0 %2341
        %2343 = vrot.lane.b32.xlu0 %v2280, 1
        %v2344 = vpop.permute.xlu0 %2343
        %v2345 = vsel %vm407, %v2342, %v2344
        %v2346 = vsel %vm407, %v2344, %v2342
        %s2347 = sld [smem:[#allocation2 + $0x41]]
        %v2350 = vcombine.low %v2346, %v2345
        %v2352 = vunpack.c.l.s4 1966171168
        %v2353 = vunpack.c.0.s8 %v2352
        %v2354 = vlaneseq
        %v2355 = vshrl.u32 %v2354, 7
        %v2356 = vsub.s32 %v2353, %v2355
        %v2357 = vrot.slane %v2350, %v2356
        %v2359 = vunpack.c.l.s4 1966171168
        %v2360 = vunpack.c.0.s8 %v2359
        %v2361 = vlaneseq
        %v2362 = vshrl.u32 %v2361, 7
        %v2363 = vsub.s32 %v2360, %v2362
        %v2364 = vrot.slane %v2357, %v2363
        %v2366 = vsel %vm288, %v2364, 0.0
        %v2367 = vstv %s2347
        %v2368 = vmul.f32 %v2367, %v2366
        %v2369 = vadd.f32 %v2340, %v2368
        %s2370 = sld [smem:[#allocation2 + $0x42]]
        %v2371 = vsel %vm291, %v2271, 0.0
        %v2372 = vstv %s2370
        %v2373 = vmul.f32 %v2372, %v2371
        %v2374 = vadd.f32 %v2369, %v2373
        %2375 = vrot.lane.b32.xlu0 %v2276, 127
        %v2376 = vpop.permute.xlu0 %2375
        %2377 = vrot.lane.b32.xlu0 %v2280, 127
        %v2378 = vpop.permute.xlu0 %2377
        %v2379 = vsel %vm442, %v2376, %v2378
        %v2380 = vsel %vm442, %v2378, %v2376
        %s2381 = sld [smem:[#allocation2 + $0x43]]
        %v2384 = vcombine.low %v2379, %v2380
        %v2386 = vunpack.c.l.s4 1966171168
        %v2387 = vunpack.c.0.s8 %v2386
        %v2388 = vlaneseq
        %v2389 = vshrl.u32 %v2388, 7
        %v2390 = vsub.s32 %v2387, %v2389
        %v2391 = vrot.slane %v2384, %v2390
        %v2393 = vunpack.c.l.s4 1966171168
        %v2394 = vunpack.c.0.s8 %v2393
        %v2395 = vlaneseq
        %v2396 = vshrl.u32 %v2395, 7
        %v2397 = vsub.s32 %v2394, %v2396
        %v2398 = vrot.slane %v2391, %v2397
        %v2400 = vsel %vm295, %v2398, 0.0
        %v2401 = vstv %s2381
        %v2402 = vmul.f32 %v2401, %v2400
        %v2403 = vadd.f32 %v2374, %v2402
        %2404 = vrot.lane.b32.xlu0 %v2276, 126
        %v2405 = vpop.permute.xlu0 %2404
        %2406 = vrot.lane.b32.xlu0 %v2280, 126
        %v2407 = vpop.permute.xlu0 %2406
        %v2408 = vsel %vm472, %v2405, %v2407
        %v2409 = vsel %vm472, %v2407, %v2405
        %s2410 = sld [smem:[#allocation2 + $0x44]]
        %v2413 = vcombine.low %v2408, %v2409
        %v2415 = vunpack.c.l.s4 1966171168
        %v2416 = vunpack.c.0.s8 %v2415
        %v2417 = vlaneseq
        %v2418 = vshrl.u32 %v2417, 7
        %v2419 = vsub.s32 %v2416, %v2418
        %v2420 = vrot.slane %v2413, %v2419
        %v2422 = vunpack.c.l.s4 1966171168
        %v2423 = vunpack.c.0.s8 %v2422
        %v2424 = vlaneseq
        %v2425 = vshrl.u32 %v2424, 7
        %v2426 = vsub.s32 %v2423, %v2425
        %v2427 = vrot.slane %v2420, %v2426
        %v2429 = vsel %vm299, %v2427, 0.0
        %v2430 = vstv %s2410
        %v2431 = vmul.f32 %v2430, %v2429
        %v2432 = vadd.f32 %v2403, %v2431
        %2433 = vrot.lane.b32.xlu0 %v2276, 125
        %v2434 = vpop.permute.xlu0 %2433
        %2435 = vrot.lane.b32.xlu0 %v2280, 125
        %v2436 = vpop.permute.xlu0 %2435
        %v2437 = vsel %vm502, %v2434, %v2436
        %v2438 = vsel %vm502, %v2436, %v2434
        %s2439 = sld [smem:[#allocation2 + $0x45]]
        %v2442 = vcombine.low %v2437, %v2438
        %v2444 = vunpack.c.l.s4 1966171168
        %v2445 = vunpack.c.0.s8 %v2444
        %v2446 = vlaneseq
        %v2447 = vshrl.u32 %v2446, 7
        %v2448 = vsub.s32 %v2445, %v2447
        %v2449 = vrot.slane %v2442, %v2448
        %v2451 = vunpack.c.l.s4 1966171168
        %v2452 = vunpack.c.0.s8 %v2451
        %v2453 = vlaneseq
        %v2454 = vshrl.u32 %v2453, 7
        %v2455 = vsub.s32 %v2452, %v2454
        %v2456 = vrot.slane %v2449, %v2455
        %v2458 = vsel %vm303, %v2456, 0.0
        %v2459 = vstv %s2439
        %v2460 = vmul.f32 %v2459, %v2458
        %v2461 = vadd.f32 %v2432, %v2460
        %v2464 = vcombine.low %v245, %v246
        %v2466 = vunpack.c.l.s4 1966171168
        %v2467 = vunpack.c.0.s8 %v2466
        %v2468 = vlaneseq
        %v2469 = vshrl.u32 %v2468, 7
        %v2470 = vsub.s32 %v2467, %v2469
        %v2471 = vrot.slane %v2464, %v2470
        %v2473 = vunpack.c.l.s4 1966171168
        %v2474 = vunpack.c.0.s8 %v2473
        %v2475 = vlaneseq
        %v2476 = vshrl.u32 %v2475, 7
        %v2477 = vsub.s32 %v2474, %v2476
        %v2478 = vrot.slane %v2471, %v2477
        %v2480 = vsel %vm264, %v2478, 0.0
        %v2482 = vlaneseq
        %v2483 = vshrl.u32 %v2482, 7
        %v2484 = vsub.s32 0, %v2483
        %v2485 = vrot.slane %v2480, %v2484
        %v2486 = vlaneseq
        %v2487 = vshrl.u32 %v2486, 7
        %v2488 = vsub.s32 1, %v2487
        %v2489 = vrot.slane %v2480, %v2488
        %2492 = vrot.lane.b32.xlu0 %v2485, 3
        %v2493 = vpop.permute.xlu0 %2492
        %2494 = vrot.lane.b32.xlu0 %v2489, 3
        %v2495 = vpop.permute.xlu0 %2494
        %v2496 = vsel %vm347, %v2493, %v2495
        %v2497 = vsel %vm347, %v2495, %v2493
        %s2498 = sld [smem:[#allocation2 + $0x46]]
        %v2501 = vcombine.low %v2497, %v2496
        %v2503 = vunpack.c.l.s4 1966171168
        %v2504 = vunpack.c.0.s8 %v2503
        %v2505 = vlaneseq
        %v2506 = vshrl.u32 %v2505, 7
        %v2507 = vsub.s32 %v2504, %v2506
        %v2508 = vrot.slane %v2501, %v2507
        %v2510 = vunpack.c.l.s4 1966171168
        %v2511 = vunpack.c.0.s8 %v2510
        %v2512 = vlaneseq
        %v2513 = vshrl.u32 %v2512, 7
        %v2514 = vsub.s32 %v2511, %v2513
        %v2515 = vrot.slane %v2508, %v2514
        %v2517 = vsel %vm280, %v2515, 0.0
        %v2518 = vstv %s2498
        %v2519 = vmul.f32 %v2518, %v2517
        %v2520 = vadd.f32 %v2461, %v2519
        %2521 = vrot.lane.b32.xlu0 %v2485, 2
        %v2522 = vpop.permute.xlu0 %2521
        %2523 = vrot.lane.b32.xlu0 %v2489, 2
        %v2524 = vpop.permute.xlu0 %2523
        %v2525 = vsel %vm377, %v2522, %v2524
        %v2526 = vsel %vm377, %v2524, %v2522
        %s2527 = sld [smem:[#allocation2 + $0x47]]
        %v2530 = vcombine.low %v2526, %v2525
        %v2532 = vunpack.c.l.s4 1966171168
        %v2533 = vunpack.c.0.s8 %v2532
        %v2534 = vlaneseq
        %v2535 = vshrl.u32 %v2534, 7
        %v2536 = vsub.s32 %v2533, %v2535
        %v2537 = vrot.slane %v2530, %v2536
        %v2539 = vunpack.c.l.s4 1966171168
        %v2540 = vunpack.c.0.s8 %v2539
        %v2541 = vlaneseq
        %v2542 = vshrl.u32 %v2541, 7
        %v2543 = vsub.s32 %v2540, %v2542
        %v2544 = vrot.slane %v2537, %v2543
        %v2546 = vsel %vm284, %v2544, 0.0
        %v2547 = vstv %s2527
        %v2548 = vmul.f32 %v2547, %v2546
        %v2549 = vadd.f32 %v2520, %v2548
        %2550 = vrot.lane.b32.xlu0 %v2485, 1
        %v2551 = vpop.permute.xlu0 %2550
        %2552 = vrot.lane.b32.xlu0 %v2489, 1
        %v2553 = vpop.permute.xlu0 %2552
        %v2554 = vsel %vm407, %v2551, %v2553
        %v2555 = vsel %vm407, %v2553, %v2551
        %s2556 = sld [smem:[#allocation2 + $0x48]]
        %v2559 = vcombine.low %v2555, %v2554
        %v2561 = vunpack.c.l.s4 1966171168
        %v2562 = vunpack.c.0.s8 %v2561
        %v2563 = vlaneseq
        %v2564 = vshrl.u32 %v2563, 7
        %v2565 = vsub.s32 %v2562, %v2564
        %v2566 = vrot.slane %v2559, %v2565
        %v2568 = vunpack.c.l.s4 1966171168
        %v2569 = vunpack.c.0.s8 %v2568
        %v2570 = vlaneseq
        %v2571 = vshrl.u32 %v2570, 7
        %v2572 = vsub.s32 %v2569, %v2571
        %v2573 = vrot.slane %v2566, %v2572
        %v2575 = vsel %vm288, %v2573, 0.0
        %v2576 = vstv %s2556
        %v2577 = vmul.f32 %v2576, %v2575
        %v2578 = vadd.f32 %v2549, %v2577
        %s2579 = sld [smem:[#allocation2 + $0x49]]
        %v2580 = vsel %vm291, %v2480, 0.0
        %v2581 = vstv %s2579
        %v2582 = vmul.f32 %v2581, %v2580
        %v2583 = vadd.f32 %v2578, %v2582
        %2584 = vrot.lane.b32.xlu0 %v2485, 127
        %v2585 = vpop.permute.xlu0 %2584
        %2586 = vrot.lane.b32.xlu0 %v2489, 127
        %v2587 = vpop.permute.xlu0 %2586
        %v2588 = vsel %vm442, %v2585, %v2587
        %v2589 = vsel %vm442, %v2587, %v2585
        %s2590 = sld [smem:[#allocation2 + $0x4a]]
        %v2593 = vcombine.low %v2588, %v2589
        %v2595 = vunpack.c.l.s4 1966171168
        %v2596 = vunpack.c.0.s8 %v2595
        %v2597 = vlaneseq
        %v2598 = vshrl.u32 %v2597, 7
        %v2599 = vsub.s32 %v2596, %v2598
        %v2600 = vrot.slane %v2593, %v2599
        %v2602 = vunpack.c.l.s4 1966171168
        %v2603 = vunpack.c.0.s8 %v2602
        %v2604 = vlaneseq
        %v2605 = vshrl.u32 %v2604, 7
        %v2606 = vsub.s32 %v2603, %v2605
        %v2607 = vrot.slane %v2600, %v2606
        %v2609 = vsel %vm295, %v2607, 0.0
        %v2610 = vstv %s2590
        %v2611 = vmul.f32 %v2610, %v2609
        %v2612 = vadd.f32 %v2583, %v2611
        %2613 = vrot.lane.b32.xlu0 %v2485, 126
        %v2614 = vpop.permute.xlu0 %2613
        %2615 = vrot.lane.b32.xlu0 %v2489, 126
        %v2616 = vpop.permute.xlu0 %2615
        %v2617 = vsel %vm472, %v2614, %v2616
        %v2618 = vsel %vm472, %v2616, %v2614
        %s2619 = sld [smem:[#allocation2 + $0x4b]]
        %v2622 = vcombine.low %v2617, %v2618
        %v2624 = vunpack.c.l.s4 1966171168
        %v2625 = vunpack.c.0.s8 %v2624
        %v2626 = vlaneseq
        %v2627 = vshrl.u32 %v2626, 7
        %v2628 = vsub.s32 %v2625, %v2627
        %v2629 = vrot.slane %v2622, %v2628
        %v2631 = vunpack.c.l.s4 1966171168
        %v2632 = vunpack.c.0.s8 %v2631
        %v2633 = vlaneseq
        %v2634 = vshrl.u32 %v2633, 7
        %v2635 = vsub.s32 %v2632, %v2634
        %v2636 = vrot.slane %v2629, %v2635
        %v2638 = vsel %vm299, %v2636, 0.0
        %v2639 = vstv %s2619
        %v2640 = vmul.f32 %v2639, %v2638
        %v2641 = vadd.f32 %v2612, %v2640
        %2642 = vrot.lane.b32.xlu0 %v2485, 125
        %v2643 = vpop.permute.xlu0 %2642
        %2644 = vrot.lane.b32.xlu0 %v2489, 125
        %v2645 = vpop.permute.xlu0 %2644
        %v2646 = vsel %vm502, %v2643, %v2645
        %v2647 = vsel %vm502, %v2645, %v2643
        %s2648 = sld [smem:[#allocation2 + $0x4c]]
        %v2651 = vcombine.low %v2646, %v2647
        %v2653 = vunpack.c.l.s4 1966171168
        %v2654 = vunpack.c.0.s8 %v2653
        %v2655 = vlaneseq
        %v2656 = vshrl.u32 %v2655, 7
        %v2657 = vsub.s32 %v2654, %v2656
        %v2658 = vrot.slane %v2651, %v2657
        %v2660 = vunpack.c.l.s4 1966171168
        %v2661 = vunpack.c.0.s8 %v2660
        %v2662 = vlaneseq
        %v2663 = vshrl.u32 %v2662, 7
        %v2664 = vsub.s32 %v2661, %v2663
        %v2665 = vrot.slane %v2658, %v2664
        %v2667 = vsel %vm303, %v2665, 0.0
        %v2668 = vstv %s2648
        %v2669 = vmul.f32 %v2668, %v2667
        %v2670 = vadd.f32 %v2641, %v2669
        %2671 = vrot.lane.b32.xlu0 %v245, 112
        %v2672 = vpop.permute.xlu0 %2671
        %2673 = vrot.lane.b32.xlu0 %v246, 112
        %v2674 = vpop.permute.xlu0 %2673
        %v2675 = vsel %vm1173, %v2672, %v2674
        %v2676 = vsel %vm1173, %v2674, %v2672
        %v2679 = vcombine.low %v2675, %v2676
        %v2681 = vunpack.c.l.s4 1966171168
        %v2682 = vunpack.c.0.s8 %v2681
        %v2683 = vlaneseq
        %v2684 = vshrl.u32 %v2683, 7
        %v2685 = vsub.s32 %v2682, %v2684
        %v2686 = vrot.slane %v2679, %v2685
        %v2688 = vunpack.c.l.s4 1966171168
        %v2689 = vunpack.c.0.s8 %v2688
        %v2690 = vlaneseq
        %v2691 = vshrl.u32 %v2690, 7
        %v2692 = vsub.s32 %v2689, %v2691
        %v2693 = vrot.slane %v2686, %v2692
        %v2695 = vsel %vm268, %v2693, 0.0
        %v2697 = vlaneseq
        %v2698 = vshrl.u32 %v2697, 7
        %v2699 = vsub.s32 0, %v2698
        %v2700 = vrot.slane %v2695, %v2699
        %v2701 = vlaneseq
        %v2702 = vshrl.u32 %v2701, 7
        %v2703 = vsub.s32 1, %v2702
        %v2704 = vrot.slane %v2695, %v2703
        %2707 = vrot.lane.b32.xlu0 %v2700, 3
        %v2708 = vpop.permute.xlu0 %2707
        %2709 = vrot.lane.b32.xlu0 %v2704, 3
        %v2710 = vpop.permute.xlu0 %2709
        %v2711 = vsel %vm347, %v2708, %v2710
        %v2712 = vsel %vm347, %v2710, %v2708
        %s2713 = sld [smem:[#allocation2 + $0x4d]]
        %v2716 = vcombine.low %v2712, %v2711
        %v2718 = vunpack.c.l.s4 1966171168
        %v2719 = vunpack.c.0.s8 %v2718
        %v2720 = vlaneseq
        %v2721 = vshrl.u32 %v2720, 7
        %v2722 = vsub.s32 %v2719, %v2721
        %v2723 = vrot.slane %v2716, %v2722
        %v2725 = vunpack.c.l.s4 1966171168
        %v2726 = vunpack.c.0.s8 %v2725
        %v2727 = vlaneseq
        %v2728 = vshrl.u32 %v2727, 7
        %v2729 = vsub.s32 %v2726, %v2728
        %v2730 = vrot.slane %v2723, %v2729
        %v2732 = vsel %vm280, %v2730, 0.0
        %v2733 = vstv %s2713
        %v2734 = vmul.f32 %v2733, %v2732
        %v2735 = vadd.f32 %v2670, %v2734
        %2736 = vrot.lane.b32.xlu0 %v2700, 2
        %v2737 = vpop.permute.xlu0 %2736
        %2738 = vrot.lane.b32.xlu0 %v2704, 2
        %v2739 = vpop.permute.xlu0 %2738
        %v2740 = vsel %vm377, %v2737, %v2739
        %v2741 = vsel %vm377, %v2739, %v2737
        %s2742 = sld [smem:[#allocation2 + $0x4e]]
        %v2745 = vcombine.low %v2741, %v2740
        %v2747 = vunpack.c.l.s4 1966171168
        %v2748 = vunpack.c.0.s8 %v2747
        %v2749 = vlaneseq
        %v2750 = vshrl.u32 %v2749, 7
        %v2751 = vsub.s32 %v2748, %v2750
        %v2752 = vrot.slane %v2745, %v2751
        %v2754 = vunpack.c.l.s4 1966171168
        %v2755 = vunpack.c.0.s8 %v2754
        %v2756 = vlaneseq
        %v2757 = vshrl.u32 %v2756, 7
        %v2758 = vsub.s32 %v2755, %v2757
        %v2759 = vrot.slane %v2752, %v2758
        %v2761 = vsel %vm284, %v2759, 0.0
        %v2762 = vstv %s2742
        %v2763 = vmul.f32 %v2762, %v2761
        %v2764 = vadd.f32 %v2735, %v2763
        %2765 = vrot.lane.b32.xlu0 %v2700, 1
        %v2766 = vpop.permute.xlu0 %2765
        %2767 = vrot.lane.b32.xlu0 %v2704, 1
        %v2768 = vpop.permute.xlu0 %2767
        %v2769 = vsel %vm407, %v2766, %v2768
        %v2770 = vsel %vm407, %v2768, %v2766
        %s2771 = sld [smem:[#allocation2 + $0x4f]]
        %v2774 = vcombine.low %v2770, %v2769
        %v2776 = vunpack.c.l.s4 1966171168
        %v2777 = vunpack.c.0.s8 %v2776
        %v2778 = vlaneseq
        %v2779 = vshrl.u32 %v2778, 7
        %v2780 = vsub.s32 %v2777, %v2779
        %v2781 = vrot.slane %v2774, %v2780
        %v2783 = vunpack.c.l.s4 1966171168
        %v2784 = vunpack.c.0.s8 %v2783
        %v2785 = vlaneseq
        %v2786 = vshrl.u32 %v2785, 7
        %v2787 = vsub.s32 %v2784, %v2786
        %v2788 = vrot.slane %v2781, %v2787
        %v2790 = vsel %vm288, %v2788, 0.0
        %v2791 = vstv %s2771
        %v2792 = vmul.f32 %v2791, %v2790
        %v2793 = vadd.f32 %v2764, %v2792
        %s2794 = sld [smem:[#allocation2 + $0x50]]
        %v2795 = vsel %vm291, %v2695, 0.0
        %v2796 = vstv %s2794
        %v2797 = vmul.f32 %v2796, %v2795
        %v2798 = vadd.f32 %v2793, %v2797
        %2799 = vrot.lane.b32.xlu0 %v2700, 127
        %v2800 = vpop.permute.xlu0 %2799
        %2801 = vrot.lane.b32.xlu0 %v2704, 127
        %v2802 = vpop.permute.xlu0 %2801
        %v2803 = vsel %vm442, %v2800, %v2802
        %v2804 = vsel %vm442, %v2802, %v2800
        %s2805 = sld [smem:[#allocation2 + $0x51]]
        %v2808 = vcombine.low %v2803, %v2804
        %v2810 = vunpack.c.l.s4 1966171168
        %v2811 = vunpack.c.0.s8 %v2810
        %v2812 = vlaneseq
        %v2813 = vshrl.u32 %v2812, 7
        %v2814 = vsub.s32 %v2811, %v2813
        %v2815 = vrot.slane %v2808, %v2814
        %v2817 = vunpack.c.l.s4 1966171168
        %v2818 = vunpack.c.0.s8 %v2817
        %v2819 = vlaneseq
        %v2820 = vshrl.u32 %v2819, 7
        %v2821 = vsub.s32 %v2818, %v2820
        %v2822 = vrot.slane %v2815, %v2821
        %v2824 = vsel %vm295, %v2822, 0.0
        %v2825 = vstv %s2805
        %v2826 = vmul.f32 %v2825, %v2824
        %v2827 = vadd.f32 %v2798, %v2826
        %2828 = vrot.lane.b32.xlu0 %v2700, 126
        %v2829 = vpop.permute.xlu0 %2828
        %2830 = vrot.lane.b32.xlu0 %v2704, 126
        %v2831 = vpop.permute.xlu0 %2830
        %v2832 = vsel %vm472, %v2829, %v2831
        %v2833 = vsel %vm472, %v2831, %v2829
        %s2834 = sld [smem:[#allocation2 + $0x52]]
        %v2837 = vcombine.low %v2832, %v2833
        %v2839 = vunpack.c.l.s4 1966171168
        %v2840 = vunpack.c.0.s8 %v2839
        %v2841 = vlaneseq
        %v2842 = vshrl.u32 %v2841, 7
        %v2843 = vsub.s32 %v2840, %v2842
        %v2844 = vrot.slane %v2837, %v2843
        %v2846 = vunpack.c.l.s4 1966171168
        %v2847 = vunpack.c.0.s8 %v2846
        %v2848 = vlaneseq
        %v2849 = vshrl.u32 %v2848, 7
        %v2850 = vsub.s32 %v2847, %v2849
        %v2851 = vrot.slane %v2844, %v2850
        %v2853 = vsel %vm299, %v2851, 0.0
        %v2854 = vstv %s2834
        %v2855 = vmul.f32 %v2854, %v2853
        %v2856 = vadd.f32 %v2827, %v2855
        %2857 = vrot.lane.b32.xlu0 %v2700, 125
        %v2858 = vpop.permute.xlu0 %2857
        %2859 = vrot.lane.b32.xlu0 %v2704, 125
        %v2860 = vpop.permute.xlu0 %2859
        %v2861 = vsel %vm502, %v2858, %v2860
        %v2862 = vsel %vm502, %v2860, %v2858
        %s2863 = sld [smem:[#allocation2 + $0x53]]
        %v2866 = vcombine.low %v2861, %v2862
        %v2868 = vunpack.c.l.s4 1966171168
        %v2869 = vunpack.c.0.s8 %v2868
        %v2870 = vlaneseq
        %v2871 = vshrl.u32 %v2870, 7
        %v2872 = vsub.s32 %v2869, %v2871
        %v2873 = vrot.slane %v2866, %v2872
        %v2875 = vunpack.c.l.s4 1966171168
        %v2876 = vunpack.c.0.s8 %v2875
        %v2877 = vlaneseq
        %v2878 = vshrl.u32 %v2877, 7
        %v2879 = vsub.s32 %v2876, %v2878
        %v2880 = vrot.slane %v2873, %v2879
        %v2882 = vsel %vm303, %v2880, 0.0
        %v2883 = vstv %s2863
        %v2884 = vmul.f32 %v2883, %v2882
        %v2885 = vadd.f32 %v2856, %v2884
        %2886 = vrot.lane.b32.xlu0 %v245, 96
        %v2887 = vpop.permute.xlu0 %2886
        %2888 = vrot.lane.b32.xlu0 %v246, 96
        %v2889 = vpop.permute.xlu0 %2888
        %v2890 = vsel %vm1389, %v2887, %v2889
        %v2891 = vsel %vm1389, %v2889, %v2887
        %v2894 = vcombine.low %v2890, %v2891
        %v2896 = vunpack.c.l.s4 1966171168
        %v2897 = vunpack.c.0.s8 %v2896
        %v2898 = vlaneseq
        %v2899 = vshrl.u32 %v2898, 7
        %v2900 = vsub.s32 %v2897, %v2899
        %v2901 = vrot.slane %v2894, %v2900
        %v2903 = vunpack.c.l.s4 1966171168
        %v2904 = vunpack.c.0.s8 %v2903
        %v2905 = vlaneseq
        %v2906 = vshrl.u32 %v2905, 7
        %v2907 = vsub.s32 %v2904, %v2906
        %v2908 = vrot.slane %v2901, %v2907
        %v2910 = vsel %vm272, %v2908, 0.0
        %v2912 = vlaneseq
        %v2913 = vshrl.u32 %v2912, 7
        %v2914 = vsub.s32 0, %v2913
        %v2915 = vrot.slane %v2910, %v2914
        %v2916 = vlaneseq
        %v2917 = vshrl.u32 %v2916, 7
        %v2918 = vsub.s32 1, %v2917
        %v2919 = vrot.slane %v2910, %v2918
        %2922 = vrot.lane.b32.xlu0 %v2915, 3
        %v2923 = vpop.permute.xlu0 %2922
        %2924 = vrot.lane.b32.xlu0 %v2919, 3
        %v2925 = vpop.permute.xlu0 %2924
        %v2926 = vsel %vm347, %v2923, %v2925
        %v2927 = vsel %vm347, %v2925, %v2923
        %s2928 = sld [smem:[#allocation2 + $0x54]]
        %v2931 = vcombine.low %v2927, %v2926
        %v2933 = vunpack.c.l.s4 1966171168
        %v2934 = vunpack.c.0.s8 %v2933
        %v2935 = vlaneseq
        %v2936 = vshrl.u32 %v2935, 7
        %v2937 = vsub.s32 %v2934, %v2936
        %v2938 = vrot.slane %v2931, %v2937
        %v2940 = vunpack.c.l.s4 1966171168
        %v2941 = vunpack.c.0.s8 %v2940
        %v2942 = vlaneseq
        %v2943 = vshrl.u32 %v2942, 7
        %v2944 = vsub.s32 %v2941, %v2943
        %v2945 = vrot.slane %v2938, %v2944
        %v2947 = vsel %vm280, %v2945, 0.0
        %v2948 = vstv %s2928
        %v2949 = vmul.f32 %v2948, %v2947
        %v2950 = vadd.f32 %v2885, %v2949
        %2951 = vrot.lane.b32.xlu0 %v2915, 2
        %v2952 = vpop.permute.xlu0 %2951
        %2953 = vrot.lane.b32.xlu0 %v2919, 2
        %v2954 = vpop.permute.xlu0 %2953
        %v2955 = vsel %vm377, %v2952, %v2954
        %v2956 = vsel %vm377, %v2954, %v2952
        %s2957 = sld [smem:[#allocation2 + $0x55]]
        %v2960 = vcombine.low %v2956, %v2955
        %v2962 = vunpack.c.l.s4 1966171168
        %v2963 = vunpack.c.0.s8 %v2962
        %v2964 = vlaneseq
        %v2965 = vshrl.u32 %v2964, 7
        %v2966 = vsub.s32 %v2963, %v2965
        %v2967 = vrot.slane %v2960, %v2966
        %v2969 = vunpack.c.l.s4 1966171168
        %v2970 = vunpack.c.0.s8 %v2969
        %v2971 = vlaneseq
        %v2972 = vshrl.u32 %v2971, 7
        %v2973 = vsub.s32 %v2970, %v2972
        %v2974 = vrot.slane %v2967, %v2973
        %v2976 = vsel %vm284, %v2974, 0.0
        %v2977 = vstv %s2957
        %v2978 = vmul.f32 %v2977, %v2976
        %v2979 = vadd.f32 %v2950, %v2978
        %2980 = vrot.lane.b32.xlu0 %v2915, 1
        %v2981 = vpop.permute.xlu0 %2980
        %2982 = vrot.lane.b32.xlu0 %v2919, 1
        %v2983 = vpop.permute.xlu0 %2982
        %v2984 = vsel %vm407, %v2981, %v2983
        %v2985 = vsel %vm407, %v2983, %v2981
        %s2986 = sld [smem:[#allocation2 + $0x56]]
        %v2989 = vcombine.low %v2985, %v2984
        %v2991 = vunpack.c.l.s4 1966171168
        %v2992 = vunpack.c.0.s8 %v2991
        %v2993 = vlaneseq
        %v2994 = vshrl.u32 %v2993, 7
        %v2995 = vsub.s32 %v2992, %v2994
        %v2996 = vrot.slane %v2989, %v2995
        %v2998 = vunpack.c.l.s4 1966171168
        %v2999 = vunpack.c.0.s8 %v2998
        %v3000 = vlaneseq
        %v3001 = vshrl.u32 %v3000, 7
        %v3002 = vsub.s32 %v2999, %v3001
        %v3003 = vrot.slane %v2996, %v3002
        %v3005 = vsel %vm288, %v3003, 0.0
        %v3006 = vstv %s2986
        %v3007 = vmul.f32 %v3006, %v3005
        %v3008 = vadd.f32 %v2979, %v3007
        %s3009 = sld [smem:[#allocation2 + $0x57]]
        %v3010 = vsel %vm291, %v2910, 0.0
        %v3011 = vstv %s3009
        %v3012 = vmul.f32 %v3011, %v3010
        %v3013 = vadd.f32 %v3008, %v3012
        %3014 = vrot.lane.b32.xlu0 %v2915, 127
        %v3015 = vpop.permute.xlu0 %3014
        %3016 = vrot.lane.b32.xlu0 %v2919, 127
        %v3017 = vpop.permute.xlu0 %3016
        %v3018 = vsel %vm442, %v3015, %v3017
        %v3019 = vsel %vm442, %v3017, %v3015
        %s3020 = sld [smem:[#allocation2 + $0x58]]
        %v3023 = vcombine.low %v3018, %v3019
        %v3025 = vunpack.c.l.s4 1966171168
        %v3026 = vunpack.c.0.s8 %v3025
        %v3027 = vlaneseq
        %v3028 = vshrl.u32 %v3027, 7
        %v3029 = vsub.s32 %v3026, %v3028
        %v3030 = vrot.slane %v3023, %v3029
        %v3032 = vunpack.c.l.s4 1966171168
        %v3033 = vunpack.c.0.s8 %v3032
        %v3034 = vlaneseq
        %v3035 = vshrl.u32 %v3034, 7
        %v3036 = vsub.s32 %v3033, %v3035
        %v3037 = vrot.slane %v3030, %v3036
        %v3039 = vsel %vm295, %v3037, 0.0
        %v3040 = vstv %s3020
        %v3041 = vmul.f32 %v3040, %v3039
        %v3042 = vadd.f32 %v3013, %v3041
        %3043 = vrot.lane.b32.xlu0 %v2915, 126
        %v3044 = vpop.permute.xlu0 %3043
        %3045 = vrot.lane.b32.xlu0 %v2919, 126
        %v3046 = vpop.permute.xlu0 %3045
        %v3047 = vsel %vm472, %v3044, %v3046
        %v3048 = vsel %vm472, %v3046, %v3044
        %s3049 = sld [smem:[#allocation2 + $0x59]]
        %v3052 = vcombine.low %v3047, %v3048
        %v3054 = vunpack.c.l.s4 1966171168
        %v3055 = vunpack.c.0.s8 %v3054
        %v3056 = vlaneseq
        %v3057 = vshrl.u32 %v3056, 7
        %v3058 = vsub.s32 %v3055, %v3057
        %v3059 = vrot.slane %v3052, %v3058
        %v3061 = vunpack.c.l.s4 1966171168
        %v3062 = vunpack.c.0.s8 %v3061
        %v3063 = vlaneseq
        %v3064 = vshrl.u32 %v3063, 7
        %v3065 = vsub.s32 %v3062, %v3064
        %v3066 = vrot.slane %v3059, %v3065
        %v3068 = vsel %vm299, %v3066, 0.0
        %v3069 = vstv %s3049
        %v3070 = vmul.f32 %v3069, %v3068
        %v3071 = vadd.f32 %v3042, %v3070
        %3072 = vrot.lane.b32.xlu0 %v2915, 125
        %v3073 = vpop.permute.xlu0 %3072
        %3074 = vrot.lane.b32.xlu0 %v2919, 125
        %v3075 = vpop.permute.xlu0 %3074
        %v3076 = vsel %vm502, %v3073, %v3075
        %v3077 = vsel %vm502, %v3075, %v3073
        %s3078 = sld [smem:[#allocation2 + $0x5a]]
        %v3081 = vcombine.low %v3076, %v3077
        %v3083 = vunpack.c.l.s4 1966171168
        %v3084 = vunpack.c.0.s8 %v3083
        %v3085 = vlaneseq
        %v3086 = vshrl.u32 %v3085, 7
        %v3087 = vsub.s32 %v3084, %v3086
        %v3088 = vrot.slane %v3081, %v3087
        %v3090 = vunpack.c.l.s4 1966171168
        %v3091 = vunpack.c.0.s8 %v3090
        %v3092 = vlaneseq
        %v3093 = vshrl.u32 %v3092, 7
        %v3094 = vsub.s32 %v3091, %v3093
        %v3095 = vrot.slane %v3088, %v3094
        %v3097 = vsel %vm303, %v3095, 0.0
        %v3098 = vstv %s3078
        %v3099 = vmul.f32 %v3098, %v3097
        %v3100 = vadd.f32 %v3071, %v3099
        %3101 = vrot.lane.b32.xlu0 %v245, 80
        %v3102 = vpop.permute.xlu0 %3101
        %3103 = vrot.lane.b32.xlu0 %v246, 80
        %v3104 = vpop.permute.xlu0 %3103
        %v3105 = vsel %vm1605, %v3102, %v3104
        %v3106 = vsel %vm1605, %v3104, %v3102
        %v3109 = vcombine.low %v3105, %v3106
        %v3111 = vunpack.c.l.s4 1966171168
        %v3112 = vunpack.c.0.s8 %v3111
        %v3113 = vlaneseq
        %v3114 = vshrl.u32 %v3113, 7
        %v3115 = vsub.s32 %v3112, %v3114
        %v3116 = vrot.slane %v3109, %v3115
        %v3118 = vunpack.c.l.s4 1966171168
        %v3119 = vunpack.c.0.s8 %v3118
        %v3120 = vlaneseq
        %v3121 = vshrl.u32 %v3120, 7
        %v3122 = vsub.s32 %v3119, %v3121
        %v3123 = vrot.slane %v3116, %v3122
        %v3125 = vsel %vm276, %v3123, 0.0
        %v3127 = vlaneseq
        %v3128 = vshrl.u32 %v3127, 7
        %v3129 = vsub.s32 0, %v3128
        %v3130 = vrot.slane %v3125, %v3129
        %v3131 = vlaneseq
        %v3132 = vshrl.u32 %v3131, 7
        %v3133 = vsub.s32 1, %v3132
        %v3134 = vrot.slane %v3125, %v3133
        %3137 = vrot.lane.b32.xlu0 %v3130, 3
        %v3138 = vpop.permute.xlu0 %3137
        %3139 = vrot.lane.b32.xlu0 %v3134, 3
        %v3140 = vpop.permute.xlu0 %3139
        %v3141 = vsel %vm347, %v3138, %v3140
        %v3142 = vsel %vm347, %v3140, %v3138
        %s3143 = sld [smem:[#allocation2 + $0x5b]]
        %v3146 = vcombine.low %v3142, %v3141
        %v3148 = vunpack.c.l.s4 1966171168
        %v3149 = vunpack.c.0.s8 %v3148
        %v3150 = vlaneseq
        %v3151 = vshrl.u32 %v3150, 7
        %v3152 = vsub.s32 %v3149, %v3151
        %v3153 = vrot.slane %v3146, %v3152
        %v3155 = vunpack.c.l.s4 1966171168
        %v3156 = vunpack.c.0.s8 %v3155
        %v3157 = vlaneseq
        %v3158 = vshrl.u32 %v3157, 7
        %v3159 = vsub.s32 %v3156, %v3158
        %v3160 = vrot.slane %v3153, %v3159
        %v3162 = vsel %vm280, %v3160, 0.0
        %v3163 = vstv %s3143
        %v3164 = vmul.f32 %v3163, %v3162
        %v3165 = vadd.f32 %v3100, %v3164
        %3166 = vrot.lane.b32.xlu0 %v3130, 2
        %v3167 = vpop.permute.xlu0 %3166
        %3168 = vrot.lane.b32.xlu0 %v3134, 2
        %v3169 = vpop.permute.xlu0 %3168
        %v3170 = vsel %vm377, %v3167, %v3169
        %v3171 = vsel %vm377, %v3169, %v3167
        %s3172 = sld [smem:[#allocation2 + $0x5c]]
        %v3175 = vcombine.low %v3171, %v3170
        %v3177 = vunpack.c.l.s4 1966171168
        %v3178 = vunpack.c.0.s8 %v3177
        %v3179 = vlaneseq
        %v3180 = vshrl.u32 %v3179, 7
        %v3181 = vsub.s32 %v3178, %v3180
        %v3182 = vrot.slane %v3175, %v3181
        %v3184 = vunpack.c.l.s4 1966171168
        %v3185 = vunpack.c.0.s8 %v3184
        %v3186 = vlaneseq
        %v3187 = vshrl.u32 %v3186, 7
        %v3188 = vsub.s32 %v3185, %v3187
        %v3189 = vrot.slane %v3182, %v3188
        %v3191 = vsel %vm284, %v3189, 0.0
        %v3192 = vstv %s3172
        %v3193 = vmul.f32 %v3192, %v3191
        %v3194 = vadd.f32 %v3165, %v3193
        %3195 = vrot.lane.b32.xlu0 %v3130, 1
        %v3196 = vpop.permute.xlu0 %3195
        %3197 = vrot.lane.b32.xlu0 %v3134, 1
        %v3198 = vpop.permute.xlu0 %3197
        %v3199 = vsel %vm407, %v3196, %v3198
        %v3200 = vsel %vm407, %v3198, %v3196
        %s3201 = sld [smem:[#allocation2 + $0x5d]]
        %v3204 = vcombine.low %v3200, %v3199
        %v3206 = vunpack.c.l.s4 1966171168
        %v3207 = vunpack.c.0.s8 %v3206
        %v3208 = vlaneseq
        %v3209 = vshrl.u32 %v3208, 7
        %v3210 = vsub.s32 %v3207, %v3209
        %v3211 = vrot.slane %v3204, %v3210
        %v3213 = vunpack.c.l.s4 1966171168
        %v3214 = vunpack.c.0.s8 %v3213
        %v3215 = vlaneseq
        %v3216 = vshrl.u32 %v3215, 7
        %v3217 = vsub.s32 %v3214, %v3216
        %v3218 = vrot.slane %v3211, %v3217
        %v3220 = vsel %vm288, %v3218, 0.0
        %v3221 = vstv %s3201
        %v3222 = vmul.f32 %v3221, %v3220
        %v3223 = vadd.f32 %v3194, %v3222
        %s3224 = sld [smem:[#allocation2 + $0x5e]]
        %v3225 = vsel %vm291, %v3125, 0.0
        %v3226 = vstv %s3224
        %v3227 = vmul.f32 %v3226, %v3225
        %v3228 = vadd.f32 %v3223, %v3227
        %3229 = vrot.lane.b32.xlu0 %v3130, 127
        %v3230 = vpop.permute.xlu0 %3229
        %3231 = vrot.lane.b32.xlu0 %v3134, 127
        %v3232 = vpop.permute.xlu0 %3231
        %v3233 = vsel %vm442, %v3230, %v3232
        %v3234 = vsel %vm442, %v3232, %v3230
        %s3235 = sld [smem:[#allocation2 + $0x5f]]
        %v3238 = vcombine.low %v3233, %v3234
        %v3240 = vunpack.c.l.s4 1966171168
        %v3241 = vunpack.c.0.s8 %v3240
        %v3242 = vlaneseq
        %v3243 = vshrl.u32 %v3242, 7
        %v3244 = vsub.s32 %v3241, %v3243
        %v3245 = vrot.slane %v3238, %v3244
        %v3247 = vunpack.c.l.s4 1966171168
        %v3248 = vunpack.c.0.s8 %v3247
        %v3249 = vlaneseq
        %v3250 = vshrl.u32 %v3249, 7
        %v3251 = vsub.s32 %v3248, %v3250
        %v3252 = vrot.slane %v3245, %v3251
        %v3254 = vsel %vm295, %v3252, 0.0
        %v3255 = vstv %s3235
        %v3256 = vmul.f32 %v3255, %v3254
        %v3257 = vadd.f32 %v3228, %v3256
        %3258 = vrot.lane.b32.xlu0 %v3130, 126
        %v3259 = vpop.permute.xlu0 %3258
        %3260 = vrot.lane.b32.xlu0 %v3134, 126
        %v3261 = vpop.permute.xlu0 %3260
        %v3262 = vsel %vm472, %v3259, %v3261
        %v3263 = vsel %vm472, %v3261, %v3259
        %s3264 = sld [smem:[#allocation2 + $0x60]]
        %v3267 = vcombine.low %v3262, %v3263
        %v3269 = vunpack.c.l.s4 1966171168
        %v3270 = vunpack.c.0.s8 %v3269
        %v3271 = vlaneseq
        %v3272 = vshrl.u32 %v3271, 7
        %v3273 = vsub.s32 %v3270, %v3272
        %v3274 = vrot.slane %v3267, %v3273
        %v3276 = vunpack.c.l.s4 1966171168
        %v3277 = vunpack.c.0.s8 %v3276
        %v3278 = vlaneseq
        %v3279 = vshrl.u32 %v3278, 7
        %v3280 = vsub.s32 %v3277, %v3279
        %v3281 = vrot.slane %v3274, %v3280
        %v3283 = vsel %vm299, %v3281, 0.0
        %v3284 = vstv %s3264
        %v3285 = vmul.f32 %v3284, %v3283
        %v3286 = vadd.f32 %v3257, %v3285
        %3287 = vrot.lane.b32.xlu0 %v3130, 125
        %v3288 = vpop.permute.xlu0 %3287
        %3289 = vrot.lane.b32.xlu0 %v3134, 125
        %v3290 = vpop.permute.xlu0 %3289
        %v3291 = vsel %vm502, %v3288, %v3290
        %v3292 = vsel %vm502, %v3290, %v3288
        %s3293 = sld [smem:[#allocation2 + $0x61]]
        %v3296 = vcombine.low %v3291, %v3292
        %v3298 = vunpack.c.l.s4 1966171168
        %v3299 = vunpack.c.0.s8 %v3298
        %v3300 = vlaneseq
        %v3301 = vshrl.u32 %v3300, 7
        %v3302 = vsub.s32 %v3299, %v3301
        %v3303 = vrot.slane %v3296, %v3302
        %v3305 = vunpack.c.l.s4 1966171168
        %v3306 = vunpack.c.0.s8 %v3305
        %v3307 = vlaneseq
        %v3308 = vshrl.u32 %v3307, 7
        %v3309 = vsub.s32 %v3306, %v3308
        %v3310 = vrot.slane %v3303, %v3309
        %v3312 = vsel %vm303, %v3310, 0.0
        %v3313 = vstv %s3293
        %v3314 = vmul.f32 %v3313, %v3312
        %v3315 = vadd.f32 %v3286, %v3314
        %v3316 = vxor.u32 %v3315, 2147483648
        %v3317 = vmul.f32 %v3316, 1.442695
        %v3318 = vpow.pop %v3317
        %v3319 = vadd.f32 %v3318, 1.0
        %v3320 = vrcp.pop %v3319
        %v3321 = vmul.f32 1.0, %v3320
        %v3323 = vlaneseq
        %v3324 = vshrl.u32 %v3323, 7
        %v3325 = vsub.s32 0, %v3324
        %v3326 = vrot.slane %v3321, %v3325
        %v3327 = vlaneseq
        %v3328 = vshrl.u32 %v3327, 7
        %v3329 = vsub.s32 1, %v3328
        %v3330 = vrot.slane %v3321, %v3329
        %v3333 = vmul.f32 %v3326, %v212
        %v3334 = vmul.f32 %v3330, %v214
        %v3337 = vcombine.low %v3333, %v3334
        %3339 = vst [vmem:[%s211] sm:$0xff] %v3337
        %s3340 = sand.u32 %s98, 1
        %s3341 = scalar_lea.sflag [#allocation4], %s3340
        %s3342 = sand.u32 %s98, 1
        %s3343 = smul.addr %s3342, 8
        %s3344 = scalar_lea.vmem [#allocation9], %s3343
        // Predicated region
        $region45: #{tpu_custom_call.1} parent=31 // pred_check
          %p3345 = pneg %p108
        $region46: #{tpu_custom_call.1} parent=31 // pred_check_branch
          %3347 = sbr.rel (%p3345) target = $region48
        $region47: #{tpu_custom_call.1} parent=31 // pred_region
          %s3349 = ssub.s32 128, 128
          %3350 = vsyncadd %s3341, %s3349
          %s3351 = smul.addr %s22, 2
          %s3352 = smul.addr %s3351, 64
          %s3353 = scalar_lea.hbm %s3, %s3352
          %s3355 = sshll.u32 %s3344, 4
          %s3356 = int_to_ptr.vmem [resolvable:$true] %s3355
          %3358 = dma.vmem_to_hbm [thread:$0]  %s3356, 128, %s3353, %s3341
        $region48: #{tpu_custom_call.1} parent=31 // pred_fallthru
          _
      $region32: #{tpu_custom_call.1} parent=5 // pred_fallthru
        _
      %p3359 = scmp.le.s32.totalorder 2, %s17
      // Predicated region
      $region49: #{tpu_custom_call.1} parent=5 // pred_check
        %p3360 = pneg %p3359
      $region50: #{tpu_custom_call.1} parent=5 // pred_check_branch
        %3362 = sbr.rel (%p3360) target = $region52
      $region51: #{tpu_custom_call.1} parent=5 // pred_region
        %s3363 = ssub.s32 %s17, 2
        // Predicated region
        $region53: #{tpu_custom_call.1} parent=51 // pred_check
          %p3364 = pneg %p114
        $region54: #{tpu_custom_call.1} parent=51 // pred_check_branch
          %3366 = sbr.rel (%p3364) target = $region56
        $region55: #{tpu_custom_call.1} parent=51 // pred_region
          %s3367 = sand.u32 %s99, 1
          %s3368 = scalar_lea.sflag [#allocation4], %s3367
          %s3369 = sand.u32 %s99, 1
          %s3370 = smul.addr %s3369, 8
          %s3371 = scalar_lea.vmem [#allocation9], %s3370
          %3372 = dma.done %s3368, 128
        $region56: #{tpu_custom_call.1} parent=51 // pred_fallthru
          _
      $region52: #{tpu_custom_call.1} parent=5 // pred_fallthru
        _
    $region6: #{tpu_custom_call.1} parent=1 // loop_footer
      %s21 = sadd.s32 1, %s17
    $region7: #{tpu_custom_call.1} parent=1 // loop_footer_branch
      %16 = sbr.rel target = $region3
    $region8: #{tpu_custom_call.1} parent=1 // loop_exit
      _
    %3373 = vsyncpa [#allocation3], 1
    %s3374 = scalar_lea.sflag [#allocation3], 1
    %3375 = vsyncpa %s3374, 1
    %3376 = vsyncpa [#allocation8], 1
    %s3377 = scalar_lea.sflag [#allocation8], 1
    %3378 = vsyncpa %s3377, 1
    %3379 = vsyncpa [#allocation4], 1
    %s3380 = scalar_lea.sflag [#allocation4], 1
    %3381 = vsyncpa %s3380, 1
    %3382 = vsyncpa [#allocation5], 1
    %s3383 = scalar_lea.sflag [#allocation5], 1
    %3384 = vsyncpa %s3383, 1

</llo_original>
